<compile_context>
chip_gen: v5e
topology: v5e:2x2
jax: 0.10.0
libtpu: 0.0.40
codegen_flags: <defaults>
</compile_context>

<pallas_src>
import jax
import jax.numpy as jnp
from jax import lax
from jax.experimental import pallas as pl
from jax.experimental.pallas import tpu as pltpu


def decoder_pos_kernel(x_ref, xe_ref,
                       wq_ref, bq_ref,
                       wk_ref, bk_ref,
                       wv_ref, bv_ref,
                       pos_ref, gamma_ref,
                       out_ref, attn_ref,
                       kp_scr, v_scr):
    qi = pl.program_id(1)

    # Per batch element: project keys / values once (first query tile) and
    # reuse for all query tiles.  The positional bias has the same (Ck, N)
    # shape as the key projection, so it is fused in with a cheap VPU add.
    @pl.when(qi == 0)
    def _():
        xe = xe_ref[0]                                                    # (C, N)
        kp_scr[...] = (jnp.dot(wk_ref[...], xe,
                               preferred_element_type=jnp.float32)
                       + bk_ref[...] + pos_ref[...])                      # (Ck, N) f32
        # Value projection is only ever consumed by the bf16 MXU matmul below,
        # so store it directly in bf16 (halves the persistent scratch).
        v_scr[...] = (jnp.dot(wv_ref[...], xe,
                              preferred_element_type=jnp.float32)
                      + bv_ref[...]).astype(v_scr.dtype)                  # (C, N) bf16

    x_blk = x_ref[0]                                                      # (C, tq)
    q = (jnp.dot(wq_ref[...], x_blk, preferred_element_type=jnp.float32)
         + bq_ref[...])                                                   # (Ck, tq)

    # energy[i, j] = sum_c q[c, i] * (k + pos)[c, j]  (no explicit transpose).
    # Kept in f32: the contraction depth is only Ck = C//8, and energy feeds exp.
    energy = lax.dot_general(q, kp_scr[...],
                             dimension_numbers=(((0,), (0,)), ((), ())),
                             preferred_element_type=jnp.float32)          # (tq, N)

    # Numerically-stable softmax over keys, f32 throughout; exact reciprocal
    # (it is only tq values, so approx buys nothing measurable).
    m = jnp.max(energy, axis=-1, keepdims=True)
    p = jnp.exp(energy - m)
    denom = jnp.sum(p, axis=-1, keepdims=True)
    attn = p * pl.reciprocal(denom, approx=False)                         # (tq, N) f32

    # out[c, i] = sum_j v[c, j] * attn[i, j]   (== bmm(value, attention^T)).
    # bf16 operands + f32 accumulation: this contraction over N carries ~90%
    # of the kernel FLOPs, so it must run at the MXU's native bf16 rate.
    attn_lo = attn.astype(jnp.bfloat16)
    out = lax.dot_general(v_scr[...], attn_lo,
                          dimension_numbers=(((1,), (1,)), ((), ())),
                          preferred_element_type=jnp.float32)             # (C, tq)

    gamma = gamma_ref[0]
    out_ref[0] = (gamma * out + x_blk).astype(out_ref.dtype)
    attn_ref[0] = attn.astype(attn_ref.dtype)


def _vmem_capacity_bytes():
    try:
        return int(pltpu.get_tpu_info().vmem_capacity_bytes)
    except Exception:
        return 128 << 20          # conservative v5e/v6e default


def _estimate_vmem_bytes(C, Ck, N, tq, attn_bytes):
    """Rough live-footprint estimate (double-buffered worst case)."""
    f32, bf16 = 4, 2
    blocks = (2 * C * tq * f32                                   # x query tile
              + 2 * C * N * f32                                  # x_encoder
              + 2 * (2 * Ck * C + 2 * Ck + C * C + C + Ck * N) * f32   # weights+pos
              + 2 * C * tq * f32                                 # out tile
              + 2 * tq * N * attn_bytes)                         # attention tile
    scratch = Ck * N * f32 + C * N * bf16                        # k+pos / v scratch
    temps = 3 * tq * N * f32 + tq * N * bf16 + Ck * tq * f32 + 2 * C * tq * f32
    return blocks + scratch + temps


def _pick_tq(C, Ck, N, attn_bytes, budget, requested=None):
    if requested is not None:
        if N % requested != 0:
            raise ValueError(f"tq={requested} must divide N={N}")
        if requested != N and requested % 128 != 0:
            # lane-dense outputs (unmasked vst) -- enforced, not just preferred
            raise ValueError(f"tq={requested} must be a multiple of 128 (or == N)")
        return requested
    if N % 128 != 0:
        return N                  # small / odd N: single (full) query tile
    candidates = sorted({t for t in (128, 256, 512, 1024, N)
                         if t <= N and N % t == 0}, reverse=True)
    for t in candidates:          # largest lane-dense tile that fits the budget
        if _estimate_vmem_bytes(C, Ck, N, t, attn_bytes) <= budget:
            return t
    return candidates[-1]


def decoder_pos_forward(x, x_encoder, params, tq=None, attn_dtype=jnp.bfloat16):
    """x, x_encoder: (B, C, W, H) float32 (NCHW, matching PyTorch).

    attn_dtype=jnp.bfloat16 halves the N^2 attention writeback; pass
    jnp.float32 if exact-f32 parity of the returned attention map is required.
    """
    B, C, W, H = x.shape
    N = W * H
    Ck = C // 8
    attn_bytes = jnp.dtype(attn_dtype).itemsize

    # Generation-aware VMEM budgeting: keep headroom below physical capacity
    # (Mosaic internal scratch, spills) -> ~56 MiB cap on a 64 MiB part.
    cap = _vmem_capacity_bytes()
    vmem_cap = cap - max(8 << 20, cap // 8)
    tq = _pick_tq(C, Ck, N, attn_bytes, budget=int(0.75 * vmem_cap), requested=tq)
    nq = N // tq
    est = _estimate_vmem_bytes(C, Ck, N, tq, attn_bytes)
    vmem_limit = int(min(max(int(1.3 * est) + (2 << 20), 32 << 20), vmem_cap))

    # --- glue: flatten spatial dims / reshape parameters (plain JAX) ---
    x_f = x.reshape(B, C, N)
    xe_f = x_encoder.reshape(B, C, N)
    wq = params["wq"].reshape(Ck, C)          # conv weight (Ck, C, 1, 1) -> (Ck, C)
    bq = params["bq"].reshape(Ck, 1)
    wk = params["wk"].reshape(Ck, C)
    bk = params["bk"].reshape(Ck, 1)
    wv = params["wv"].reshape(C, C)
    bv = params["bv"].reshape(C, 1)
    # (1, Ck, H, 1) + (1, Ck, 1, W) -> (1, Ck, H, W) -> (Ck, H*W), identical to
    # the reference module's .view(1, C//8, -1).
    pos = (params["rel_h"] + params["rel_w"]).reshape(Ck, N)
    gamma = params["gamma"].reshape(1).astype(jnp.float32)

    out_shapes = (
        jax.ShapeDtypeStruct((B, C, N), jnp.float32),
        jax.ShapeDtypeStruct((B, N, N), attn_dtype),
    )

    def run(single_buffer):
        # Constant-index operands are fetched at most once per batch element:
        # single-buffer them so VMEM isn't wasted on a second copy.
        pm = pl.Buffered(1) if single_buffer else None

        def const_spec(shape):
            idx = lambda b, qi: tuple(0 for _ in shape)
            if pm is None:
                return pl.BlockSpec(shape, idx)
            return pl.BlockSpec(shape, idx, pipeline_mode=pm)

        if pm is None:
            xe_spec = pl.BlockSpec((1, C, N), lambda b, qi: (b, 0, 0))
        else:
            xe_spec = pl.BlockSpec((1, C, N), lambda b, qi: (b, 0, 0),
                                   pipeline_mode=pm)

        grid_spec = pltpu.PrefetchScalarGridSpec(
            num_scalar_prefetch=0,
            grid=(B, nq),
            in_specs=[
                pl.BlockSpec((1, C, tq), lambda b, qi: (b, 0, qi)),  # x (query tile)
                xe_spec,                                             # x_encoder
                const_spec((Ck, C)), const_spec((Ck, 1)),            # query conv
                const_spec((Ck, C)), const_spec((Ck, 1)),            # key conv
                const_spec((C, C)), const_spec((C, 1)),              # value conv
                const_spec((Ck, N)),                                 # positional bias
                pl.BlockSpec(memory_space=pltpu.MemorySpace.SMEM),   # gamma (scalar)
            ],
            out_specs=[
                pl.BlockSpec((1, C, tq), lambda b, qi: (b, 0, qi)),
                pl.BlockSpec((1, tq, N), lambda b, qi: (b, qi, 0)),
            ],
            scratch_shapes=[
                pltpu.VMEM((Ck, N), jnp.float32),    # k + pos (f32, feeds exp path)
                pltpu.VMEM((C, N), jnp.bfloat16),    # v (bf16, feeds bf16 MXU matmul)
            ],
        )
        return pl.pallas_call(
            decoder_pos_kernel,
            out_shape=out_shapes,
            grid_spec=grid_spec,
            compiler_params=pltpu.CompilerParams(
                dimension_semantics=("parallel", "arbitrary"),
                vmem_limit_bytes=vmem_limit),
        )(x_f, xe_f, wq, bq, wk, bk, wv, bv, pos, gamma)

    try:
        out_f, attn = run(single_buffer=True)
    except Exception:
        # Portability fallback for jax builds without BlockSpec pipeline_mode /
        # single-buffer support; identical math, default double-buffering.
        out_f, attn = run(single_buffer=False)

    return out_f.reshape(B, C, W, H), attn


def decoder_pos_reference(x, x_encoder, params):
    """Pure-JAX replica of the PyTorch forward (for correctness checking)."""
    B, C, W, H = x.shape
    N = W * H
    Ck = C // 8
    x_f = x.reshape(B, C, N)
    xe_f = x_encoder.reshape(B, C, N)
    wq = params["wq"].reshape(Ck, C); bq = params["bq"].reshape(1, Ck, 1)
    wk = params["wk"].reshape(Ck, C); bk = params["bk"].reshape(1, Ck, 1)
    wv = params["wv"].reshape(C, C);  bv = params["bv"].reshape(1, C, 1)
    pos = (params["rel_h"] + params["rel_w"]).reshape(Ck, N)
    q = jnp.einsum("kc,bcn->bkn", wq, x_f) + bq
    k = jnp.einsum("kc,bcn->bkn", wk, xe_f) + bk
    v = jnp.einsum("dc,bcn->bdn", wv, xe_f) + bv
    energy = jnp.einsum("bki,bkj->bij", q, k) + jnp.einsum("bki,kj->bij", q, pos)
    attn = jax.nn.softmax(energy, axis=-1)
    out = jnp.einsum("bdj,bij->bdi", v, attn)
    out = params["gamma"].reshape(()) * out + x_f
    return out.reshape(B, C, W, H), attn


def init_params(key, n_dims, width, height):
    Ck = n_dims // 8
    ks = jax.random.split(key, 8)
    return {
        "rel_h": jax.random.normal(ks[0], (1, Ck, height, 1), jnp.float32),
        "rel_w": jax.random.normal(ks[1], (1, Ck, 1, width), jnp.float32),
        "wq": jax.random.normal(ks[2], (Ck, n_dims, 1, 1), jnp.float32) * 0.1,
        "bq": jax.random.normal(ks[3], (Ck,), jnp.float32) * 0.1,
        "wk": jax.random.normal(ks[4], (Ck, n_dims, 1, 1), jnp.float32) * 0.1,
        "bk": jax.random.normal(ks[5], (Ck,), jnp.float32) * 0.1,
        "wv": jax.random.normal(ks[6], (n_dims, n_dims, 1, 1), jnp.float32) * 0.1,
        "bv": jax.random.normal(ks[7], (n_dims,), jnp.float32) * 0.1,
        "gamma": jnp.zeros((1,), jnp.float32),   # matches nn.Parameter(torch.zeros(1))
    }


if __name__ == "__main__":
    B, n_dims, W, H = 2, 64, 16, 16        # N = W*H = 256 (lane-dense)
    key = jax.random.PRNGKey(0)
    k_x, k_xe, k_p = jax.random.split(key, 3)

    x = jax.random.normal(k_x, (B, n_dims, W, H), jnp.float32)
    x_encoder = jax.random.normal(k_xe, (B, n_dims, W, H), jnp.float32)
    params = init_params(k_p, n_dims, width=W, height=H)
    # Non-zero gamma so the attention branch actually contributes to `out`.
    params["gamma"] = jnp.array([0.5], jnp.float32)

    out_ref, attn_ref = decoder_pos_reference(x, x_encoder, params)

    def check(out, attn):
        assert out.shape == (B, n_dims, W, H)
        assert attn.shape == (B, W * H, W * H)
        attn32 = attn.astype(jnp.float32)
        assert jnp.allclose(jnp.sum(attn32, axis=-1), 1.0, atol=1e-2)
        assert jnp.allclose(attn32, attn_ref, atol=1e-2, rtol=1e-2)
        assert jnp.allclose(out, out_ref, atol=2e-2, rtol=2e-2)

    # 1) Auto tq: small problem -> tq == N, one grid step per batch element.
    out, attn = decoder_pos_forward(x, x_encoder, params)
    jax.block_until_ready((out, attn))
    check(out, attn)

    # 2) Explicit tq=128: exercises the multi-query-tile scratch-reuse path.
    out2, attn2 = decoder_pos_forward(x, x_encoder, params, tq=128)
    jax.block_until_ready((out2, attn2))
    check(out2, attn2)

    print("KERNEL_OK")
</pallas_src>

<mosaic_0001>
module attributes {stable_mosaic.version = 11 : i64} {
  func.func @decoder_pos_kernel(%arg0: i32, %arg1: i32, %arg2: memref<1x64x256xf32, #tpu.memory_space<vmem>>, %arg3: memref<1x64x256xf32, #tpu.memory_space<vmem>>, %arg4: memref<8x64xf32, #tpu.memory_space<vmem>>, %arg5: memref<8x1xf32, #tpu.memory_space<vmem>>, %arg6: memref<8x64xf32, #tpu.memory_space<vmem>>, %arg7: memref<8x1xf32, #tpu.memory_space<vmem>>, %arg8: memref<64x64xf32, #tpu.memory_space<vmem>>, %arg9: memref<64x1xf32, #tpu.memory_space<vmem>>, %arg10: memref<8x256xf32, #tpu.memory_space<vmem>>, %arg11: memref<1xf32, #tpu.memory_space<smem>>, %arg12: memref<1x64x256xf32, #tpu.memory_space<vmem>>, %arg13: memref<1x256x256xbf16, #tpu.memory_space<vmem>>, %arg14: memref<8x256xf32, #tpu.memory_space<vmem>>, %arg15: memref<64x256xbf16, #tpu.memory_space<vmem>>) attributes {dimension_semantics = [#tpu.dimension_semantics<parallel>, #tpu.dimension_semantics<arbitrary>], iteration_bounds = array<i64: 2, 1>, scalar_prefetch = 0 : i64, scratch_operands = 2 : i64, tpu.core_type = #tpu.core_type<tc>, window_params = [{transform_indices = @transform_0, window_bounds = array<i64: 1, 64, 256>}, {pipeline_mode = #tpu.pipeline_mode<synchronous>, transform_indices = @transform_1, window_bounds = array<i64: 1, 64, 256>}, {pipeline_mode = #tpu.pipeline_mode<synchronous>, transform_indices = @transform_2, window_bounds = array<i64: 8, 64>}, {pipeline_mode = #tpu.pipeline_mode<synchronous>, transform_indices = @transform_3, window_bounds = array<i64: 8, 1>}, {pipeline_mode = #tpu.pipeline_mode<synchronous>, transform_indices = @transform_4, window_bounds = array<i64: 8, 64>}, {pipeline_mode = #tpu.pipeline_mode<synchronous>, transform_indices = @transform_5, window_bounds = array<i64: 8, 1>}, {pipeline_mode = #tpu.pipeline_mode<synchronous>, transform_indices = @transform_6, window_bounds = array<i64: 64, 64>}, {pipeline_mode = #tpu.pipeline_mode<synchronous>, transform_indices = @transform_7, window_bounds = array<i64: 64, 1>}, {pipeline_mode = #tpu.pipeline_mode<synchronous>, transform_indices = @transform_8, window_bounds = array<i64: 8, 256>}, {transform_indices = @transform_9, window_bounds = array<i64: 1>}, {transform_indices = @transform_10, window_bounds = array<i64: 1, 64, 256>}, {transform_indices = @transform_11, window_bounds = array<i64: 1, 256, 256>}]} {
    %c0_i32 = arith.constant 0 : i32
    %0 = arith.cmpi eq, %arg1, %c0_i32 : i32
    %1 = arith.extui %0 : i1 to i32
    %c0_i32_0 = arith.constant 0 : i32
    %2 = arith.cmpi ne, %1, %c0_i32_0 : i32
    scf.if %2 {
      %c0_22 = arith.constant 0 : index
      %c0_23 = arith.constant 0 : index
      %c0_24 = arith.constant 0 : index
      %36 = vector.load %arg3[%c0_22, %c0_23, %c0_24] : memref<1x64x256xf32, #tpu.memory_space<vmem>>, vector<1x64x256xf32>
      %37 = vector.shape_cast %36 : vector<1x64x256xf32> to vector<64x256xf32>
      %c0_25 = arith.constant 0 : index
      %c0_26 = arith.constant 0 : index
      %38 = vector.load %arg6[%c0_25, %c0_26] : memref<8x64xf32, #tpu.memory_space<vmem>>, vector<8x64xf32>
      %cst_27 = arith.constant dense<0.000000e+00> : vector<8x256xf32>
      %39 = tpu.matmul %38, %37, %cst_27 {dimension_numbers = #tpu.dot_dimension_numbers<[1], [0], [0], [1], [0, 0, 1, 1], [], []>} : vector<8x64xf32>, vector<64x256xf32>, vector<8x256xf32> -> vector<8x256xf32>
      %c0_28 = arith.constant 0 : index
      %c0_29 = arith.constant 0 : index
      %40 = vector.load %arg7[%c0_28, %c0_29] : memref<8x1xf32, #tpu.memory_space<vmem>>, vector<8x1xf32>
      %41 = vector.broadcast %40 : vector<8x1xf32> to vector<8x256xf32>
      %42 = arith.addf %39, %41 : vector<8x256xf32>
      %c0_30 = arith.constant 0 : index
      %c0_31 = arith.constant 0 : index
      %43 = vector.load %arg10[%c0_30, %c0_31] : memref<8x256xf32, #tpu.memory_space<vmem>>, vector<8x256xf32>
      %44 = arith.addf %42, %43 : vector<8x256xf32>
      %c0_32 = arith.constant 0 : index
      %c0_33 = arith.constant 0 : index
      %45 = vector.load %arg14[%c0_32, %c0_33] : memref<8x256xf32, #tpu.memory_space<vmem>>, vector<8x256xf32>
      tpu.vector_store %arg14[%c0_32, %c0_33], %44 {strides = array<i32>} : memref<8x256xf32, #tpu.memory_space<vmem>>, vector<8x256xf32>,
      %c0_34 = arith.constant 0 : index
      %c0_35 = arith.constant 0 : index
      %46 = vector.load %arg8[%c0_34, %c0_35] : memref<64x64xf32, #tpu.memory_space<vmem>>, vector<64x64xf32>
      %cst_36 = arith.constant dense<0.000000e+00> : vector<64x256xf32>
      %47 = tpu.matmul %46, %37, %cst_36 {dimension_numbers = #tpu.dot_dimension_numbers<[1], [0], [0], [1], [0, 0, 1, 1], [], []>} : vector<64x64xf32>, vector<64x256xf32>, vector<64x256xf32> -> vector<64x256xf32>
      %c0_37 = arith.constant 0 : index
      %c0_38 = arith.constant 0 : index
      %48 = vector.load %arg9[%c0_37, %c0_38] : memref<64x1xf32, #tpu.memory_space<vmem>>, vector<64x1xf32>
      %49 = vector.broadcast %48 : vector<64x1xf32> to vector<64x256xf32>
      %50 = arith.addf %47, %49 : vector<64x256xf32>
      %51 = arith.truncf %50 : vector<64x256xf32> to vector<64x256xbf16>
      %c0_39 = arith.constant 0 : index
      %c0_40 = arith.constant 0 : index
      %52 = vector.load %arg15[%c0_39, %c0_40] : memref<64x256xbf16, #tpu.memory_space<vmem>>, vector<64x256xbf16>
      tpu.vector_store %arg15[%c0_39, %c0_40], %51 {strides = array<i32>} : memref<64x256xbf16, #tpu.memory_space<vmem>>, vector<64x256xbf16>,
    } else {
    }
    %c0 = arith.constant 0 : index
    %c0_1 = arith.constant 0 : index
    %c0_2 = arith.constant 0 : index
    %3 = vector.load %arg2[%c0, %c0_1, %c0_2] : memref<1x64x256xf32, #tpu.memory_space<vmem>>, vector<1x64x256xf32>
    %4 = vector.shape_cast %3 : vector<1x64x256xf32> to vector<64x256xf32>
    %c0_3 = arith.constant 0 : index
    %c0_4 = arith.constant 0 : index
    %5 = vector.load %arg4[%c0_3, %c0_4] : memref<8x64xf32, #tpu.memory_space<vmem>>, vector<8x64xf32>
    %cst = arith.constant dense<0.000000e+00> : vector<8x256xf32>
    %6 = tpu.matmul %5, %4, %cst {dimension_numbers = #tpu.dot_dimension_numbers<[1], [0], [0], [1], [0, 0, 1, 1], [], []>} : vector<8x64xf32>, vector<64x256xf32>, vector<8x256xf32> -> vector<8x256xf32>
    %c0_5 = arith.constant 0 : index
    %c0_6 = arith.constant 0 : index
    %7 = vector.load %arg5[%c0_5, %c0_6] : memref<8x1xf32, #tpu.memory_space<vmem>>, vector<8x1xf32>
    %8 = vector.broadcast %7 : vector<8x1xf32> to vector<8x256xf32>
    %9 = arith.addf %6, %8 : vector<8x256xf32>
    %c0_7 = arith.constant 0 : index
    %c0_8 = arith.constant 0 : index
    %10 = vector.load %arg14[%c0_7, %c0_8] : memref<8x256xf32, #tpu.memory_space<vmem>>, vector<8x256xf32>
    %cst_9 = arith.constant dense<0.000000e+00> : vector<256x256xf32>
    %11 = tpu.matmul %9, %10, %cst_9 {dimension_numbers = #tpu.dot_dimension_numbers<[0], [0], [1], [1], [0, 1, 1, 1], [], []>} : vector<8x256xf32>, vector<8x256xf32>, vector<256x256xf32> -> vector<256x256xf32>
    %cst_10 = arith.constant dense<0xFF800000> : vector<256xf32>
    %12 = vector.multi_reduction <maximumf>, %11, %cst_10 [1] : vector<256x256xf32> to vector<256xf32>
    %13 = vector.shape_cast %12 : vector<256xf32> to vector<256x1xf32>
    %14 = vector.broadcast %13 : vector<256x1xf32> to vector<256x256xf32>
    %15 = arith.subf %11, %14 : vector<256x256xf32>
    %16 = math.exp %15 : vector<256x256xf32>
    %cst_11 = arith.constant dense<0.000000e+00> : vector<256xf32>
    %17 = vector.multi_reduction <add>, %16, %cst_11 [1] : vector<256x256xf32> to vector<256xf32>
    %18 = vector.shape_cast %17 : vector<256xf32> to vector<256x1xf32>
    %19 = tpu.reciprocal %18 : vector<256x1xf32> -> vector<256x1xf32>
    %20 = vector.broadcast %19 : vector<256x1xf32> to vector<256x256xf32>
    %21 = arith.mulf %16, %20 : vector<256x256xf32>
    %22 = arith.truncf %21 : vector<256x256xf32> to vector<256x256xbf16>
    %c0_12 = arith.constant 0 : index
    %c0_13 = arith.constant 0 : index
    %23 = vector.load %arg15[%c0_12, %c0_13] : memref<64x256xbf16, #tpu.memory_space<vmem>>, vector<64x256xbf16>
    %cst_14 = arith.constant dense<0.000000e+00> : vector<64x256xf32>
    %24 = tpu.matmul %23, %22, %cst_14 {dimension_numbers = #tpu.dot_dimension_numbers<[1], [1], [0], [0], [0, 0, 1, 0], [], []>} : vector<64x256xbf16>, vector<256x256xbf16>, vector<64x256xf32> -> vector<64x256xf32>
    %c0_15 = arith.constant 0 : index
    %25 = memref.load %arg11[%c0_15] : memref<1xf32, #tpu.memory_space<smem>>
    %26 = vector.broadcast %25 : f32 to vector<64x256xf32>
    %27 = arith.mulf %26, %24 : vector<64x256xf32>
    %28 = arith.addf %27, %4 : vector<64x256xf32>
    %c0_16 = arith.constant 0 : index
    %c0_17 = arith.constant 0 : index
    %c0_18 = arith.constant 0 : index
    %29 = vector.load %arg12[%c0_16, %c0_17, %c0_18] : memref<1x64x256xf32, #tpu.memory_space<vmem>>, vector<1x64x256xf32>
    %30 = vector.shape_cast %29 : vector<1x64x256xf32> to vector<64x256xf32>
    %31 = vector.shape_cast %28 : vector<64x256xf32> to vector<1x64x256xf32>
    tpu.vector_store %arg12[%c0_16, %c0_17, %c0_18], %31 {strides = array<i32>} : memref<1x64x256xf32, #tpu.memory_space<vmem>>, vector<1x64x256xf32>,
    %32 = arith.truncf %21 : vector<256x256xf32> to vector<256x256xbf16>
    %c0_19 = arith.constant 0 : index
    %c0_20 = arith.constant 0 : index
    %c0_21 = arith.constant 0 : index
    %33 = vector.load %arg13[%c0_19, %c0_20, %c0_21] : memref<1x256x256xbf16, #tpu.memory_space<vmem>>, vector<1x256x256xbf16>
    %34 = vector.shape_cast %33 : vector<1x256x256xbf16> to vector<256x256xbf16>
    %35 = vector.shape_cast %32 : vector<256x256xbf16> to vector<1x256x256xbf16>
    tpu.vector_store %arg13[%c0_19, %c0_20, %c0_21], %35 {strides = array<i32>} : memref<1x256x256xbf16, #tpu.memory_space<vmem>>, vector<1x256x256xbf16>,
    return
  }
  func.func @transform_0(%arg0: i32, %arg1: i32) -> (i32, i32, i32) {
    %c0_i32 = arith.constant 0 : i32
    %c0_i32_0 = arith.constant 0 : i32
    return %arg0, %c0_i32, %arg1 : i32, i32, i32
  }
  func.func @transform_1(%arg0: i32, %arg1: i32) -> (i32, i32, i32) {
    %c0_i32 = arith.constant 0 : i32
    %c0_i32_0 = arith.constant 0 : i32
    %c0_i32_1 = arith.constant 0 : i32
    return %arg0, %c0_i32, %c0_i32_0 : i32, i32, i32
  }
  func.func @transform_2(%arg0: i32, %arg1: i32) -> (i32, i32) {
    %c0_i32 = arith.constant 0 : i32
    %c0_i32_0 = arith.constant 0 : i32
    %c0_i32_1 = arith.constant 0 : i32
    return %c0_i32, %c0_i32_0 : i32, i32
  }
  func.func @transform_3(%arg0: i32, %arg1: i32) -> (i32, i32) {
    %c0_i32 = arith.constant 0 : i32
    %c0_i32_0 = arith.constant 0 : i32
    %c0_i32_1 = arith.constant 0 : i32
    return %c0_i32, %c0_i32_0 : i32, i32
  }
  func.func @transform_4(%arg0: i32, %arg1: i32) -> (i32, i32) {
    %c0_i32 = arith.constant 0 : i32
    %c0_i32_0 = arith.constant 0 : i32
    %c0_i32_1 = arith.constant 0 : i32
    return %c0_i32, %c0_i32_0 : i32, i32
  }
  func.func @transform_5(%arg0: i32, %arg1: i32) -> (i32, i32) {
    %c0_i32 = arith.constant 0 : i32
    %c0_i32_0 = arith.constant 0 : i32
    %c0_i32_1 = arith.constant 0 : i32
    return %c0_i32, %c0_i32_0 : i32, i32
  }
  func.func @transform_6(%arg0: i32, %arg1: i32) -> (i32, i32) {
    %c0_i32 = arith.constant 0 : i32
    %c0_i32_0 = arith.constant 0 : i32
    %c0_i32_1 = arith.constant 0 : i32
    return %c0_i32, %c0_i32_0 : i32, i32
  }
  func.func @transform_7(%arg0: i32, %arg1: i32) -> (i32, i32) {
    %c0_i32 = arith.constant 0 : i32
    %c0_i32_0 = arith.constant 0 : i32
    %c0_i32_1 = arith.constant 0 : i32
    return %c0_i32, %c0_i32_0 : i32, i32
  }
  func.func @transform_8(%arg0: i32, %arg1: i32) -> (i32, i32) {
    %c0_i32 = arith.constant 0 : i32
    %c0_i32_0 = arith.constant 0 : i32
    %c0_i32_1 = arith.constant 0 : i32
    return %c0_i32, %c0_i32_0 : i32, i32
  }
  func.func @transform_9(%arg0: i32, %arg1: i32) -> i32 {
    %c0_i32 = arith.constant 0 : i32
    %c0_i32_0 = arith.constant 0 : i32
    return %c0_i32 : i32
  }
  func.func @transform_10(%arg0: i32, %arg1: i32) -> (i32, i32, i32) {
    %c0_i32 = arith.constant 0 : i32
    %c0_i32_0 = arith.constant 0 : i32
    return %arg0, %c0_i32, %arg1 : i32, i32, i32
  }
  func.func @transform_11(%arg0: i32, %arg1: i32) -> (i32, i32, i32) {
    %c0_i32 = arith.constant 0 : i32
    %c0_i32_0 = arith.constant 0 : i32
    return %arg0, %arg1, %c0_i32 : i32, i32, i32
  }
}

module attributes {stable_mosaic.version = 11 : i64} {
  func.func @decoder_pos_kernel(%arg0: i32, %arg1: i32, %arg2: memref<1x64x256xf32, #tpu.memory_space<vmem>>, %arg3: memref<1x64x256xf32, #tpu.memory_space<vmem>>, %arg4: memref<8x64xf32, #tpu.memory_space<vmem>>, %arg5: memref<8x1xf32, #tpu.memory_space<vmem>>, %arg6: memref<8x64xf32, #tpu.memory_space<vmem>>, %arg7: memref<8x1xf32, #tpu.memory_space<vmem>>, %arg8: memref<64x64xf32, #tpu.memory_space<vmem>>, %arg9: memref<64x1xf32, #tpu.memory_space<vmem>>, %arg10: memref<8x256xf32, #tpu.memory_space<vmem>>, %arg11: memref<1xf32, #tpu.memory_space<smem>>, %arg12: memref<1x64x256xf32, #tpu.memory_space<vmem>>, %arg13: memref<1x256x256xbf16, #tpu.memory_space<vmem>>, %arg14: memref<8x256xf32, #tpu.memory_space<vmem>>, %arg15: memref<64x256xbf16, #tpu.memory_space<vmem>>) attributes {dimension_semantics = [#tpu.dimension_semantics<parallel>, #tpu.dimension_semantics<arbitrary>], iteration_bounds = array<i64: 2, 1>, scalar_prefetch = 0 : i64, scratch_operands = 2 : i64, tpu.core_type = #tpu.core_type<tc>, window_params = [{transform_indices = @transform_0, window_bounds = array<i64: 1, 64, 256>}, {transform_indices = @transform_1, window_bounds = array<i64: 1, 64, 256>}, {pipeline_mode = #tpu.pipeline_mode<synchronous>, transform_indices = @transform_2, window_bounds = array<i64: 8, 64>}, {pipeline_mode = #tpu.pipeline_mode<synchronous>, transform_indices = @transform_3, window_bounds = array<i64: 8, 1>}, {pipeline_mode = #tpu.pipeline_mode<synchronous>, transform_indices = @transform_4, window_bounds = array<i64: 8, 64>}, {pipeline_mode = #tpu.pipeline_mode<synchronous>, transform_indices = @transform_5, window_bounds = array<i64: 8, 1>}, {pipeline_mode = #tpu.pipeline_mode<synchronous>, transform_indices = @transform_6, window_bounds = array<i64: 64, 64>}, {pipeline_mode = #tpu.pipeline_mode<synchronous>, transform_indices = @transform_7, window_bounds = array<i64: 64, 1>}, {pipeline_mode = #tpu.pipeline_mode<synchronous>, transform_indices = @transform_8, window_bounds = array<i64: 8, 256>}, {transform_indices = @transform_9, window_bounds = array<i64: 1>}, {transform_indices = @transform_10, window_bounds = array<i64: 1, 64, 256>}, {transform_indices = @transform_11, window_bounds = array<i64: 1, 256, 256>}]} {
    %c0_i32 = arith.constant 0 : i32
    %0 = arith.cmpi eq, %arg1, %c0_i32 : i32
    %1 = arith.extui %0 : i1 to i32
    %c0_i32_0 = arith.constant 0 : i32
    %2 = arith.cmpi ne, %1, %c0_i32_0 : i32
    scf.if %2 {
      %c0_22 = arith.constant 0 : index
      %c0_23 = arith.constant 0 : index
      %c0_24 = arith.constant 0 : index
      %36 = vector.load %arg3[%c0_22, %c0_23, %c0_24] : memref<1x64x256xf32, #tpu.memory_space<vmem>>, vector<1x64x256xf32>
      %37 = vector.shape_cast %36 : vector<1x64x256xf32> to vector<64x256xf32>
      %c0_25 = arith.constant 0 : index
      %c0_26 = arith.constant 0 : index
      %38 = vector.load %arg6[%c0_25, %c0_26] : memref<8x64xf32, #tpu.memory_space<vmem>>, vector<8x64xf32>
      %cst_27 = arith.constant dense<0.000000e+00> : vector<8x256xf32>
      %39 = tpu.matmul %38, %37, %cst_27 {dimension_numbers = #tpu.dot_dimension_numbers<[1], [0], [0], [1], [0, 0, 1, 1], [], []>} : vector<8x64xf32>, vector<64x256xf32>, vector<8x256xf32> -> vector<8x256xf32>
      %c0_28 = arith.constant 0 : index
      %c0_29 = arith.constant 0 : index
      %40 = vector.load %arg7[%c0_28, %c0_29] : memref<8x1xf32, #tpu.memory_space<vmem>>, vector<8x1xf32>
      %41 = vector.broadcast %40 : vector<8x1xf32> to vector<8x256xf32>
      %42 = arith.addf %39, %41 : vector<8x256xf32>
      %c0_30 = arith.constant 0 : index
      %c0_31 = arith.constant 0 : index
      %43 = vector.load %arg10[%c0_30, %c0_31] : memref<8x256xf32, #tpu.memory_space<vmem>>, vector<8x256xf32>
      %44 = arith.addf %42, %43 : vector<8x256xf32>
      %c0_32 = arith.constant 0 : index
      %c0_33 = arith.constant 0 : index
      %45 = vector.load %arg14[%c0_32, %c0_33] : memref<8x256xf32, #tpu.memory_space<vmem>>, vector<8x256xf32>
      tpu.vector_store %arg14[%c0_32, %c0_33], %44 {strides = array<i32>} : memref<8x256xf32, #tpu.memory_space<vmem>>, vector<8x256xf32>,
      %c0_34 = arith.constant 0 : index
      %c0_35 = arith.constant 0 : index
      %46 = vector.load %arg8[%c0_34, %c0_35] : memref<64x64xf32, #tpu.memory_space<vmem>>, vector<64x64xf32>
      %cst_36 = arith.constant dense<0.000000e+00> : vector<64x256xf32>
      %47 = tpu.matmul %46, %37, %cst_36 {dimension_numbers = #tpu.dot_dimension_numbers<[1], [0], [0], [1], [0, 0, 1, 1], [], []>} : vector<64x64xf32>, vector<64x256xf32>, vector<64x256xf32> -> vector<64x256xf32>
      %c0_37 = arith.constant 0 : index
      %c0_38 = arith.constant 0 : index
      %48 = vector.load %arg9[%c0_37, %c0_38] : memref<64x1xf32, #tpu.memory_space<vmem>>, vector<64x1xf32>
      %49 = vector.broadcast %48 : vector<64x1xf32> to vector<64x256xf32>
      %50 = arith.addf %47, %49 : vector<64x256xf32>
      %51 = arith.truncf %50 : vector<64x256xf32> to vector<64x256xbf16>
      %c0_39 = arith.constant 0 : index
      %c0_40 = arith.constant 0 : index
      %52 = vector.load %arg15[%c0_39, %c0_40] : memref<64x256xbf16, #tpu.memory_space<vmem>>, vector<64x256xbf16>
      tpu.vector_store %arg15[%c0_39, %c0_40], %51 {strides = array<i32>} : memref<64x256xbf16, #tpu.memory_space<vmem>>, vector<64x256xbf16>,
    } else {
    }
    %c0 = arith.constant 0 : index
    %c0_1 = arith.constant 0 : index
    %c0_2 = arith.constant 0 : index
    %3 = vector.load %arg2[%c0, %c0_1, %c0_2] : memref<1x64x256xf32, #tpu.memory_space<vmem>>, vector<1x64x256xf32>
    %4 = vector.shape_cast %3 : vector<1x64x256xf32> to vector<64x256xf32>
    %c0_3 = arith.constant 0 : index
    %c0_4 = arith.constant 0 : index
    %5 = vector.load %arg4[%c0_3, %c0_4] : memref<8x64xf32, #tpu.memory_space<vmem>>, vector<8x64xf32>
    %cst = arith.constant dense<0.000000e+00> : vector<8x256xf32>
    %6 = tpu.matmul %5, %4, %cst {dimension_numbers = #tpu.dot_dimension_numbers<[1], [0], [0], [1], [0, 0, 1, 1], [], []>} : vector<8x64xf32>, vector<64x256xf32>, vector<8x256xf32> -> vector<8x256xf32>
    %c0_5 = arith.constant 0 : index
    %c0_6 = arith.constant 0 : index
    %7 = vector.load %arg5[%c0_5, %c0_6] : memref<8x1xf32, #tpu.memory_space<vmem>>, vector<8x1xf32>
    %8 = vector.broadcast %7 : vector<8x1xf32> to vector<8x256xf32>
    %9 = arith.addf %6, %8 : vector<8x256xf32>
    %c0_7 = arith.constant 0 : index
    %c0_8 = arith.constant 0 : index
    %10 = vector.load %arg14[%c0_7, %c0_8] : memref<8x256xf32, #tpu.memory_space<vmem>>, vector<8x256xf32>
    %cst_9 = arith.constant dense<0.000000e+00> : vector<256x256xf32>
    %11 = tpu.matmul %9, %10, %cst_9 {dimension_numbers = #tpu.dot_dimension_numbers<[0], [0], [1], [1], [0, 1, 1, 1], [], []>} : vector<8x256xf32>, vector<8x256xf32>, vector<256x256xf32> -> vector<256x256xf32>
    %cst_10 = arith.constant dense<0xFF800000> : vector<256xf32>
    %12 = vector.multi_reduction <maximumf>, %11, %cst_10 [1] : vector<256x256xf32> to vector<256xf32>
    %13 = vector.shape_cast %12 : vector<256xf32> to vector<256x1xf32>
    %14 = vector.broadcast %13 : vector<256x1xf32> to vector<256x256xf32>
    %15 = arith.subf %11, %14 : vector<256x256xf32>
    %16 = math.exp %15 : vector<256x256xf32>
    %cst_11 = arith.constant dense<0.000000e+00> : vector<256xf32>
    %17 = vector.multi_reduction <add>, %16, %cst_11 [1] : vector<256x256xf32> to vector<256xf32>
    %18 = vector.shape_cast %17 : vector<256xf32> to vector<256x1xf32>
    %19 = tpu.reciprocal %18 : vector<256x1xf32> -> vector<256x1xf32>
    %20 = vector.broadcast %19 : vector<256x1xf32> to vector<256x256xf32>
    %21 = arith.mulf %16, %20 : vector<256x256xf32>
    %22 = arith.truncf %21 : vector<256x256xf32> to vector<256x256xbf16>
    %c0_12 = arith.constant 0 : index
    %c0_13 = arith.constant 0 : index
    %23 = vector.load %arg15[%c0_12, %c0_13] : memref<64x256xbf16, #tpu.memory_space<vmem>>, vector<64x256xbf16>
    %cst_14 = arith.constant dense<0.000000e+00> : vector<64x256xf32>
    %24 = tpu.matmul %23, %22, %cst_14 {dimension_numbers = #tpu.dot_dimension_numbers<[1], [1], [0], [0], [0, 0, 1, 0], [], []>} : vector<64x256xbf16>, vector<256x256xbf16>, vector<64x256xf32> -> vector<64x256xf32>
    %c0_15 = arith.constant 0 : index
    %25 = memref.load %arg11[%c0_15] : memref<1xf32, #tpu.memory_space<smem>>
    %26 = vector.broadcast %25 : f32 to vector<64x256xf32>
    %27 = arith.mulf %26, %24 : vector<64x256xf32>
    %28 = arith.addf %27, %4 : vector<64x256xf32>
    %c0_16 = arith.constant 0 : index
    %c0_17 = arith.constant 0 : index
    %c0_18 = arith.constant 0 : index
    %29 = vector.load %arg12[%c0_16, %c0_17, %c0_18] : memref<1x64x256xf32, #tpu.memory_space<vmem>>, vector<1x64x256xf32>
    %30 = vector.shape_cast %29 : vector<1x64x256xf32> to vector<64x256xf32>
    %31 = vector.shape_cast %28 : vector<64x256xf32> to vector<1x64x256xf32>
    tpu.vector_store %arg12[%c0_16, %c0_17, %c0_18], %31 {strides = array<i32>} : memref<1x64x256xf32, #tpu.memory_space<vmem>>, vector<1x64x256xf32>,
    %32 = arith.truncf %21 : vector<256x256xf32> to vector<256x256xbf16>
    %c0_19 = arith.constant 0 : index
    %c0_20 = arith.constant 0 : index
    %c0_21 = arith.constant 0 : index
    %33 = vector.load %arg13[%c0_19, %c0_20, %c0_21] : memref<1x256x256xbf16, #tpu.memory_space<vmem>>, vector<1x256x256xbf16>
    %34 = vector.shape_cast %33 : vector<1x256x256xbf16> to vector<256x256xbf16>
    %35 = vector.shape_cast %32 : vector<256x256xbf16> to vector<1x256x256xbf16>
    tpu.vector_store %arg13[%c0_19, %c0_20, %c0_21], %35 {strides = array<i32>} : memref<1x256x256xbf16, #tpu.memory_space<vmem>>, vector<1x256x256xbf16>,
    return
  }
  func.func @transform_0(%arg0: i32, %arg1: i32) -> (i32, i32, i32) {
    %c0_i32 = arith.constant 0 : i32
    %c0_i32_0 = arith.constant 0 : i32
    return %arg0, %c0_i32, %arg1 : i32, i32, i32
  }
  func.func @transform_1(%arg0: i32, %arg1: i32) -> (i32, i32, i32) {
    %c0_i32 = arith.constant 0 : i32
    %c0_i32_0 = arith.constant 0 : i32
    %c0_i32_1 = arith.constant 0 : i32
    return %arg0, %c0_i32, %c0_i32_0 : i32, i32, i32
  }
  func.func @transform_2(%arg0: i32, %arg1: i32) -> (i32, i32) {
    %c0_i32 = arith.constant 0 : i32
    %c0_i32_0 = arith.constant 0 : i32
    %c0_i32_1 = arith.constant 0 : i32
    return %c0_i32, %c0_i32_0 : i32, i32
  }
  func.func @transform_3(%arg0: i32, %arg1: i32) -> (i32, i32) {
    %c0_i32 = arith.constant 0 : i32
    %c0_i32_0 = arith.constant 0 : i32
    %c0_i32_1 = arith.constant 0 : i32
    return %c0_i32, %c0_i32_0 : i32, i32
  }
  func.func @transform_4(%arg0: i32, %arg1: i32) -> (i32, i32) {
    %c0_i32 = arith.constant 0 : i32
    %c0_i32_0 = arith.constant 0 : i32
    %c0_i32_1 = arith.constant 0 : i32
    return %c0_i32, %c0_i32_0 : i32, i32
  }
  func.func @transform_5(%arg0: i32, %arg1: i32) -> (i32, i32) {
    %c0_i32 = arith.constant 0 : i32
    %c0_i32_0 = arith.constant 0 : i32
    %c0_i32_1 = arith.constant 0 : i32
    return %c0_i32, %c0_i32_0 : i32, i32
  }
  func.func @transform_6(%arg0: i32, %arg1: i32) -> (i32, i32) {
    %c0_i32 = arith.constant 0 : i32
    %c0_i32_0 = arith.constant 0 : i32
    %c0_i32_1 = arith.constant 0 : i32
    return %c0_i32, %c0_i32_0 : i32, i32
  }
  func.func @transform_7(%arg0: i32, %arg1: i32) -> (i32, i32) {
    %c0_i32 = arith.constant 0 : i32
    %c0_i32_0 = arith.constant 0 : i32
    %c0_i32_1 = arith.constant 0 : i32
    return %c0_i32, %c0_i32_0 : i32, i32
  }
  func.func @transform_8(%arg0: i32, %arg1: i32) -> (i32, i32) {
    %c0_i32 = arith.constant 0 : i32
    %c0_i32_0 = arith.constant 0 : i32
    %c0_i32_1 = arith.constant 0 : i32
    return %c0_i32, %c0_i32_0 : i32, i32
  }
  func.func @transform_9(%arg0: i32, %arg1: i32) -> i32 {
    %c0_i32 = arith.constant 0 : i32
    %c0_i32_0 = arith.constant 0 : i32
    return %c0_i32 : i32
  }
  func.func @transform_10(%arg0: i32, %arg1: i32) -> (i32, i32, i32) {
    %c0_i32 = arith.constant 0 : i32
    %c0_i32_0 = arith.constant 0 : i32
    return %arg0, %c0_i32, %arg1 : i32, i32, i32
  }
  func.func @transform_11(%arg0: i32, %arg1: i32) -> (i32, i32, i32) {
    %c0_i32 = arith.constant 0 : i32
    %c0_i32_0 = arith.constant 0 : i32
    return %arg0, %arg1, %c0_i32 : i32, i32, i32
  }
}

</mosaic_0001>

<llo_original>
// kernel: tpu_custom_call.1
$region0: #{tpu_custom_call.1}
  #allocation0 [shape = 'u32[]', space=smem, size = 0x4, offset = 0x4, fixed_abs, tag = 'smem constant byte address 0x4 - core index']
  #allocation1 [shape = 'u32[72,128]{1,0:T(1,128)}', space=vmem, size = 0x9000, scoped, tag = 'internal scratch']
  #allocation2 [shape = 'f32[8,256]{1,0:T(8,128)}', space=vmem, size = 0x2000, scoped, tag = 'scratch operand']
  #allocation3 [shape = 'bf16[64,256]{1,0:T(8,128)(2,1)}', space=vmem, size = 0x8000, scoped, tag = 'scratch operand']
  #allocation4 [shape = 'f32[1]{0:T(128)S(6)}', space=smem, size = 0x200, scoped, tag = 'scoped memory for tpu_custom_call.1']
  %s0 = inlined_call_operand.hbm [shape: f32[2,64,256], index: 0, kind: input, shape index: {}]
  %s1 = inlined_call_operand.hbm [shape: f32[2,64,256], index: 1, kind: input, shape index: {}]
  %s2 = inlined_call_operand.hbm [shape: f32[8,64], index: 2, kind: input, shape index: {}]
  %s3 = inlined_call_operand.vmem [shape: f32[8,1], index: 3, kind: input, shape index: {}]
  %s4 = inlined_call_operand.hbm [shape: f32[8,64], index: 4, kind: input, shape index: {}]
  %s5 = inlined_call_operand.vmem [shape: f32[8,1], index: 5, kind: input, shape index: {}]
  %s6 = inlined_call_operand.vmem [shape: f32[64,64], index: 6, kind: input, shape index: {}]
  %s7 = inlined_call_operand.vmem [shape: f32[64,1], index: 7, kind: input, shape index: {}]
  %s8 = inlined_call_operand.vmem [shape: f32[8,256], index: 8, kind: input, shape index: {}]
  %s9 = inlined_call_operand.<no memory space> [shape: f32[1], index: 9, kind: input, shape index: {}]
  %s10 = inlined_call_operand.hbm [shape: f32[2,64,256], index: 10, kind: output, shape index: {0}]
  %s11 = inlined_call_operand.hbm [shape: bf16[2,256,256], index: 11, kind: output, shape index: {1}]
  %12 = xla_tuple %s10, %s11
  %s13 = sld [smem:[#allocation0]]
  $region101: #{tpu_custom_call.1} parent=0
    _
  %s15 = ssub.s32 1, %s13
  %s16 = scalar_select 0, %s15, %s13
  %17 = sst [smem:[#allocation4]] %s9
  $region1: #{tpu_custom_call.1} parent=0
    #allocation5 [shape = 'u8[131072]{0}', space=vmem, size = 0x20000, scoped, tag = 'input window, operand 0']
    #allocation6 [shape = 's32[2]{0}', space=sflag, size = 0x8, scoped, tag = 'scoped memory for tpu_custom_call.1']
    #allocation7 [shape = 's32[2]{0}', space=sflag, size = 0x8, scoped, tag = 'scoped memory for tpu_custom_call.1']
    #allocation8 [shape = 'u8[65536]{0}', space=vmem, size = 0x10000, scoped, tag = 'input window, operand 1, single buffered']
    #allocation9 [shape = 's32[1]{0}', space=sflag, size = 0x4, scoped, tag = 'scoped memory for tpu_custom_call.1']
    #allocation10 [shape = 'u8[4096]{0}', space=vmem, size = 0x1000, scoped, tag = 'input window, operand 2, single buffered']
    #allocation11 [shape = 'u8[4096]{0}', space=vmem, size = 0x1000, scoped, tag = 'input window, operand 4, single buffered']
    #allocation12 [shape = 's32[1]{0}', space=sflag, size = 0x4, scoped, tag = 'scoped memory for tpu_custom_call.1']
    #allocation13 [shape = 'u8[131072]{0}', space=vmem, size = 0x20000, scoped, tag = 'output window, operand 0']
    #allocation14 [shape = 'u8[262144]{0}', space=vmem, size = 0x40000, scoped, tag = 'output window, operand 1']
    #allocation15 [shape = 's32[2]{0}', space=sflag, size = 0x8, scoped, tag = 'scoped memory for tpu_custom_call.1']
    %18 = vsyncpa [#allocation6], 0
    %s19 = scalar_lea.sflag [#allocation6], 1
    %20 = vsyncpa %s19, 0
    %21 = vsyncpa [#allocation9], 0
    %22 = vsyncpa [#allocation12], 0
    %23 = vsyncpa [#allocation7], 0
    %s24 = scalar_lea.sflag [#allocation7], 1
    %25 = vsyncpa %s24, 0
    %26 = vsyncpa [#allocation15], 0
    %s27 = scalar_lea.sflag [#allocation15], 1
    %28 = vsyncpa %s27, 0
    loop: start=0, step=1, limit=4
    $region2: #{tpu_custom_call.1} parent=1 // loop_pre_header
      _
    $region3: #{tpu_custom_call.1} parent=1 // loop_header
      %s30 = sphi 0, %s34
      %p31 = scmp.ge.s32.totalorder %s30, 4
      %s37 = sphi 0, %s49
      %s38 = sphi 0, %s45
      %s39 = sphi 0, %s37
      %s40 = sphi 0, %s38
      %s41 = sphi 0, %s39
      %s42 = sphi 0, %s40
      %s54 = sphi 0, %s56
      %s57 = sphi 0, %s54
      %s58 = sphi 0, %s57
      %s74 = sphi 0, %s58
      %s80 = sphi 0, %s82
      %s83 = sphi 0, %s80
      %s84 = sphi 0, %s83
      %s100 = sphi 0, %s84
      %s104 = sphi 0, %s104
      %s106 = sphi 0, %s104
      %s107 = sphi 0, %s106
      %s121 = sphi 0, %s107
      %s125 = sphi 0, %s125
      %s127 = sphi 0, %s125
      %s128 = sphi 0, %s127
      %s142 = sphi 0, %s128
      %s146 = sphi 0, %s146
      %s148 = sphi 0, %s146
      %s149 = sphi 0, %s148
      %s163 = sphi 0, %s149
      %s167 = sphi 0, %s167
      %s169 = sphi 0, %s167
      %s170 = sphi 0, %s169
      %s184 = sphi 0, %s170
      %s188 = sphi 0, %s188
      %s190 = sphi 0, %s188
      %s191 = sphi 0, %s190
      %s205 = sphi 0, %s191
      %s209 = sphi 0, %s209
      %s211 = sphi 0, %s209
      %s212 = sphi 0, %s211
      %s226 = sphi 0, %s212
      %s230 = sphi 0, %s230
      %s232 = sphi 0, %s230
      %s233 = sphi 0, %s232
      %s247 = sphi 0, %s233
      %s251 = sphi 0, %s251
      %s253 = sphi 0, %s251
      %s254 = sphi 0, %s253
      %s268 = sphi 0, %s254
      %s276 = sphi 0, %s278
      %s279 = sphi 0, %s276
      %s280 = sphi 0, %s279
      %s296 = sphi 0, %s280
      %s304 = sphi 0, %s306
      %s307 = sphi 0, %s304
      %s308 = sphi 0, %s307
      %s324 = sphi 0, %s308
    $region4: #{tpu_custom_call.1} parent=1 // loop_header_branch
      %33 = sbr.rel (%p31) target = $region8
    $region5: #{tpu_custom_call.1} parent=1 // loop_body
      %s35 = ssub.s32 %s30, 1
      %s36 = ssub.s32 %s30, 2
      %s43 = sadd.s32 1, %s38
      %p44 = scmp.ge.s32.totalorder %s43, 1
      %s45 = scalar_select %p44, 0, %s43
      %s46 = sadd.s32 1, %s37
      %s47 = scalar_select %p44, %s46, %s37
      %p48 = scmp.ge.s32.totalorder %s47, 2
      %s49 = scalar_select %p48, 0, %s47
      %s50 = ssub.s32 %s37, %s49
      %s51 = ssub.s32 %s38, %s45
      %s52 = sor.u32 %s50, %s51
      %p53 = scmp.eq.s32.totalorder %s52, 0
      %s55 = sadd.s32 %s54, 1
      %s56 = scalar_select %p53, %s54, %s55
      %p59 = pneg %p53
      %p60 = scmp.eq.s32.totalorder %s30, 1
      %p61 = por %p59, %p60
      %p62 = scmp.ne.s32.totalorder %s54, %s57
      %p63 = scmp.eq.s32.totalorder %s30, 0
      %p64 = por %p62, %p63
      %p65 = scmp.ne.s32.totalorder %s54, %s57
      %p66 = scmp.eq.s32.totalorder %s35, 1
      %p67 = por %p65, %p66
      %p68 = scmp.ne.s32.totalorder %s57, %s58
      %p69 = scmp.eq.s32.totalorder %s35, 0
      %p70 = por %p68, %p69
      %p71 = scmp.ne.s32.totalorder %s57, %s58
      %p72 = scmp.eq.s32.totalorder %s36, 1
      %p73 = por %p71, %p72
      %p75 = scmp.ne.s32.totalorder %s58, %s74
      %p76 = scmp.eq.s32.totalorder %s36, 0
      %p77 = por %p75, %p76
      %s78 = ssub.s32 %s37, %s49
      %p79 = scmp.eq.s32.totalorder %s78, 0
      %s81 = sadd.s32 %s80, 1
      %s82 = scalar_select %p79, %s80, %s81
      %p85 = pneg %p79
      %p86 = scmp.eq.s32.totalorder %s30, 1
      %p87 = por %p85, %p86
      %p88 = scmp.ne.s32.totalorder %s80, %s83
      %p89 = scmp.eq.s32.totalorder %s30, 0
      %p90 = por %p88, %p89
      %p91 = scmp.ne.s32.totalorder %s80, %s83
      %p92 = scmp.eq.s32.totalorder %s35, 1
      %p93 = por %p91, %p92
      %p94 = scmp.ne.s32.totalorder %s83, %s84
      %p95 = scmp.eq.s32.totalorder %s35, 0
      %p96 = por %p94, %p95
      %p97 = scmp.ne.s32.totalorder %s83, %s84
      %p98 = scmp.eq.s32.totalorder %s36, 1
      %p99 = por %p97, %p98
      %p101 = scmp.ne.s32.totalorder %s84, %s100
      %p102 = scmp.eq.s32.totalorder %s36, 0
      %p103 = por %p101, %p102
      %s105 = sadd.s32 %s104, 1
      %p108 = scmp.eq.s32.totalorder %s30, 1
      %p109 = scmp.ne.s32.totalorder %s104, %s106
      %p110 = scmp.eq.s32.totalorder %s30, 0
      %p111 = por %p109, %p110
      %p112 = scmp.ne.s32.totalorder %s104, %s106
      %p113 = scmp.eq.s32.totalorder %s35, 1
      %p114 = por %p112, %p113
      %p115 = scmp.ne.s32.totalorder %s106, %s107
      %p116 = scmp.eq.s32.totalorder %s35, 0
      %p117 = por %p115, %p116
      %p118 = scmp.ne.s32.totalorder %s106, %s107
      %p119 = scmp.eq.s32.totalorder %s36, 1
      %p120 = por %p118, %p119
      %p122 = scmp.ne.s32.totalorder %s107, %s121
      %p123 = scmp.eq.s32.totalorder %s36, 0
      %p124 = por %p122, %p123
      %s126 = sadd.s32 %s125, 1
      %p129 = scmp.eq.s32.totalorder %s30, 1
      %p130 = scmp.ne.s32.totalorder %s125, %s127
      %p131 = scmp.eq.s32.totalorder %s30, 0
      %p132 = por %p130, %p131
      %p133 = scmp.ne.s32.totalorder %s125, %s127
      %p134 = scmp.eq.s32.totalorder %s35, 1
      %p135 = por %p133, %p134
      %p136 = scmp.ne.s32.totalorder %s127, %s128
      %p137 = scmp.eq.s32.totalorder %s35, 0
      %p138 = por %p136, %p137
      %p139 = scmp.ne.s32.totalorder %s127, %s128
      %p140 = scmp.eq.s32.totalorder %s36, 1
      %p141 = por %p139, %p140
      %p143 = scmp.ne.s32.totalorder %s128, %s142
      %p144 = scmp.eq.s32.totalorder %s36, 0
      %p145 = por %p143, %p144
      %s147 = sadd.s32 %s146, 1
      %p150 = scmp.eq.s32.totalorder %s30, 1
      %p151 = scmp.ne.s32.totalorder %s146, %s148
      %p152 = scmp.eq.s32.totalorder %s30, 0
      %p153 = por %p151, %p152
      %p154 = scmp.ne.s32.totalorder %s146, %s148
      %p155 = scmp.eq.s32.totalorder %s35, 1
      %p156 = por %p154, %p155
      %p157 = scmp.ne.s32.totalorder %s148, %s149
      %p158 = scmp.eq.s32.totalorder %s35, 0
      %p159 = por %p157, %p158
      %p160 = scmp.ne.s32.totalorder %s148, %s149
      %p161 = scmp.eq.s32.totalorder %s36, 1
      %p162 = por %p160, %p161
      %p164 = scmp.ne.s32.totalorder %s149, %s163
      %p165 = scmp.eq.s32.totalorder %s36, 0
      %p166 = por %p164, %p165
      %s168 = sadd.s32 %s167, 1
      %p171 = scmp.eq.s32.totalorder %s30, 1
      %p172 = scmp.ne.s32.totalorder %s167, %s169
      %p173 = scmp.eq.s32.totalorder %s30, 0
      %p174 = por %p172, %p173
      %p175 = scmp.ne.s32.totalorder %s167, %s169
      %p176 = scmp.eq.s32.totalorder %s35, 1
      %p177 = por %p175, %p176
      %p178 = scmp.ne.s32.totalorder %s169, %s170
      %p179 = scmp.eq.s32.totalorder %s35, 0
      %p180 = por %p178, %p179
      %p181 = scmp.ne.s32.totalorder %s169, %s170
      %p182 = scmp.eq.s32.totalorder %s36, 1
      %p183 = por %p181, %p182
      %p185 = scmp.ne.s32.totalorder %s170, %s184
      %p186 = scmp.eq.s32.totalorder %s36, 0
      %p187 = por %p185, %p186
      %s189 = sadd.s32 %s188, 1
      %p192 = scmp.eq.s32.totalorder %s30, 1
      %p193 = scmp.ne.s32.totalorder %s188, %s190
      %p194 = scmp.eq.s32.totalorder %s30, 0
      %p195 = por %p193, %p194
      %p196 = scmp.ne.s32.totalorder %s188, %s190
      %p197 = scmp.eq.s32.totalorder %s35, 1
      %p198 = por %p196, %p197
      %p199 = scmp.ne.s32.totalorder %s190, %s191
      %p200 = scmp.eq.s32.totalorder %s35, 0
      %p201 = por %p199, %p200
      %p202 = scmp.ne.s32.totalorder %s190, %s191
      %p203 = scmp.eq.s32.totalorder %s36, 1
      %p204 = por %p202, %p203
      %p206 = scmp.ne.s32.totalorder %s191, %s205
      %p207 = scmp.eq.s32.totalorder %s36, 0
      %p208 = por %p206, %p207
      %s210 = sadd.s32 %s209, 1
      %p213 = scmp.eq.s32.totalorder %s30, 1
      %p214 = scmp.ne.s32.totalorder %s209, %s211
      %p215 = scmp.eq.s32.totalorder %s30, 0
      %p216 = por %p214, %p215
      %p217 = scmp.ne.s32.totalorder %s209, %s211
      %p218 = scmp.eq.s32.totalorder %s35, 1
      %p219 = por %p217, %p218
      %p220 = scmp.ne.s32.totalorder %s211, %s212
      %p221 = scmp.eq.s32.totalorder %s35, 0
      %p222 = por %p220, %p221
      %p223 = scmp.ne.s32.totalorder %s211, %s212
      %p224 = scmp.eq.s32.totalorder %s36, 1
      %p225 = por %p223, %p224
      %p227 = scmp.ne.s32.totalorder %s212, %s226
      %p228 = scmp.eq.s32.totalorder %s36, 0
      %p229 = por %p227, %p228
      %s231 = sadd.s32 %s230, 1
      %p234 = scmp.eq.s32.totalorder %s30, 1
      %p235 = scmp.ne.s32.totalorder %s230, %s232
      %p236 = scmp.eq.s32.totalorder %s30, 0
      %p237 = por %p235, %p236
      %p238 = scmp.ne.s32.totalorder %s230, %s232
      %p239 = scmp.eq.s32.totalorder %s35, 1
      %p240 = por %p238, %p239
      %p241 = scmp.ne.s32.totalorder %s232, %s233
      %p242 = scmp.eq.s32.totalorder %s35, 0
      %p243 = por %p241, %p242
      %p244 = scmp.ne.s32.totalorder %s232, %s233
      %p245 = scmp.eq.s32.totalorder %s36, 1
      %p246 = por %p244, %p245
      %p248 = scmp.ne.s32.totalorder %s233, %s247
      %p249 = scmp.eq.s32.totalorder %s36, 0
      %p250 = por %p248, %p249
      %s252 = sadd.s32 %s251, 1
      %p255 = scmp.eq.s32.totalorder %s30, 1
      %p256 = scmp.ne.s32.totalorder %s251, %s253
      %p257 = scmp.eq.s32.totalorder %s30, 0
      %p258 = por %p256, %p257
      %p259 = scmp.ne.s32.totalorder %s251, %s253
      %p260 = scmp.eq.s32.totalorder %s35, 1
      %p261 = por %p259, %p260
      %p262 = scmp.ne.s32.totalorder %s253, %s254
      %p263 = scmp.eq.s32.totalorder %s35, 0
      %p264 = por %p262, %p263
      %p265 = scmp.ne.s32.totalorder %s253, %s254
      %p266 = scmp.eq.s32.totalorder %s36, 1
      %p267 = por %p265, %p266
      %p269 = scmp.ne.s32.totalorder %s254, %s268
      %p270 = scmp.eq.s32.totalorder %s36, 0
      %p271 = por %p269, %p270
      %s272 = ssub.s32 %s37, %s49
      %s273 = ssub.s32 %s38, %s45
      %s274 = sor.u32 %s272, %s273
      %p275 = scmp.eq.s32.totalorder %s274, 0
      %s277 = sadd.s32 %s276, 1
      %s278 = scalar_select %p275, %s276, %s277
      %p281 = pneg %p275
      %p282 = scmp.eq.s32.totalorder %s30, 1
      %p283 = por %p281, %p282
      %p284 = scmp.ne.s32.totalorder %s276, %s279
      %p285 = scmp.eq.s32.totalorder %s30, 0
      %p286 = por %p284, %p285
      %p287 = scmp.ne.s32.totalorder %s276, %s279
      %p288 = scmp.eq.s32.totalorder %s35, 1
      %p289 = por %p287, %p288
      %p290 = scmp.ne.s32.totalorder %s279, %s280
      %p291 = scmp.eq.s32.totalorder %s35, 0
      %p292 = por %p290, %p291
      %p293 = scmp.ne.s32.totalorder %s279, %s280
      %p294 = scmp.eq.s32.totalorder %s36, 1
      %p295 = por %p293, %p294
      %p297 = scmp.ne.s32.totalorder %s280, %s296
      %p298 = scmp.eq.s32.totalorder %s36, 0
      %p299 = por %p297, %p298
      %s300 = ssub.s32 %s37, %s49
      %s301 = ssub.s32 %s38, %s45
      %s302 = sor.u32 %s300, %s301
      %p303 = scmp.eq.s32.totalorder %s302, 0
      %s305 = sadd.s32 %s304, 1
      %s306 = scalar_select %p303, %s304, %s305
      %p309 = pneg %p303
      %p310 = scmp.eq.s32.totalorder %s30, 1
      %p311 = por %p309, %p310
      %p312 = scmp.ne.s32.totalorder %s304, %s307
      %p313 = scmp.eq.s32.totalorder %s30, 0
      %p314 = por %p312, %p313
      %p315 = scmp.ne.s32.totalorder %s304, %s307
      %p316 = scmp.eq.s32.totalorder %s35, 1
      %p317 = por %p315, %p316
      %p318 = scmp.ne.s32.totalorder %s307, %s308
      %p319 = scmp.eq.s32.totalorder %s35, 0
      %p320 = por %p318, %p319
      %p321 = scmp.ne.s32.totalorder %s307, %s308
      %p322 = scmp.eq.s32.totalorder %s36, 1
      %p323 = por %p321, %p322
      %p325 = scmp.ne.s32.totalorder %s308, %s324
      %p326 = scmp.eq.s32.totalorder %s36, 0
      %p327 = por %p325, %p326
      %p328 = scmp.le.s32.totalorder 1, %s30
      %p329 = scmp.lt.s32.totalorder %s30, 3
      %p330 = pnand %p328, %p329
      %p331 = pneg %p330
      // Predicated region
      $region9: #{tpu_custom_call.1} parent=5 // pred_check
        _
      $region10: #{tpu_custom_call.1} parent=5 // pred_check_branch
        %333 = sbr.rel (%p330) target = $region12
      $region11: #{tpu_custom_call.1} parent=5 // pred_region
        %s334 = ssub.s32 %s30, 1
        // Predicated region
        $region13: #{tpu_custom_call.1} parent=11 // pred_check
          %p335 = pneg %p96
        $region14: #{tpu_custom_call.1} parent=11 // pred_check_branch
          %337 = sbr.rel (%p335) target = $region16
        $region15: #{tpu_custom_call.1} parent=11 // pred_region
          %339 = vsyncadd [#allocation9], 0
          %s340 = smul.addr %s39, 16
          %s341 = smul.addr %s340, 8
          %s342 = scalar_lea.hbm %s1, %s341
          %s343 = sshll.u32 %s342, 4
          %s344 = int_to_ptr.hbm [resolvable:$true] %s343
          %s345 = sshll.u32 [#allocation8], 4
          %s346 = int_to_ptr.vmem [resolvable:$true] %s345
          %351 = dma.hbm_to_vmem [thread:$0]  %s344, 2048, %s346, [#allocation9], 256, 256, 16
        $region16: #{tpu_custom_call.1} parent=11 // pred_fallthru
          _
        // Predicated region
        $region17: #{tpu_custom_call.1} parent=11 // pred_check
          %p352 = pneg %p117
        $region18: #{tpu_custom_call.1} parent=11 // pred_check_branch
          %354 = sbr.rel (%p352) target = $region20
        $region19: #{tpu_custom_call.1} parent=11 // pred_region
          %356 = vsyncadd [#allocation9], 0
          %s358 = sshll.u32 %s2, 4
          %s359 = int_to_ptr.hbm [resolvable:$true] %s358
          %s360 = sshll.u32 [#allocation10], 4
          %s361 = int_to_ptr.vmem [resolvable:$true] %s360
          %363 = dma.hbm_to_vmem [thread:$0]  %s359, 128, %s361, [#allocation9]
        $region20: #{tpu_custom_call.1} parent=11 // pred_fallthru
          _
        // Predicated region
        $region21: #{tpu_custom_call.1} parent=11 // pred_check
          %p364 = pneg %p138
        $region22: #{tpu_custom_call.1} parent=11 // pred_check_branch
          %366 = sbr.rel (%p364) target = $region24
        $region23: #{tpu_custom_call.1} parent=11 // pred_region
          _
        $region24: #{tpu_custom_call.1} parent=11 // pred_fallthru
          _
        // Predicated region
        $region25: #{tpu_custom_call.1} parent=11 // pred_check
          %p367 = pneg %p159
        $region26: #{tpu_custom_call.1} parent=11 // pred_check_branch
          %369 = sbr.rel (%p367) target = $region28
        $region27: #{tpu_custom_call.1} parent=11 // pred_region
          %371 = vsyncadd [#allocation12], 0
          %s373 = sshll.u32 %s4, 4
          %s374 = int_to_ptr.hbm [resolvable:$true] %s373
          %s375 = sshll.u32 [#allocation11], 4
          %s376 = int_to_ptr.vmem [resolvable:$true] %s375
          %378 = dma.hbm_to_vmem [thread:$0]  %s374, 128, %s376, [#allocation12]
        $region28: #{tpu_custom_call.1} parent=11 // pred_fallthru
          _
        // Predicated region
        $region29: #{tpu_custom_call.1} parent=11 // pred_check
          %p379 = pneg %p180
        $region30: #{tpu_custom_call.1} parent=11 // pred_check_branch
          %381 = sbr.rel (%p379) target = $region32
        $region31: #{tpu_custom_call.1} parent=11 // pred_region
          _
        $region32: #{tpu_custom_call.1} parent=11 // pred_fallthru
          _
        // Predicated region
        $region33: #{tpu_custom_call.1} parent=11 // pred_check
          %p382 = pneg %p201
        $region34: #{tpu_custom_call.1} parent=11 // pred_check_branch
          %384 = sbr.rel (%p382) target = $region36
        $region35: #{tpu_custom_call.1} parent=11 // pred_region
          _
        $region36: #{tpu_custom_call.1} parent=11 // pred_fallthru
          _
        // Predicated region
        $region37: #{tpu_custom_call.1} parent=11 // pred_check
          %p385 = pneg %p222
        $region38: #{tpu_custom_call.1} parent=11 // pred_check_branch
          %387 = sbr.rel (%p385) target = $region40
        $region39: #{tpu_custom_call.1} parent=11 // pred_region
          _
        $region40: #{tpu_custom_call.1} parent=11 // pred_fallthru
          _
        // Predicated region
        $region41: #{tpu_custom_call.1} parent=11 // pred_check
          %p388 = pneg %p243
        $region42: #{tpu_custom_call.1} parent=11 // pred_check_branch
          %390 = sbr.rel (%p388) target = $region44
        $region43: #{tpu_custom_call.1} parent=11 // pred_region
          _
        $region44: #{tpu_custom_call.1} parent=11 // pred_fallthru
          _
        // Predicated region
        $region45: #{tpu_custom_call.1} parent=11 // pred_check
          %p391 = pneg %p264
        $region46: #{tpu_custom_call.1} parent=11 // pred_check_branch
          %393 = sbr.rel (%p391) target = $region48
        $region47: #{tpu_custom_call.1} parent=11 // pred_region
          _
        $region48: #{tpu_custom_call.1} parent=11 // pred_fallthru
          _
      $region12: #{tpu_custom_call.1} parent=5 // pred_fallthru
        _
      %p394 = scmp.lt.s32.totalorder %s30, 2
      // Predicated region
      $region49: #{tpu_custom_call.1} parent=5 // pred_check
        %p395 = pneg %p394
      $region50: #{tpu_custom_call.1} parent=5 // pred_check_branch
        %397 = sbr.rel (%p395) target = $region52
      $region51: #{tpu_custom_call.1} parent=5 // pred_region
        // Predicated region
        $region53: #{tpu_custom_call.1} parent=51 // pred_check
          %p398 = pneg %p64
        $region54: #{tpu_custom_call.1} parent=51 // pred_check_branch
          %400 = sbr.rel (%p398) target = $region56
        $region55: #{tpu_custom_call.1} parent=51 // pred_region
          %s401 = sand.u32 %s54, 1
          %s402 = scalar_lea.sflag [#allocation6], %s401
          %s403 = sand.u32 %s54, 1
          %s404 = smul.addr %s403, 128
          %s405 = scalar_lea.vmem [#allocation5], %s404
          %s406 = smul.u32 2, %s38
          %408 = vsyncadd %s402, 0
          %s409 = smul.addr %s37, 16
          %s410 = sadd.s32 %s406, %s409
          %s411 = smul.addr %s410, 8
          %s412 = scalar_lea.hbm %s0, %s411
          %s413 = sshll.u32 %s412, 4
          %s414 = int_to_ptr.hbm [resolvable:$true] %s413
          %s415 = sshll.u32 %s405, 4
          %s416 = int_to_ptr.vmem [resolvable:$true] %s415
          %421 = dma.hbm_to_vmem [thread:$0]  %s414, 2048, %s416, %s402, 256, 256, 16
        $region56: #{tpu_custom_call.1} parent=51 // pred_fallthru
          _
      $region52: #{tpu_custom_call.1} parent=5 // pred_fallthru
        _
      %p422 = scmp.le.s32.totalorder 1, %s30
      %p423 = scmp.lt.s32.totalorder %s30, 3
      %p424 = pnand %p422, %p423
      %p425 = pneg %p424
      // Predicated region
      $region57: #{tpu_custom_call.1} parent=5 // pred_check
        _
      $region58: #{tpu_custom_call.1} parent=5 // pred_check_branch
        %427 = sbr.rel (%p424) target = $region60
      $region59: #{tpu_custom_call.1} parent=5 // pred_region
        %s428 = ssub.s32 %s30, 1
        %s429 = sand.u32 %s57, 1
        %s430 = scalar_lea.sflag [#allocation6], %s429
        %s431 = sand.u32 %s57, 1
        %s432 = smul.addr %s431, 128
        %s433 = scalar_lea.vmem [#allocation5], %s432
        // Predicated region
        $region61: #{tpu_custom_call.1} parent=59 // pred_check
          %p434 = pneg %p70
        $region62: #{tpu_custom_call.1} parent=59 // pred_check_branch
          %436 = sbr.rel (%p434) target = $region64
        $region63: #{tpu_custom_call.1} parent=59 // pred_region
          %438 = dma.done %s430, 2048
        $region64: #{tpu_custom_call.1} parent=59 // pred_fallthru
          _
        // Predicated region
        $region65: #{tpu_custom_call.1} parent=59 // pred_check
          %p439 = pneg %p96
        $region66: #{tpu_custom_call.1} parent=59 // pred_check_branch
          %441 = sbr.rel (%p439) target = $region68
        $region67: #{tpu_custom_call.1} parent=59 // pred_region
          %443 = dma.done [#allocation9], 2048
        $region68: #{tpu_custom_call.1} parent=59 // pred_fallthru
          _
        // Predicated region
        $region69: #{tpu_custom_call.1} parent=59 // pred_check
          %p444 = pneg %p117
        $region70: #{tpu_custom_call.1} parent=59 // pred_check_branch
          %446 = sbr.rel (%p444) target = $region72
        $region71: #{tpu_custom_call.1} parent=59 // pred_region
          %448 = dma.done [#allocation9], 128
        $region72: #{tpu_custom_call.1} parent=59 // pred_fallthru
          _
        // Predicated region
        $region73: #{tpu_custom_call.1} parent=59 // pred_check
          %p449 = pneg %p159
        $region74: #{tpu_custom_call.1} parent=59 // pred_check_branch
          %451 = sbr.rel (%p449) target = $region76
        $region75: #{tpu_custom_call.1} parent=59 // pred_region
          %453 = dma.done [#allocation12], 128
        $region76: #{tpu_custom_call.1} parent=59 // pred_fallthru
          _
        %s454 = sand.u32 %s57, 1
        %s455 = scalar_lea.sflag [#allocation6], %s454
        %s456 = sand.u32 %s57, 1
        %s457 = smul.addr %s456, 128
        %s458 = scalar_lea.vmem [#allocation5], %s457
        %p459 = pneg %p70
        %p460 = pneg %p67
        %p461 = pneg %p96
        %p462 = pneg %p93
        %p463 = pneg %p117
        %p464 = pneg %p114
        %p465 = pneg %p138
        %p466 = pneg %p135
        %p467 = pneg %p159
        %p468 = pneg %p156
        %p469 = pneg %p180
        %p470 = pneg %p177
        %p471 = pneg %p201
        %p472 = pneg %p198
        %p473 = pneg %p222
        %p474 = pneg %p219
        %p475 = pneg %p243
        %p476 = pneg %p240
        %p477 = pneg %p264
        %p478 = pneg %p261
        %p479 = pneg %p292
        %p480 = pneg %p289
        %s481 = sand.u32 %s279, 1
        %s482 = scalar_lea.sflag [#allocation7], %s481
        %s483 = sand.u32 %s279, 1
        %s484 = smul.addr %s483, 128
        %s485 = scalar_lea.vmem [#allocation13], %s484
        %p486 = pneg %p320
        %p487 = pneg %p317
        %s488 = sand.u32 %s307, 1
        %s489 = scalar_lea.sflag [#allocation15], %s488
        %s490 = sand.u32 %s307, 1
        %s491 = smul.addr %s490, 256
        %s492 = scalar_lea.vmem [#allocation14], %s491
        %s493 = smul.u32 2, %s40
        %s494 = smul.u32 2, %s40
        %s495 = smul.u32 32, %s40
        %p496 = scmp.eq.s32.totalorder %s40, 0
        // Predicated region
        $region77: #{tpu_custom_call.1} parent=59 // pred_check
          %p497 = pneg %p496
        $region78: #{tpu_custom_call.1} parent=59 // pred_check_branch
          %499 = sbr.rel (%p497) target = $region80
        $region79: #{tpu_custom_call.1} parent=59 // pred_region
          %v500 = vld [vmem:[#allocation8] sm:$0xff]
          %v501 = vld [vmem:[#allocation8 + $0x8] sm:$0xff]
          %v502 = vld [vmem:[#allocation8 + $0x10] sm:$0xff]
          %v503 = vld [vmem:[#allocation8 + $0x18] sm:$0xff]
          %v504 = vld [vmem:[#allocation8 + $0x20] sm:$0xff]
          %v505 = vld [vmem:[#allocation8 + $0x28] sm:$0xff]
          %v506 = vld [vmem:[#allocation8 + $0x30] sm:$0xff]
          %v507 = vld [vmem:[#allocation8 + $0x38] sm:$0xff]
          %v508 = vld [vmem:[#allocation8 + $0x40] sm:$0xff]
          %v509 = vld [vmem:[#allocation8 + $0x48] sm:$0xff]
          %v510 = vld [vmem:[#allocation8 + $0x50] sm:$0xff]
          %v511 = vld [vmem:[#allocation8 + $0x58] sm:$0xff]
          %v512 = vld [vmem:[#allocation8 + $0x60] sm:$0xff]
          %v513 = vld [vmem:[#allocation8 + $0x68] sm:$0xff]
          %v514 = vld [vmem:[#allocation8 + $0x70] sm:$0xff]
          %v515 = vld [vmem:[#allocation8 + $0x78] sm:$0xff]
          %v516 = vld [vmem:[#allocation11] sm:$0xff]
          %v517 = vld [vmem:[%s5] sm:$0xff]
          %519 = vset.pattern.permute.xlu0 0
          %520 = vperm.xlu0 %519, %v517
          %v521 = vpop.permute.xlu0 %520
          %vm523 = vcmask 523264
          %v525 = vsel %vm523, %v516, 0
          %527 = vmatpush.msra.mxu0 0.0
          %528 = vmatpush.msra.mxu0 0.0
          %529 = vmatpush.msra.mxu0 0.0
          %530 = vmatpush.msra.mxu0 0.0
          %531 = vmatpush.msra.mxu0 0.0
          %532 = vmatpush.msra.mxu0 0.0
          %533 = vmatpush.msra.mxu0 0.0
          %534 = vmatpush.msra.mxu0 0.0
          %535 = vmatpush.msra.mxu0 %v514
          %536 = vmatpush.msra.mxu0 %v512
          %537 = vmatpush.msra.mxu0 %v510
          %538 = vmatpush.msra.mxu0 %v508
          %539 = vmatpush.msra.mxu0 %v506
          %540 = vmatpush.msra.mxu0 %v504
          %541 = vmatpush.msra.mxu0 %v502
          %542 = vmatpush.msra.mxu0 %v500
          %543 = vmatmul.f32.gmra.mxu0 %v525
          %v544 = vpop.f32.mrf.mxu0
          %v545 = vadd.f32 %v521, %v544
          %546 = vdwg.mxu0
          %547 = vmatpush.msra.mxu0 0.0
          %548 = vmatpush.msra.mxu0 0.0
          %549 = vmatpush.msra.mxu0 0.0
          %550 = vmatpush.msra.mxu0 0.0
          %551 = vmatpush.msra.mxu0 0.0
          %552 = vmatpush.msra.mxu0 0.0
          %553 = vmatpush.msra.mxu0 0.0
          %554 = vmatpush.msra.mxu0 0.0
          %555 = vmatpush.msra.mxu0 %v515
          %556 = vmatpush.msra.mxu0 %v513
          %557 = vmatpush.msra.mxu0 %v511
          %558 = vmatpush.msra.mxu0 %v509
          %559 = vmatpush.msra.mxu0 %v507
          %560 = vmatpush.msra.mxu0 %v505
          %561 = vmatpush.msra.mxu0 %v503
          %562 = vmatpush.msra.mxu0 %v501
          %563 = vmatmul.f32.gmra.mxu0 %v525
          %v564 = vpop.f32.mrf.mxu0
          %v565 = vadd.f32 %v521, %v564
          %566 = vdwg.mxu0
          %v567 = vld [vmem:[%s8] sm:$0xff]
          %v568 = vld [vmem:[%s8 + $0x8] sm:$0xff]
          %v569 = vadd.f32 %v545, %v567
          %v570 = vadd.f32 %v565, %v568
          %571 = vst [vmem:[#allocation2] sm:$0xff] %v569
          %572 = vst [vmem:[#allocation2 + $0x8] sm:$0xff] %v570
          %v573 = vld [vmem:[%s6] sm:$0xff]
          %v574 = vld [vmem:[%s6 + $0x8] sm:$0xff]
          %v575 = vld [vmem:[%s6 + $0x10] sm:$0xff]
          %v576 = vld [vmem:[%s6 + $0x18] sm:$0xff]
          %v577 = vld [vmem:[%s6 + $0x20] sm:$0xff]
          %v578 = vld [vmem:[%s6 + $0x28] sm:$0xff]
          %v579 = vld [vmem:[%s6 + $0x30] sm:$0xff]
          %v580 = vld [vmem:[%s6 + $0x38] sm:$0xff]
          %v581 = vld [vmem:[%s7] sm:$0xff]
          %v582 = vld [vmem:[%s7 + $0x8] sm:$0xff]
          %v583 = vld [vmem:[%s7 + $0x10] sm:$0xff]
          %v584 = vld [vmem:[%s7 + $0x18] sm:$0xff]
          %v585 = vld [vmem:[%s7 + $0x20] sm:$0xff]
          %v586 = vld [vmem:[%s7 + $0x28] sm:$0xff]
          %v587 = vld [vmem:[%s7 + $0x30] sm:$0xff]
          %v588 = vld [vmem:[%s7 + $0x38] sm:$0xff]
          %590 = vset.pattern.permute.xlu0 0
          %591 = vperm.xlu0 %590, %v581
          %v592 = vpop.permute.xlu0 %591
          %595 = vset.pattern.permute.xlu0 0
          %596 = vperm.xlu0 %595, %v582
          %v597 = vpop.permute.xlu0 %596
          %600 = vset.pattern.permute.xlu0 0
          %601 = vperm.xlu0 %600, %v583
          %v602 = vpop.permute.xlu0 %601
          %605 = vset.pattern.permute.xlu0 0
          %606 = vperm.xlu0 %605, %v584
          %v607 = vpop.permute.xlu0 %606
          %610 = vset.pattern.permute.xlu0 0
          %611 = vperm.xlu0 %610, %v585
          %v612 = vpop.permute.xlu0 %611
          %615 = vset.pattern.permute.xlu0 0
          %616 = vperm.xlu0 %615, %v586
          %v617 = vpop.permute.xlu0 %616
          %620 = vset.pattern.permute.xlu0 0
          %621 = vperm.xlu0 %620, %v587
          %v622 = vpop.permute.xlu0 %621
          %625 = vset.pattern.permute.xlu0 0
          %626 = vperm.xlu0 %625, %v588
          %v627 = vpop.permute.xlu0 %626
          %v630 = vsel %vm523, %v573, 0
          %v633 = vsel %vm523, %v574, 0
          %v636 = vsel %vm523, %v575, 0
          %v639 = vsel %vm523, %v576, 0
          %v642 = vsel %vm523, %v577, 0
          %v645 = vsel %vm523, %v578, 0
          %v648 = vsel %vm523, %v579, 0
          %v651 = vsel %vm523, %v580, 0
          %653 = vmatpush.msra.mxu0 0.0
          %654 = vmatpush.msra.mxu0 0.0
          %655 = vmatpush.msra.mxu0 0.0
          %656 = vmatpush.msra.mxu0 0.0
          %657 = vmatpush.msra.mxu0 0.0
          %658 = vmatpush.msra.mxu0 0.0
          %659 = vmatpush.msra.mxu0 0.0
          %660 = vmatpush.msra.mxu0 0.0
          %661 = vmatpush.msra.mxu0 %v514
          %662 = vmatpush.msra.mxu0 %v512
          %663 = vmatpush.msra.mxu0 %v510
          %664 = vmatpush.msra.mxu0 %v508
          %665 = vmatpush.msra.mxu0 %v506
          %666 = vmatpush.msra.mxu0 %v504
          %667 = vmatpush.msra.mxu0 %v502
          %668 = vmatpush.msra.mxu0 %v500
          %669 = vmatmul.f32.gmra.mxu0 %v630
          %v670 = vpop.f32.mrf.mxu0
          %v671 = vadd.f32 %v592, %v670
          %672 = vmatmul.f32.gmra.mxu0 %v633
          %v673 = vpop.f32.mrf.mxu0
          %v674 = vadd.f32 %v597, %v673
          %675 = vmatmul.f32.gmra.mxu0 %v636
          %v676 = vpop.f32.mrf.mxu0
          %v677 = vadd.f32 %v602, %v676
          %678 = vmatmul.f32.gmra.mxu0 %v639
          %v679 = vpop.f32.mrf.mxu0
          %v680 = vadd.f32 %v607, %v679
          %681 = vmatmul.f32.gmra.mxu0 %v642
          %v682 = vpop.f32.mrf.mxu0
          %v683 = vadd.f32 %v612, %v682
          %684 = vmatmul.f32.gmra.mxu0 %v645
          %v685 = vpop.f32.mrf.mxu0
          %v686 = vadd.f32 %v617, %v685
          %687 = vmatmul.f32.gmra.mxu0 %v648
          %v688 = vpop.f32.mrf.mxu0
          %v689 = vadd.f32 %v622, %v688
          %690 = vmatmul.f32.gmra.mxu0 %v651
          %v691 = vpop.f32.mrf.mxu0
          %v692 = vadd.f32 %v627, %v691
          %693 = vdwg.mxu0
          %694 = vmatpush.msra.mxu0 0.0
          %695 = vmatpush.msra.mxu0 0.0
          %696 = vmatpush.msra.mxu0 0.0
          %697 = vmatpush.msra.mxu0 0.0
          %698 = vmatpush.msra.mxu0 0.0
          %699 = vmatpush.msra.mxu0 0.0
          %700 = vmatpush.msra.mxu0 0.0
          %701 = vmatpush.msra.mxu0 0.0
          %702 = vmatpush.msra.mxu0 %v515
          %703 = vmatpush.msra.mxu0 %v513
          %704 = vmatpush.msra.mxu0 %v511
          %705 = vmatpush.msra.mxu0 %v509
          %706 = vmatpush.msra.mxu0 %v507
          %707 = vmatpush.msra.mxu0 %v505
          %708 = vmatpush.msra.mxu0 %v503
          %709 = vmatpush.msra.mxu0 %v501
          %710 = vmatmul.f32.gmra.mxu0 %v630
          %v711 = vpop.f32.mrf.mxu0
          %v712 = vadd.f32 %v592, %v711
          %713 = vmatmul.f32.gmra.mxu0 %v633
          %v714 = vpop.f32.mrf.mxu0
          %v715 = vadd.f32 %v597, %v714
          %716 = vmatmul.f32.gmra.mxu0 %v636
          %v717 = vpop.f32.mrf.mxu0
          %v718 = vadd.f32 %v602, %v717
          %719 = vmatmul.f32.gmra.mxu0 %v639
          %v720 = vpop.f32.mrf.mxu0
          %v721 = vadd.f32 %v607, %v720
          %722 = vmatmul.f32.gmra.mxu0 %v642
          %v723 = vpop.f32.mrf.mxu0
          %v724 = vadd.f32 %v612, %v723
          %725 = vmatmul.f32.gmra.mxu0 %v645
          %v726 = vpop.f32.mrf.mxu0
          %v727 = vadd.f32 %v617, %v726
          %728 = vmatmul.f32.gmra.mxu0 %v648
          %v729 = vpop.f32.mrf.mxu0
          %v730 = vadd.f32 %v622, %v729
          %731 = vmatmul.f32.gmra.mxu0 %v651
          %v732 = vpop.f32.mrf.mxu0
          %v733 = vadd.f32 %v627, %v732
          %734 = vdwg.mxu0
          %v735 = vpack.c.bf16 %v712, %v671
          %v736 = vpack.c.bf16 %v715, %v674
          %v737 = vpack.c.bf16 %v718, %v677
          %v738 = vpack.c.bf16 %v721, %v680
          %v739 = vpack.c.bf16 %v724, %v683
          %v740 = vpack.c.bf16 %v727, %v686
          %v741 = vpack.c.bf16 %v730, %v689
          %v742 = vpack.c.bf16 %v733, %v692
          %743 = vst [vmem:[#allocation3] sm:$0xff] %v735
          %744 = vst [vmem:[#allocation3 + $0x8] sm:$0xff] %v736
          %745 = vst [vmem:[#allocation3 + $0x10] sm:$0xff] %v737
          %746 = vst [vmem:[#allocation3 + $0x18] sm:$0xff] %v738
          %747 = vst [vmem:[#allocation3 + $0x20] sm:$0xff] %v739
          %748 = vst [vmem:[#allocation3 + $0x28] sm:$0xff] %v740
          %749 = vst [vmem:[#allocation3 + $0x30] sm:$0xff] %v741
          %750 = vst [vmem:[#allocation3 + $0x38] sm:$0xff] %v742
        $region80: #{tpu_custom_call.1} parent=59 // pred_fallthru
          _
        %v751 = vld [vmem:[%s433] sm:$0xff]
        %v752 = vld [vmem:[%s433 + $0x8] sm:$0xff]
        %v753 = vld [vmem:[%s433 + $0x10] sm:$0xff]
        %v754 = vld [vmem:[%s433 + $0x18] sm:$0xff]
        %v755 = vld [vmem:[%s433 + $0x20] sm:$0xff]
        %v756 = vld [vmem:[%s433 + $0x28] sm:$0xff]
        %v757 = vld [vmem:[%s433 + $0x30] sm:$0xff]
        %v758 = vld [vmem:[%s433 + $0x38] sm:$0xff]
        %v759 = vld [vmem:[%s433 + $0x40] sm:$0xff]
        %v760 = vld [vmem:[%s433 + $0x48] sm:$0xff]
        %v761 = vld [vmem:[%s433 + $0x50] sm:$0xff]
        %v762 = vld [vmem:[%s433 + $0x58] sm:$0xff]
        %v763 = vld [vmem:[%s433 + $0x60] sm:$0xff]
        %v764 = vld [vmem:[%s433 + $0x68] sm:$0xff]
        %v765 = vld [vmem:[%s433 + $0x70] sm:$0xff]
        %v766 = vld [vmem:[%s433 + $0x78] sm:$0xff]
        %v767 = vld [vmem:[#allocation10] sm:$0xff]
        %v768 = vld [vmem:[%s3] sm:$0xff]
        %770 = vset.pattern.permute.xlu0 0
        %771 = vperm.xlu0 %770, %v768
        %v772 = vpop.permute.xlu0 %771
        %vm774 = vcmask 523264
        %v776 = vsel %vm774, %v767, 0
        %778 = vmatpush.msra.mxu0 0.0
        %779 = vmatpush.msra.mxu0 0.0
        %780 = vmatpush.msra.mxu0 0.0
        %781 = vmatpush.msra.mxu0 0.0
        %782 = vmatpush.msra.mxu0 0.0
        %783 = vmatpush.msra.mxu0 0.0
        %784 = vmatpush.msra.mxu0 0.0
        %785 = vmatpush.msra.mxu0 0.0
        %786 = vmatpush.msra.mxu0 %v765
        %787 = vmatpush.msra.mxu0 %v763
        %788 = vmatpush.msra.mxu0 %v761
        %789 = vmatpush.msra.mxu0 %v759
        %790 = vmatpush.msra.mxu0 %v757
        %791 = vmatpush.msra.mxu0 %v755
        %792 = vmatpush.msra.mxu0 %v753
        %793 = vmatpush.msra.mxu0 %v751
        %794 = vmatmul.f32.gmra.mxu0 %v776
        %v795 = vpop.f32.mrf.mxu0
        %v796 = vadd.f32 %v772, %v795
        %797 = vdwg.mxu0
        %798 = vmatpush.msra.mxu0 0.0
        %799 = vmatpush.msra.mxu0 0.0
        %800 = vmatpush.msra.mxu0 0.0
        %801 = vmatpush.msra.mxu0 0.0
        %802 = vmatpush.msra.mxu0 0.0
        %803 = vmatpush.msra.mxu0 0.0
        %804 = vmatpush.msra.mxu0 0.0
        %805 = vmatpush.msra.mxu0 0.0
        %806 = vmatpush.msra.mxu0 %v766
        %807 = vmatpush.msra.mxu0 %v764
        %808 = vmatpush.msra.mxu0 %v762
        %809 = vmatpush.msra.mxu0 %v760
        %810 = vmatpush.msra.mxu0 %v758
        %811 = vmatpush.msra.mxu0 %v756
        %812 = vmatpush.msra.mxu0 %v754
        %813 = vmatpush.msra.mxu0 %v752
        %814 = vmatmul.f32.gmra.mxu0 %v776
        %v815 = vpop.f32.mrf.mxu0
        %v816 = vadd.f32 %v772, %v815
        %817 = vdwg.mxu0
        %v818 = vld [vmem:[#allocation2] sm:$0xff]
        %v819 = vld [vmem:[#allocation2 + $0x8] sm:$0xff]
        %820 = vxpose.xlu0.b32.start [1/16] %v796, 128
        %821 = vxpose.xlu0.b32.cont [2/16] 0.0, 128
        %822 = vxpose.xlu0.b32.cont [3/16] 0.0, 128
        %823 = vxpose.xlu0.b32.cont [4/16] 0.0, 128
        %824 = vxpose.xlu0.b32.cont [5/16] 0.0, 128
        %825 = vxpose.xlu0.b32.cont [6/16] 0.0, 128
        %826 = vxpose.xlu0.b32.cont [7/16] 0.0, 128
        %827 = vxpose.xlu0.b32.cont [8/16] 0.0, 128
        %828 = vxpose.xlu0.b32.cont [9/16] 0.0, 128
        %829 = vxpose.xlu0.b32.cont [10/16] 0.0, 128
        %830 = vxpose.xlu0.b32.cont [11/16] 0.0, 128
        %831 = vxpose.xlu0.b32.cont [12/16] 0.0, 128
        %832 = vxpose.xlu0.b32.cont [13/16] 0.0, 128
        %833 = vxpose.xlu0.b32.cont [14/16] 0.0, 128
        %834 = vxpose.xlu0.b32.cont [15/16] 0.0, 128
        %835 = vxpose.xlu0.b32.end [16/16] 0.0, 128
        %v836 = vpop.trf.xlu0
        %v837 = vpop.trf.xlu0
        %v838 = vpop.trf.xlu0
        %v839 = vpop.trf.xlu0
        %v840 = vpop.trf.xlu0
        %v841 = vpop.trf.xlu0
        %v842 = vpop.trf.xlu0
        %v843 = vpop.trf.xlu0
        %v844 = vpop.trf.xlu0
        %v845 = vpop.trf.xlu0
        %v846 = vpop.trf.xlu0
        %v847 = vpop.trf.xlu0
        %v848 = vpop.trf.xlu0
        %v849 = vpop.trf.xlu0
        %v850 = vpop.trf.xlu0
        %v851 = vpop.trf.xlu0
        %852 = vxpose.xlu0.b32.start [1/16] %v816, 128
        %853 = vxpose.xlu0.b32.cont [2/16] 0.0, 128
        %854 = vxpose.xlu0.b32.cont [3/16] 0.0, 128
        %855 = vxpose.xlu0.b32.cont [4/16] 0.0, 128
        %856 = vxpose.xlu0.b32.cont [5/16] 0.0, 128
        %857 = vxpose.xlu0.b32.cont [6/16] 0.0, 128
        %858 = vxpose.xlu0.b32.cont [7/16] 0.0, 128
        %859 = vxpose.xlu0.b32.cont [8/16] 0.0, 128
        %860 = vxpose.xlu0.b32.cont [9/16] 0.0, 128
        %861 = vxpose.xlu0.b32.cont [10/16] 0.0, 128
        %862 = vxpose.xlu0.b32.cont [11/16] 0.0, 128
        %863 = vxpose.xlu0.b32.cont [12/16] 0.0, 128
        %864 = vxpose.xlu0.b32.cont [13/16] 0.0, 128
        %865 = vxpose.xlu0.b32.cont [14/16] 0.0, 128
        %866 = vxpose.xlu0.b32.cont [15/16] 0.0, 128
        %867 = vxpose.xlu0.b32.end [16/16] 0.0, 128
        %v868 = vpop.trf.xlu0
        %v869 = vpop.trf.xlu0
        %v870 = vpop.trf.xlu0
        %v871 = vpop.trf.xlu0
        %v872 = vpop.trf.xlu0
        %v873 = vpop.trf.xlu0
        %v874 = vpop.trf.xlu0
        %v875 = vpop.trf.xlu0
        %v876 = vpop.trf.xlu0
        %v877 = vpop.trf.xlu0
        %v878 = vpop.trf.xlu0
        %v879 = vpop.trf.xlu0
        %v880 = vpop.trf.xlu0
        %v881 = vpop.trf.xlu0
        %v882 = vpop.trf.xlu0
        %v883 = vpop.trf.xlu0
        %vm884 = vcmask 64512
        %v886 = vsel %vm884, %v836, 0
        %v889 = vsel %vm884, %v837, 0
        %v892 = vsel %vm884, %v838, 0
        %v895 = vsel %vm884, %v839, 0
        %v898 = vsel %vm884, %v840, 0
        %v901 = vsel %vm884, %v841, 0
        %v904 = vsel %vm884, %v842, 0
        %v907 = vsel %vm884, %v843, 0
        %v910 = vsel %vm884, %v844, 0
        %v913 = vsel %vm884, %v845, 0
        %v916 = vsel %vm884, %v846, 0
        %v919 = vsel %vm884, %v847, 0
        %v922 = vsel %vm884, %v848, 0
        %v925 = vsel %vm884, %v849, 0
        %v928 = vsel %vm884, %v850, 0
        %v931 = vsel %vm884, %v851, 0
        %v934 = vsel %vm884, %v868, 0
        %v937 = vsel %vm884, %v869, 0
        %v940 = vsel %vm884, %v870, 0
        %v943 = vsel %vm884, %v871, 0
        %v946 = vsel %vm884, %v872, 0
        %v949 = vsel %vm884, %v873, 0
        %v952 = vsel %vm884, %v874, 0
        %v955 = vsel %vm884, %v875, 0
        %v958 = vsel %vm884, %v876, 0
        %v961 = vsel %vm884, %v877, 0
        %v964 = vsel %vm884, %v878, 0
        %v967 = vsel %vm884, %v879, 0
        %v970 = vsel %vm884, %v880, 0
        %v973 = vsel %vm884, %v881, 0
        %v976 = vsel %vm884, %v882, 0
        %v979 = vsel %vm884, %v883, 0
        %981 = vmatpush.msra.mxu0 0.0
        %982 = vmatpush.msra.mxu0 0.0
        %983 = vmatpush.msra.mxu0 0.0
        %984 = vmatpush.msra.mxu0 0.0
        %985 = vmatpush.msra.mxu0 0.0
        %986 = vmatpush.msra.mxu0 0.0
        %987 = vmatpush.msra.mxu0 0.0
        %988 = vmatpush.msra.mxu0 0.0
        %989 = vmatpush.msra.mxu0 0.0
        %990 = vmatpush.msra.mxu0 0.0
        %991 = vmatpush.msra.mxu0 0.0
        %992 = vmatpush.msra.mxu0 0.0
        %993 = vmatpush.msra.mxu0 0.0
        %994 = vmatpush.msra.mxu0 0.0
        %995 = vmatpush.msra.mxu0 0.0
        %996 = vmatpush.msra.mxu0 %v818
        %997 = vmatmul.f32.gmra.mxu0 %v886
        %v998 = vpop.f32.mrf.mxu0
        %v999 = vadd.f32 0.0, %v998
        %1000 = vmatmul.f32.gmra.mxu0 %v889
        %v1001 = vpop.f32.mrf.mxu0
        %v1002 = vadd.f32 0.0, %v1001
        %1003 = vmatmul.f32.gmra.mxu0 %v892
        %v1004 = vpop.f32.mrf.mxu0
        %v1005 = vadd.f32 0.0, %v1004
        %1006 = vmatmul.f32.gmra.mxu0 %v895
        %v1007 = vpop.f32.mrf.mxu0
        %v1008 = vadd.f32 0.0, %v1007
        %1009 = vmatmul.f32.gmra.mxu0 %v898
        %v1010 = vpop.f32.mrf.mxu0
        %v1011 = vadd.f32 0.0, %v1010
        %1012 = vmatmul.f32.gmra.mxu0 %v901
        %v1013 = vpop.f32.mrf.mxu0
        %v1014 = vadd.f32 0.0, %v1013
        %1015 = vmatmul.f32.gmra.mxu0 %v904
        %v1016 = vpop.f32.mrf.mxu0
        %v1017 = vadd.f32 0.0, %v1016
        %1018 = vmatmul.f32.gmra.mxu0 %v907
        %v1019 = vpop.f32.mrf.mxu0
        %v1020 = vadd.f32 0.0, %v1019
        %1021 = vmatmul.f32.gmra.mxu0 %v910
        %v1022 = vpop.f32.mrf.mxu0
        %v1023 = vadd.f32 0.0, %v1022
        %1024 = vmatmul.f32.gmra.mxu0 %v913
        %v1025 = vpop.f32.mrf.mxu0
        %v1026 = vadd.f32 0.0, %v1025
        %1027 = vmatmul.f32.gmra.mxu0 %v916
        %v1028 = vpop.f32.mrf.mxu0
        %v1029 = vadd.f32 0.0, %v1028
        %1030 = vmatmul.f32.gmra.mxu0 %v919
        %v1031 = vpop.f32.mrf.mxu0
        %v1032 = vadd.f32 0.0, %v1031
        %1033 = vmatmul.f32.gmra.mxu0 %v922
        %v1034 = vpop.f32.mrf.mxu0
        %v1035 = vadd.f32 0.0, %v1034
        %1036 = vmatmul.f32.gmra.mxu0 %v925
        %v1037 = vpop.f32.mrf.mxu0
        %v1038 = vadd.f32 0.0, %v1037
        %1039 = vmatmul.f32.gmra.mxu0 %v928
        %v1040 = vpop.f32.mrf.mxu0
        %v1041 = vadd.f32 0.0, %v1040
        %1042 = vmatmul.f32.gmra.mxu0 %v931
        %v1043 = vpop.f32.mrf.mxu0
        %v1044 = vadd.f32 0.0, %v1043
        %1045 = vmatmul.f32.gmra.mxu0 %v934
        %v1046 = vpop.f32.mrf.mxu0
        %v1047 = vadd.f32 0.0, %v1046
        %1048 = vmatmul.f32.gmra.mxu0 %v937
        %v1049 = vpop.f32.mrf.mxu0
        %v1050 = vadd.f32 0.0, %v1049
        %1051 = vmatmul.f32.gmra.mxu0 %v940
        %v1052 = vpop.f32.mrf.mxu0
        %v1053 = vadd.f32 0.0, %v1052
        %1054 = vmatmul.f32.gmra.mxu0 %v943
        %v1055 = vpop.f32.mrf.mxu0
        %v1056 = vadd.f32 0.0, %v1055
        %1057 = vmatmul.f32.gmra.mxu0 %v946
        %v1058 = vpop.f32.mrf.mxu0
        %v1059 = vadd.f32 0.0, %v1058
        %1060 = vmatmul.f32.gmra.mxu0 %v949
        %v1061 = vpop.f32.mrf.mxu0
        %v1062 = vadd.f32 0.0, %v1061
        %1063 = vmatmul.f32.gmra.mxu0 %v952
        %v1064 = vpop.f32.mrf.mxu0
        %v1065 = vadd.f32 0.0, %v1064
        %1066 = vmatmul.f32.gmra.mxu0 %v955
        %v1067 = vpop.f32.mrf.mxu0
        %v1068 = vadd.f32 0.0, %v1067
        %1069 = vmatmul.f32.gmra.mxu0 %v958
        %v1070 = vpop.f32.mrf.mxu0
        %v1071 = vadd.f32 0.0, %v1070
        %1072 = vmatmul.f32.gmra.mxu0 %v961
        %v1073 = vpop.f32.mrf.mxu0
        %v1074 = vadd.f32 0.0, %v1073
        %1075 = vmatmul.f32.gmra.mxu0 %v964
        %v1076 = vpop.f32.mrf.mxu0
        %v1077 = vadd.f32 0.0, %v1076
        %1078 = vmatmul.f32.gmra.mxu0 %v967
        %v1079 = vpop.f32.mrf.mxu0
        %v1080 = vadd.f32 0.0, %v1079
        %1081 = vmatmul.f32.gmra.mxu0 %v970
        %v1082 = vpop.f32.mrf.mxu0
        %v1083 = vadd.f32 0.0, %v1082
        %1084 = vmatmul.f32.gmra.mxu0 %v973
        %v1085 = vpop.f32.mrf.mxu0
        %v1086 = vadd.f32 0.0, %v1085
        %1087 = vmatmul.f32.gmra.mxu0 %v976
        %v1088 = vpop.f32.mrf.mxu0
        %v1089 = vadd.f32 0.0, %v1088
        %1090 = vmatmul.f32.gmra.mxu0 %v979
        %v1091 = vpop.f32.mrf.mxu0
        %v1092 = vadd.f32 0.0, %v1091
        %1093 = vdwg.mxu0
        %1094 = vmatpush.msra.mxu0 0.0
        %1095 = vmatpush.msra.mxu0 0.0
        %1096 = vmatpush.msra.mxu0 0.0
        %1097 = vmatpush.msra.mxu0 0.0
        %1098 = vmatpush.msra.mxu0 0.0
        %1099 = vmatpush.msra.mxu0 0.0
        %1100 = vmatpush.msra.mxu0 0.0
        %1101 = vmatpush.msra.mxu0 0.0
        %1102 = vmatpush.msra.mxu0 0.0
        %1103 = vmatpush.msra.mxu0 0.0
        %1104 = vmatpush.msra.mxu0 0.0
        %1105 = vmatpush.msra.mxu0 0.0
        %1106 = vmatpush.msra.mxu0 0.0
        %1107 = vmatpush.msra.mxu0 0.0
        %1108 = vmatpush.msra.mxu0 0.0
        %1109 = vmatpush.msra.mxu0 %v819
        %1110 = vmatmul.f32.gmra.mxu0 %v886
        %v1111 = vpop.f32.mrf.mxu0
        %v1112 = vadd.f32 0.0, %v1111
        %1113 = vmatmul.f32.gmra.mxu0 %v889
        %v1114 = vpop.f32.mrf.mxu0
        %v1115 = vadd.f32 0.0, %v1114
        %1116 = vmatmul.f32.gmra.mxu0 %v892
        %v1117 = vpop.f32.mrf.mxu0
        %v1118 = vadd.f32 0.0, %v1117
        %1119 = vmatmul.f32.gmra.mxu0 %v895
        %v1120 = vpop.f32.mrf.mxu0
        %v1121 = vadd.f32 0.0, %v1120
        %1122 = vmatmul.f32.gmra.mxu0 %v898
        %v1123 = vpop.f32.mrf.mxu0
        %v1124 = vadd.f32 0.0, %v1123
        %1125 = vmatmul.f32.gmra.mxu0 %v901
        %v1126 = vpop.f32.mrf.mxu0
        %v1127 = vadd.f32 0.0, %v1126
        %1128 = vmatmul.f32.gmra.mxu0 %v904
        %v1129 = vpop.f32.mrf.mxu0
        %v1130 = vadd.f32 0.0, %v1129
        %1131 = vmatmul.f32.gmra.mxu0 %v907
        %v1132 = vpop.f32.mrf.mxu0
        %v1133 = vadd.f32 0.0, %v1132
        %1134 = vmatmul.f32.gmra.mxu0 %v910
        %v1135 = vpop.f32.mrf.mxu0
        %v1136 = vadd.f32 0.0, %v1135
        %1137 = vmatmul.f32.gmra.mxu0 %v913
        %v1138 = vpop.f32.mrf.mxu0
        %v1139 = vadd.f32 0.0, %v1138
        %1140 = vmatmul.f32.gmra.mxu0 %v916
        %v1141 = vpop.f32.mrf.mxu0
        %v1142 = vadd.f32 0.0, %v1141
        %1143 = vmatmul.f32.gmra.mxu0 %v919
        %v1144 = vpop.f32.mrf.mxu0
        %v1145 = vadd.f32 0.0, %v1144
        %1146 = vmatmul.f32.gmra.mxu0 %v922
        %v1147 = vpop.f32.mrf.mxu0
        %v1148 = vadd.f32 0.0, %v1147
        %1149 = vmatmul.f32.gmra.mxu0 %v925
        %v1150 = vpop.f32.mrf.mxu0
        %v1151 = vadd.f32 0.0, %v1150
        %1152 = vmatmul.f32.gmra.mxu0 %v928
        %v1153 = vpop.f32.mrf.mxu0
        %v1154 = vadd.f32 0.0, %v1153
        %1155 = vmatmul.f32.gmra.mxu0 %v931
        %v1156 = vpop.f32.mrf.mxu0
        %v1157 = vadd.f32 0.0, %v1156
        %1158 = vmatmul.f32.gmra.mxu0 %v934
        %v1159 = vpop.f32.mrf.mxu0
        %v1160 = vadd.f32 0.0, %v1159
        %1161 = vmatmul.f32.gmra.mxu0 %v937
        %v1162 = vpop.f32.mrf.mxu0
        %v1163 = vadd.f32 0.0, %v1162
        %1164 = vmatmul.f32.gmra.mxu0 %v940
        %v1165 = vpop.f32.mrf.mxu0
        %v1166 = vadd.f32 0.0, %v1165
        %1167 = vmatmul.f32.gmra.mxu0 %v943
        %v1168 = vpop.f32.mrf.mxu0
        %v1169 = vadd.f32 0.0, %v1168
        %1170 = vmatmul.f32.gmra.mxu0 %v946
        %v1171 = vpop.f32.mrf.mxu0
        %v1172 = vadd.f32 0.0, %v1171
        %1173 = vmatmul.f32.gmra.mxu0 %v949
        %v1174 = vpop.f32.mrf.mxu0
        %v1175 = vadd.f32 0.0, %v1174
        %1176 = vmatmul.f32.gmra.mxu0 %v952
        %v1177 = vpop.f32.mrf.mxu0
        %v1178 = vadd.f32 0.0, %v1177
        %1179 = vmatmul.f32.gmra.mxu0 %v955
        %v1180 = vpop.f32.mrf.mxu0
        %v1181 = vadd.f32 0.0, %v1180
        %1182 = vmatmul.f32.gmra.mxu0 %v958
        %v1183 = vpop.f32.mrf.mxu0
        %v1184 = vadd.f32 0.0, %v1183
        %1185 = vmatmul.f32.gmra.mxu0 %v961
        %v1186 = vpop.f32.mrf.mxu0
        %v1187 = vadd.f32 0.0, %v1186
        %1188 = vmatmul.f32.gmra.mxu0 %v964
        %v1189 = vpop.f32.mrf.mxu0
        %v1190 = vadd.f32 0.0, %v1189
        %1191 = vmatmul.f32.gmra.mxu0 %v967
        %v1192 = vpop.f32.mrf.mxu0
        %v1193 = vadd.f32 0.0, %v1192
        %1194 = vmatmul.f32.gmra.mxu0 %v970
        %v1195 = vpop.f32.mrf.mxu0
        %v1196 = vadd.f32 0.0, %v1195
        %1197 = vmatmul.f32.gmra.mxu0 %v973
        %v1198 = vpop.f32.mrf.mxu0
        %v1199 = vadd.f32 0.0, %v1198
        %1200 = vmatmul.f32.gmra.mxu0 %v976
        %v1201 = vpop.f32.mrf.mxu0
        %v1202 = vadd.f32 0.0, %v1201
        %1203 = vmatmul.f32.gmra.mxu0 %v979
        %v1204 = vpop.f32.mrf.mxu0
        %v1205 = vadd.f32 0.0, %v1204
        %1206 = vdwg.mxu0
        %v1207 = vmax.f32 %v999, %v1112
        %1208 = vmax.xlane.f32.xlu0 %v1207
        %v1209 = vpop.xlane.xlu0 %1208
        %v1210 = vmax.f32 %v1002, %v1115
        %1211 = vmax.xlane.f32.xlu0 %v1210
        %v1212 = vpop.xlane.xlu0 %1211
        %v1213 = vmax.f32 %v1005, %v1118
        %1214 = vmax.xlane.f32.xlu0 %v1213
        %v1215 = vpop.xlane.xlu0 %1214
        %v1216 = vmax.f32 %v1008, %v1121
        %1217 = vmax.xlane.f32.xlu0 %v1216
        %v1218 = vpop.xlane.xlu0 %1217
        %v1219 = vmax.f32 %v1011, %v1124
        %1220 = vmax.xlane.f32.xlu0 %v1219
        %v1221 = vpop.xlane.xlu0 %1220
        %v1222 = vmax.f32 %v1014, %v1127
        %1223 = vmax.xlane.f32.xlu0 %v1222
        %v1224 = vpop.xlane.xlu0 %1223
        %v1225 = vmax.f32 %v1017, %v1130
        %1226 = vmax.xlane.f32.xlu0 %v1225
        %v1227 = vpop.xlane.xlu0 %1226
        %v1228 = vmax.f32 %v1020, %v1133
        %1229 = vmax.xlane.f32.xlu0 %v1228
        %v1230 = vpop.xlane.xlu0 %1229
        %v1231 = vmax.f32 %v1023, %v1136
        %1232 = vmax.xlane.f32.xlu0 %v1231
        %v1233 = vpop.xlane.xlu0 %1232
        %v1234 = vmax.f32 %v1026, %v1139
        %1235 = vmax.xlane.f32.xlu0 %v1234
        %v1236 = vpop.xlane.xlu0 %1235
        %v1237 = vmax.f32 %v1029, %v1142
        %1238 = vmax.xlane.f32.xlu0 %v1237
        %v1239 = vpop.xlane.xlu0 %1238
        %v1240 = vmax.f32 %v1032, %v1145
        %1241 = vmax.xlane.f32.xlu0 %v1240
        %v1242 = vpop.xlane.xlu0 %1241
        %v1243 = vmax.f32 %v1035, %v1148
        %1244 = vmax.xlane.f32.xlu0 %v1243
        %v1245 = vpop.xlane.xlu0 %1244
        %v1246 = vmax.f32 %v1038, %v1151
        %1247 = vmax.xlane.f32.xlu0 %v1246
        %v1248 = vpop.xlane.xlu0 %1247
        %v1249 = vmax.f32 %v1041, %v1154
        %1250 = vmax.xlane.f32.xlu0 %v1249
        %v1251 = vpop.xlane.xlu0 %1250
        %v1252 = vmax.f32 %v1044, %v1157
        %1253 = vmax.xlane.f32.xlu0 %v1252
        %v1254 = vpop.xlane.xlu0 %1253
        %v1255 = vmax.f32 %v1047, %v1160
        %1256 = vmax.xlane.f32.xlu0 %v1255
        %v1257 = vpop.xlane.xlu0 %1256
        %v1258 = vmax.f32 %v1050, %v1163
        %1259 = vmax.xlane.f32.xlu0 %v1258
        %v1260 = vpop.xlane.xlu0 %1259
        %v1261 = vmax.f32 %v1053, %v1166
        %1262 = vmax.xlane.f32.xlu0 %v1261
        %v1263 = vpop.xlane.xlu0 %1262
        %v1264 = vmax.f32 %v1056, %v1169
        %1265 = vmax.xlane.f32.xlu0 %v1264
        %v1266 = vpop.xlane.xlu0 %1265
        %v1267 = vmax.f32 %v1059, %v1172
        %1268 = vmax.xlane.f32.xlu0 %v1267
        %v1269 = vpop.xlane.xlu0 %1268
        %v1270 = vmax.f32 %v1062, %v1175
        %1271 = vmax.xlane.f32.xlu0 %v1270
        %v1272 = vpop.xlane.xlu0 %1271
        %v1273 = vmax.f32 %v1065, %v1178
        %1274 = vmax.xlane.f32.xlu0 %v1273
        %v1275 = vpop.xlane.xlu0 %1274
        %v1276 = vmax.f32 %v1068, %v1181
        %1277 = vmax.xlane.f32.xlu0 %v1276
        %v1278 = vpop.xlane.xlu0 %1277
        %v1279 = vmax.f32 %v1071, %v1184
        %1280 = vmax.xlane.f32.xlu0 %v1279
        %v1281 = vpop.xlane.xlu0 %1280
        %v1282 = vmax.f32 %v1074, %v1187
        %1283 = vmax.xlane.f32.xlu0 %v1282
        %v1284 = vpop.xlane.xlu0 %1283
        %v1285 = vmax.f32 %v1077, %v1190
        %1286 = vmax.xlane.f32.xlu0 %v1285
        %v1287 = vpop.xlane.xlu0 %1286
        %v1288 = vmax.f32 %v1080, %v1193
        %1289 = vmax.xlane.f32.xlu0 %v1288
        %v1290 = vpop.xlane.xlu0 %1289
        %v1291 = vmax.f32 %v1083, %v1196
        %1292 = vmax.xlane.f32.xlu0 %v1291
        %v1293 = vpop.xlane.xlu0 %1292
        %v1294 = vmax.f32 %v1086, %v1199
        %1295 = vmax.xlane.f32.xlu0 %v1294
        %v1296 = vpop.xlane.xlu0 %1295
        %v1297 = vmax.f32 %v1089, %v1202
        %1298 = vmax.xlane.f32.xlu0 %v1297
        %v1299 = vpop.xlane.xlu0 %1298
        %v1300 = vmax.f32 %v1092, %v1205
        %1301 = vmax.xlane.f32.xlu0 %v1300
        %v1302 = vpop.xlane.xlu0 %1301
        %v1303 = vsub.f32 %v999, %v1209
        %v1304 = vsub.f32 %v1112, %v1209
        %v1305 = vsub.f32 %v1002, %v1212
        %v1306 = vsub.f32 %v1115, %v1212
        %v1307 = vsub.f32 %v1005, %v1215
        %v1308 = vsub.f32 %v1118, %v1215
        %v1309 = vsub.f32 %v1008, %v1218
        %v1310 = vsub.f32 %v1121, %v1218
        %v1311 = vsub.f32 %v1011, %v1221
        %v1312 = vsub.f32 %v1124, %v1221
        %v1313 = vsub.f32 %v1014, %v1224
        %v1314 = vsub.f32 %v1127, %v1224
        %v1315 = vsub.f32 %v1017, %v1227
        %v1316 = vsub.f32 %v1130, %v1227
        %v1317 = vsub.f32 %v1020, %v1230
        %v1318 = vsub.f32 %v1133, %v1230
        %v1319 = vsub.f32 %v1023, %v1233
        %v1320 = vsub.f32 %v1136, %v1233
        %v1321 = vsub.f32 %v1026, %v1236
        %v1322 = vsub.f32 %v1139, %v1236
        %v1323 = vsub.f32 %v1029, %v1239
        %v1324 = vsub.f32 %v1142, %v1239
        %v1325 = vsub.f32 %v1032, %v1242
        %v1326 = vsub.f32 %v1145, %v1242
        %v1327 = vsub.f32 %v1035, %v1245
        %v1328 = vsub.f32 %v1148, %v1245
        %v1329 = vsub.f32 %v1038, %v1248
        %v1330 = vsub.f32 %v1151, %v1248
        %v1331 = vsub.f32 %v1041, %v1251
        %v1332 = vsub.f32 %v1154, %v1251
        %v1333 = vsub.f32 %v1044, %v1254
        %v1334 = vsub.f32 %v1157, %v1254
        %v1335 = vsub.f32 %v1047, %v1257
        %v1336 = vsub.f32 %v1160, %v1257
        %v1337 = vsub.f32 %v1050, %v1260
        %v1338 = vsub.f32 %v1163, %v1260
        %v1339 = vsub.f32 %v1053, %v1263
        %v1340 = vsub.f32 %v1166, %v1263
        %v1341 = vsub.f32 %v1056, %v1266
        %v1342 = vsub.f32 %v1169, %v1266
        %v1343 = vsub.f32 %v1059, %v1269
        %v1344 = vsub.f32 %v1172, %v1269
        %v1345 = vsub.f32 %v1062, %v1272
        %v1346 = vsub.f32 %v1175, %v1272
        %v1347 = vsub.f32 %v1065, %v1275
        %v1348 = vsub.f32 %v1178, %v1275
        %v1349 = vsub.f32 %v1068, %v1278
        %v1350 = vsub.f32 %v1181, %v1278
        %v1351 = vsub.f32 %v1071, %v1281
        %v1352 = vsub.f32 %v1184, %v1281
        %v1353 = vsub.f32 %v1074, %v1284
        %v1354 = vsub.f32 %v1187, %v1284
        %v1355 = vsub.f32 %v1077, %v1287
        %v1356 = vsub.f32 %v1190, %v1287
        %v1357 = vsub.f32 %v1080, %v1290
        %v1358 = vsub.f32 %v1193, %v1290
        %v1359 = vsub.f32 %v1083, %v1293
        %v1360 = vsub.f32 %v1196, %v1293
        %v1361 = vsub.f32 %v1086, %v1296
        %v1362 = vsub.f32 %v1199, %v1296
        %v1363 = vsub.f32 %v1089, %v1299
        %v1364 = vsub.f32 %v1202, %v1299
        %v1365 = vsub.f32 %v1092, %v1302
        %v1366 = vsub.f32 %v1205, %v1302
        %v1367 = vmul.f32 %v1303, 1.442695
        %v1368 = vpow.pop %v1367
        %v1369 = vmul.f32 %v1304, 1.442695
        %v1370 = vpow.pop %v1369
        %v1371 = vmul.f32 %v1305, 1.442695
        %v1372 = vpow.pop %v1371
        %v1373 = vmul.f32 %v1306, 1.442695
        %v1374 = vpow.pop %v1373
        %v1375 = vmul.f32 %v1307, 1.442695
        %v1376 = vpow.pop %v1375
        %v1377 = vmul.f32 %v1308, 1.442695
        %v1378 = vpow.pop %v1377
        %v1379 = vmul.f32 %v1309, 1.442695
        %v1380 = vpow.pop %v1379
        %v1381 = vmul.f32 %v1310, 1.442695
        %v1382 = vpow.pop %v1381
        %v1383 = vmul.f32 %v1311, 1.442695
        %v1384 = vpow.pop %v1383
        %v1385 = vmul.f32 %v1312, 1.442695
        %v1386 = vpow.pop %v1385
        %v1387 = vmul.f32 %v1313, 1.442695
        %v1388 = vpow.pop %v1387
        %v1389 = vmul.f32 %v1314, 1.442695
        %v1390 = vpow.pop %v1389
        %v1391 = vmul.f32 %v1315, 1.442695
        %v1392 = vpow.pop %v1391
        %v1393 = vmul.f32 %v1316, 1.442695
        %v1394 = vpow.pop %v1393
        %v1395 = vmul.f32 %v1317, 1.442695
        %v1396 = vpow.pop %v1395
        %v1397 = vmul.f32 %v1318, 1.442695
        %v1398 = vpow.pop %v1397
        %v1399 = vmul.f32 %v1319, 1.442695
        %v1400 = vpow.pop %v1399
        %v1401 = vmul.f32 %v1320, 1.442695
        %v1402 = vpow.pop %v1401
        %v1403 = vmul.f32 %v1321, 1.442695
        %v1404 = vpow.pop %v1403
        %v1405 = vmul.f32 %v1322, 1.442695
        %v1406 = vpow.pop %v1405
        %v1407 = vmul.f32 %v1323, 1.442695
        %v1408 = vpow.pop %v1407
        %v1409 = vmul.f32 %v1324, 1.442695
        %v1410 = vpow.pop %v1409
        %v1411 = vmul.f32 %v1325, 1.442695
        %v1412 = vpow.pop %v1411
        %v1413 = vmul.f32 %v1326, 1.442695
        %v1414 = vpow.pop %v1413
        %v1415 = vmul.f32 %v1327, 1.442695
        %v1416 = vpow.pop %v1415
        %v1417 = vmul.f32 %v1328, 1.442695
        %v1418 = vpow.pop %v1417
        %v1419 = vmul.f32 %v1329, 1.442695
        %v1420 = vpow.pop %v1419
        %v1421 = vmul.f32 %v1330, 1.442695
        %v1422 = vpow.pop %v1421
        %v1423 = vmul.f32 %v1331, 1.442695
        %v1424 = vpow.pop %v1423
        %v1425 = vmul.f32 %v1332, 1.442695
        %v1426 = vpow.pop %v1425
        %v1427 = vmul.f32 %v1333, 1.442695
        %v1428 = vpow.pop %v1427
        %v1429 = vmul.f32 %v1334, 1.442695
        %v1430 = vpow.pop %v1429
        %v1431 = vmul.f32 %v1335, 1.442695
        %v1432 = vpow.pop %v1431
        %v1433 = vmul.f32 %v1336, 1.442695
        %v1434 = vpow.pop %v1433
        %v1435 = vmul.f32 %v1337, 1.442695
        %v1436 = vpow.pop %v1435
        %v1437 = vmul.f32 %v1338, 1.442695
        %v1438 = vpow.pop %v1437
        %v1439 = vmul.f32 %v1339, 1.442695
        %v1440 = vpow.pop %v1439
        %v1441 = vmul.f32 %v1340, 1.442695
        %v1442 = vpow.pop %v1441
        %v1443 = vmul.f32 %v1341, 1.442695
        %v1444 = vpow.pop %v1443
        %v1445 = vmul.f32 %v1342, 1.442695
        %v1446 = vpow.pop %v1445
        %v1447 = vmul.f32 %v1343, 1.442695
        %v1448 = vpow.pop %v1447
        %v1449 = vmul.f32 %v1344, 1.442695
        %v1450 = vpow.pop %v1449
        %v1451 = vmul.f32 %v1345, 1.442695
        %v1452 = vpow.pop %v1451
        %v1453 = vmul.f32 %v1346, 1.442695
        %v1454 = vpow.pop %v1453
        %v1455 = vmul.f32 %v1347, 1.442695
        %v1456 = vpow.pop %v1455
        %v1457 = vmul.f32 %v1348, 1.442695
        %v1458 = vpow.pop %v1457
        %v1459 = vmul.f32 %v1349, 1.442695
        %v1460 = vpow.pop %v1459
        %v1461 = vmul.f32 %v1350, 1.442695
        %v1462 = vpow.pop %v1461
        %v1463 = vmul.f32 %v1351, 1.442695
        %v1464 = vpow.pop %v1463
        %v1465 = vmul.f32 %v1352, 1.442695
        %v1466 = vpow.pop %v1465
        %v1467 = vmul.f32 %v1353, 1.442695
        %v1468 = vpow.pop %v1467
        %v1469 = vmul.f32 %v1354, 1.442695
        %v1470 = vpow.pop %v1469
        %v1471 = vmul.f32 %v1355, 1.442695
        %v1472 = vpow.pop %v1471
        %v1473 = vmul.f32 %v1356, 1.442695
        %v1474 = vpow.pop %v1473
        %v1475 = vmul.f32 %v1357, 1.442695
        %v1476 = vpow.pop %v1475
        %v1477 = vmul.f32 %v1358, 1.442695
        %v1478 = vpow.pop %v1477
        %v1479 = vmul.f32 %v1359, 1.442695
        %v1480 = vpow.pop %v1479
        %v1481 = vmul.f32 %v1360, 1.442695
        %v1482 = vpow.pop %v1481
        %v1483 = vmul.f32 %v1361, 1.442695
        %v1484 = vpow.pop %v1483
        %v1485 = vmul.f32 %v1362, 1.442695
        %v1486 = vpow.pop %v1485
        %v1487 = vmul.f32 %v1363, 1.442695
        %v1488 = vpow.pop %v1487
        %v1489 = vmul.f32 %v1364, 1.442695
        %v1490 = vpow.pop %v1489
        %v1491 = vmul.f32 %v1365, 1.442695
        %v1492 = vpow.pop %v1491
        %v1493 = vmul.f32 %v1366, 1.442695
        %v1494 = vpow.pop %v1493
        %v1495 = vadd.f32 %v1368, %v1370
        %1496 = vadd.xlane.f32.xlu0 %v1495
        %v1497 = vpop.xlane.xlu0 %1496
        %v1498 = vadd.f32 %v1372, %v1374
        %1499 = vadd.xlane.f32.xlu0 %v1498
        %v1500 = vpop.xlane.xlu0 %1499
        %v1501 = vadd.f32 %v1376, %v1378
        %1502 = vadd.xlane.f32.xlu0 %v1501
        %v1503 = vpop.xlane.xlu0 %1502
        %v1504 = vadd.f32 %v1380, %v1382
        %1505 = vadd.xlane.f32.xlu0 %v1504
        %v1506 = vpop.xlane.xlu0 %1505
        %v1507 = vadd.f32 %v1384, %v1386
        %1508 = vadd.xlane.f32.xlu0 %v1507
        %v1509 = vpop.xlane.xlu0 %1508
        %v1510 = vadd.f32 %v1388, %v1390
        %1511 = vadd.xlane.f32.xlu0 %v1510
        %v1512 = vpop.xlane.xlu0 %1511
        %v1513 = vadd.f32 %v1392, %v1394
        %1514 = vadd.xlane.f32.xlu0 %v1513
        %v1515 = vpop.xlane.xlu0 %1514
        %v1516 = vadd.f32 %v1396, %v1398
        %1517 = vadd.xlane.f32.xlu0 %v1516
        %v1518 = vpop.xlane.xlu0 %1517
        %v1519 = vadd.f32 %v1400, %v1402
        %1520 = vadd.xlane.f32.xlu0 %v1519
        %v1521 = vpop.xlane.xlu0 %1520
        %v1522 = vadd.f32 %v1404, %v1406
        %1523 = vadd.xlane.f32.xlu0 %v1522
        %v1524 = vpop.xlane.xlu0 %1523
        %v1525 = vadd.f32 %v1408, %v1410
        %1526 = vadd.xlane.f32.xlu0 %v1525
        %v1527 = vpop.xlane.xlu0 %1526
        %v1528 = vadd.f32 %v1412, %v1414
        %1529 = vadd.xlane.f32.xlu0 %v1528
        %v1530 = vpop.xlane.xlu0 %1529
        %v1531 = vadd.f32 %v1416, %v1418
        %1532 = vadd.xlane.f32.xlu0 %v1531
        %v1533 = vpop.xlane.xlu0 %1532
        %v1534 = vadd.f32 %v1420, %v1422
        %1535 = vadd.xlane.f32.xlu0 %v1534
        %v1536 = vpop.xlane.xlu0 %1535
        %v1537 = vadd.f32 %v1424, %v1426
        %1538 = vadd.xlane.f32.xlu0 %v1537
        %v1539 = vpop.xlane.xlu0 %1538
        %v1540 = vadd.f32 %v1428, %v1430
        %1541 = vadd.xlane.f32.xlu0 %v1540
        %v1542 = vpop.xlane.xlu0 %1541
        %v1543 = vadd.f32 %v1432, %v1434
        %1544 = vadd.xlane.f32.xlu0 %v1543
        %v1545 = vpop.xlane.xlu0 %1544
        %v1546 = vadd.f32 %v1436, %v1438
        %1547 = vadd.xlane.f32.xlu0 %v1546
        %v1548 = vpop.xlane.xlu0 %1547
        %v1549 = vadd.f32 %v1440, %v1442
        %1550 = vadd.xlane.f32.xlu0 %v1549
        %v1551 = vpop.xlane.xlu0 %1550
        %v1552 = vadd.f32 %v1444, %v1446
        %1553 = vadd.xlane.f32.xlu0 %v1552
        %v1554 = vpop.xlane.xlu0 %1553
        %v1555 = vadd.f32 %v1448, %v1450
        %1556 = vadd.xlane.f32.xlu0 %v1555
        %v1557 = vpop.xlane.xlu0 %1556
        %v1558 = vadd.f32 %v1452, %v1454
        %1559 = vadd.xlane.f32.xlu0 %v1558
        %v1560 = vpop.xlane.xlu0 %1559
        %v1561 = vadd.f32 %v1456, %v1458
        %1562 = vadd.xlane.f32.xlu0 %v1561
        %v1563 = vpop.xlane.xlu0 %1562
        %v1564 = vadd.f32 %v1460, %v1462
        %1565 = vadd.xlane.f32.xlu0 %v1564
        %v1566 = vpop.xlane.xlu0 %1565
        %v1567 = vadd.f32 %v1464, %v1466
        %1568 = vadd.xlane.f32.xlu0 %v1567
        %v1569 = vpop.xlane.xlu0 %1568
        %v1570 = vadd.f32 %v1468, %v1470
        %1571 = vadd.xlane.f32.xlu0 %v1570
        %v1572 = vpop.xlane.xlu0 %1571
        %v1573 = vadd.f32 %v1472, %v1474
        %1574 = vadd.xlane.f32.xlu0 %v1573
        %v1575 = vpop.xlane.xlu0 %1574
        %v1576 = vadd.f32 %v1476, %v1478
        %1577 = vadd.xlane.f32.xlu0 %v1576
        %v1578 = vpop.xlane.xlu0 %1577
        %v1579 = vadd.f32 %v1480, %v1482
        %1580 = vadd.xlane.f32.xlu0 %v1579
        %v1581 = vpop.xlane.xlu0 %1580
        %v1582 = vadd.f32 %v1484, %v1486
        %1583 = vadd.xlane.f32.xlu0 %v1582
        %v1584 = vpop.xlane.xlu0 %1583
        %v1585 = vadd.f32 %v1488, %v1490
        %1586 = vadd.xlane.f32.xlu0 %v1585
        %v1587 = vpop.xlane.xlu0 %1586
        %v1588 = vadd.f32 %v1492, %v1494
        %1589 = vadd.xlane.f32.xlu0 %v1588
        %v1590 = vpop.xlane.xlu0 %1589
        %v1591 = vrcp.pop %v1497
        %v1592 = vmul.f32 %v1497, %v1591
        %v1593 = vsub.f32 1.0, %v1592
        %v1594 = vmul.f32 %v1591, %v1593
        %v1595 = vadd.f32 %v1591, %v1594
        %vm1596 = vweird.f32 %v1497
        %vm1597 = vweird.f32 %v1591
        %vm1598 = vmor %vm1596, %vm1597
        %v1599 = vsel %vm1598, %v1591, %v1595
        %v1600 = vand.u32 2147483647, %v1497
        %vm1601 = vcmp.eq.f32.partialorder %v1600, 8.507059e+37
        %v1602 = vand.u32 %v1497, 2147483648
        %v1603 = vor.u32 1.1754944e-38, %v1602
        %v1604 = vsel %vm1601, %v1603, %v1599
        %v1605 = vrcp.pop %v1500
        %v1606 = vmul.f32 %v1500, %v1605
        %v1607 = vsub.f32 1.0, %v1606
        %v1608 = vmul.f32 %v1605, %v1607
        %v1609 = vadd.f32 %v1605, %v1608
        %vm1610 = vweird.f32 %v1500
        %vm1611 = vweird.f32 %v1605
        %vm1612 = vmor %vm1610, %vm1611
        %v1613 = vsel %vm1612, %v1605, %v1609
        %v1614 = vand.u32 2147483647, %v1500
        %vm1615 = vcmp.eq.f32.partialorder %v1614, 8.507059e+37
        %v1616 = vand.u32 %v1500, 2147483648
        %v1617 = vor.u32 1.1754944e-38, %v1616
        %v1618 = vsel %vm1615, %v1617, %v1613
        %v1619 = vrcp.pop %v1503
        %v1620 = vmul.f32 %v1503, %v1619
        %v1621 = vsub.f32 1.0, %v1620
        %v1622 = vmul.f32 %v1619, %v1621
        %v1623 = vadd.f32 %v1619, %v1622
        %vm1624 = vweird.f32 %v1503
        %vm1625 = vweird.f32 %v1619
        %vm1626 = vmor %vm1624, %vm1625
        %v1627 = vsel %vm1626, %v1619, %v1623
        %v1628 = vand.u32 2147483647, %v1503
        %vm1629 = vcmp.eq.f32.partialorder %v1628, 8.507059e+37
        %v1630 = vand.u32 %v1503, 2147483648
        %v1631 = vor.u32 1.1754944e-38, %v1630
        %v1632 = vsel %vm1629, %v1631, %v1627
        %v1633 = vrcp.pop %v1506
        %v1634 = vmul.f32 %v1506, %v1633
        %v1635 = vsub.f32 1.0, %v1634
        %v1636 = vmul.f32 %v1633, %v1635
        %v1637 = vadd.f32 %v1633, %v1636
        %vm1638 = vweird.f32 %v1506
        %vm1639 = vweird.f32 %v1633
        %vm1640 = vmor %vm1638, %vm1639
        %v1641 = vsel %vm1640, %v1633, %v1637
        %v1642 = vand.u32 2147483647, %v1506
        %vm1643 = vcmp.eq.f32.partialorder %v1642, 8.507059e+37
        %v1644 = vand.u32 %v1506, 2147483648
        %v1645 = vor.u32 1.1754944e-38, %v1644
        %v1646 = vsel %vm1643, %v1645, %v1641
        %v1647 = vrcp.pop %v1509
        %v1648 = vmul.f32 %v1509, %v1647
        %v1649 = vsub.f32 1.0, %v1648
        %v1650 = vmul.f32 %v1647, %v1649
        %v1651 = vadd.f32 %v1647, %v1650
        %vm1652 = vweird.f32 %v1509
        %vm1653 = vweird.f32 %v1647
        %vm1654 = vmor %vm1652, %vm1653
        %v1655 = vsel %vm1654, %v1647, %v1651
        %v1656 = vand.u32 2147483647, %v1509
        %vm1657 = vcmp.eq.f32.partialorder %v1656, 8.507059e+37
        %v1658 = vand.u32 %v1509, 2147483648
        %v1659 = vor.u32 1.1754944e-38, %v1658
        %v1660 = vsel %vm1657, %v1659, %v1655
        %v1661 = vrcp.pop %v1512
        %v1662 = vmul.f32 %v1512, %v1661
        %v1663 = vsub.f32 1.0, %v1662
        %v1664 = vmul.f32 %v1661, %v1663
        %v1665 = vadd.f32 %v1661, %v1664
        %vm1666 = vweird.f32 %v1512
        %vm1667 = vweird.f32 %v1661
        %vm1668 = vmor %vm1666, %vm1667
        %v1669 = vsel %vm1668, %v1661, %v1665
        %v1670 = vand.u32 2147483647, %v1512
        %vm1671 = vcmp.eq.f32.partialorder %v1670, 8.507059e+37
        %v1672 = vand.u32 %v1512, 2147483648
        %v1673 = vor.u32 1.1754944e-38, %v1672
        %v1674 = vsel %vm1671, %v1673, %v1669
        %v1675 = vrcp.pop %v1515
        %v1676 = vmul.f32 %v1515, %v1675
        %v1677 = vsub.f32 1.0, %v1676
        %v1678 = vmul.f32 %v1675, %v1677
        %v1679 = vadd.f32 %v1675, %v1678
        %vm1680 = vweird.f32 %v1515
        %vm1681 = vweird.f32 %v1675
        %vm1682 = vmor %vm1680, %vm1681
        %v1683 = vsel %vm1682, %v1675, %v1679
        %v1684 = vand.u32 2147483647, %v1515
        %vm1685 = vcmp.eq.f32.partialorder %v1684, 8.507059e+37
        %v1686 = vand.u32 %v1515, 2147483648
        %v1687 = vor.u32 1.1754944e-38, %v1686
        %v1688 = vsel %vm1685, %v1687, %v1683
        %v1689 = vrcp.pop %v1518
        %v1690 = vmul.f32 %v1518, %v1689
        %v1691 = vsub.f32 1.0, %v1690
        %v1692 = vmul.f32 %v1689, %v1691
        %v1693 = vadd.f32 %v1689, %v1692
        %vm1694 = vweird.f32 %v1518
        %vm1695 = vweird.f32 %v1689
        %vm1696 = vmor %vm1694, %vm1695
        %v1697 = vsel %vm1696, %v1689, %v1693
        %v1698 = vand.u32 2147483647, %v1518
        %vm1699 = vcmp.eq.f32.partialorder %v1698, 8.507059e+37
        %v1700 = vand.u32 %v1518, 2147483648
        %v1701 = vor.u32 1.1754944e-38, %v1700
        %v1702 = vsel %vm1699, %v1701, %v1697
        %v1703 = vrcp.pop %v1521
        %v1704 = vmul.f32 %v1521, %v1703
        %v1705 = vsub.f32 1.0, %v1704
        %v1706 = vmul.f32 %v1703, %v1705
        %v1707 = vadd.f32 %v1703, %v1706
        %vm1708 = vweird.f32 %v1521
        %vm1709 = vweird.f32 %v1703
        %vm1710 = vmor %vm1708, %vm1709
        %v1711 = vsel %vm1710, %v1703, %v1707
        %v1712 = vand.u32 2147483647, %v1521
        %vm1713 = vcmp.eq.f32.partialorder %v1712, 8.507059e+37
        %v1714 = vand.u32 %v1521, 2147483648
        %v1715 = vor.u32 1.1754944e-38, %v1714
        %v1716 = vsel %vm1713, %v1715, %v1711
        %v1717 = vrcp.pop %v1524
        %v1718 = vmul.f32 %v1524, %v1717
        %v1719 = vsub.f32 1.0, %v1718
        %v1720 = vmul.f32 %v1717, %v1719
        %v1721 = vadd.f32 %v1717, %v1720
        %vm1722 = vweird.f32 %v1524
        %vm1723 = vweird.f32 %v1717
        %vm1724 = vmor %vm1722, %vm1723
        %v1725 = vsel %vm1724, %v1717, %v1721
        %v1726 = vand.u32 2147483647, %v1524
        %vm1727 = vcmp.eq.f32.partialorder %v1726, 8.507059e+37
        %v1728 = vand.u32 %v1524, 2147483648
        %v1729 = vor.u32 1.1754944e-38, %v1728
        %v1730 = vsel %vm1727, %v1729, %v1725
        %v1731 = vrcp.pop %v1527
        %v1732 = vmul.f32 %v1527, %v1731
        %v1733 = vsub.f32 1.0, %v1732
        %v1734 = vmul.f32 %v1731, %v1733
        %v1735 = vadd.f32 %v1731, %v1734
        %vm1736 = vweird.f32 %v1527
        %vm1737 = vweird.f32 %v1731
        %vm1738 = vmor %vm1736, %vm1737
        %v1739 = vsel %vm1738, %v1731, %v1735
        %v1740 = vand.u32 2147483647, %v1527
        %vm1741 = vcmp.eq.f32.partialorder %v1740, 8.507059e+37
        %v1742 = vand.u32 %v1527, 2147483648
        %v1743 = vor.u32 1.1754944e-38, %v1742
        %v1744 = vsel %vm1741, %v1743, %v1739
        %v1745 = vrcp.pop %v1530
        %v1746 = vmul.f32 %v1530, %v1745
        %v1747 = vsub.f32 1.0, %v1746
        %v1748 = vmul.f32 %v1745, %v1747
        %v1749 = vadd.f32 %v1745, %v1748
        %vm1750 = vweird.f32 %v1530
        %vm1751 = vweird.f32 %v1745
        %vm1752 = vmor %vm1750, %vm1751
        %v1753 = vsel %vm1752, %v1745, %v1749
        %v1754 = vand.u32 2147483647, %v1530
        %vm1755 = vcmp.eq.f32.partialorder %v1754, 8.507059e+37
        %v1756 = vand.u32 %v1530, 2147483648
        %v1757 = vor.u32 1.1754944e-38, %v1756
        %v1758 = vsel %vm1755, %v1757, %v1753
        %v1759 = vrcp.pop %v1533
        %v1760 = vmul.f32 %v1533, %v1759
        %v1761 = vsub.f32 1.0, %v1760
        %v1762 = vmul.f32 %v1759, %v1761
        %v1763 = vadd.f32 %v1759, %v1762
        %vm1764 = vweird.f32 %v1533
        %vm1765 = vweird.f32 %v1759
        %vm1766 = vmor %vm1764, %vm1765
        %v1767 = vsel %vm1766, %v1759, %v1763
        %v1768 = vand.u32 2147483647, %v1533
        %vm1769 = vcmp.eq.f32.partialorder %v1768, 8.507059e+37
        %v1770 = vand.u32 %v1533, 2147483648
        %v1771 = vor.u32 1.1754944e-38, %v1770
        %v1772 = vsel %vm1769, %v1771, %v1767
        %v1773 = vrcp.pop %v1536
        %v1774 = vmul.f32 %v1536, %v1773
        %v1775 = vsub.f32 1.0, %v1774
        %v1776 = vmul.f32 %v1773, %v1775
        %v1777 = vadd.f32 %v1773, %v1776
        %vm1778 = vweird.f32 %v1536
        %vm1779 = vweird.f32 %v1773
        %vm1780 = vmor %vm1778, %vm1779
        %v1781 = vsel %vm1780, %v1773, %v1777
        %v1782 = vand.u32 2147483647, %v1536
        %vm1783 = vcmp.eq.f32.partialorder %v1782, 8.507059e+37
        %v1784 = vand.u32 %v1536, 2147483648
        %v1785 = vor.u32 1.1754944e-38, %v1784
        %v1786 = vsel %vm1783, %v1785, %v1781
        %v1787 = vrcp.pop %v1539
        %v1788 = vmul.f32 %v1539, %v1787
        %v1789 = vsub.f32 1.0, %v1788
        %v1790 = vmul.f32 %v1787, %v1789
        %v1791 = vadd.f32 %v1787, %v1790
        %vm1792 = vweird.f32 %v1539
        %vm1793 = vweird.f32 %v1787
        %vm1794 = vmor %vm1792, %vm1793
        %v1795 = vsel %vm1794, %v1787, %v1791
        %v1796 = vand.u32 2147483647, %v1539
        %vm1797 = vcmp.eq.f32.partialorder %v1796, 8.507059e+37
        %v1798 = vand.u32 %v1539, 2147483648
        %v1799 = vor.u32 1.1754944e-38, %v1798
        %v1800 = vsel %vm1797, %v1799, %v1795
        %v1801 = vrcp.pop %v1542
        %v1802 = vmul.f32 %v1542, %v1801
        %v1803 = vsub.f32 1.0, %v1802
        %v1804 = vmul.f32 %v1801, %v1803
        %v1805 = vadd.f32 %v1801, %v1804
        %vm1806 = vweird.f32 %v1542
        %vm1807 = vweird.f32 %v1801
        %vm1808 = vmor %vm1806, %vm1807
        %v1809 = vsel %vm1808, %v1801, %v1805
        %v1810 = vand.u32 2147483647, %v1542
        %vm1811 = vcmp.eq.f32.partialorder %v1810, 8.507059e+37
        %v1812 = vand.u32 %v1542, 2147483648
        %v1813 = vor.u32 1.1754944e-38, %v1812
        %v1814 = vsel %vm1811, %v1813, %v1809
        %v1815 = vrcp.pop %v1545
        %v1816 = vmul.f32 %v1545, %v1815
        %v1817 = vsub.f32 1.0, %v1816
        %v1818 = vmul.f32 %v1815, %v1817
        %v1819 = vadd.f32 %v1815, %v1818
        %vm1820 = vweird.f32 %v1545
        %vm1821 = vweird.f32 %v1815
        %vm1822 = vmor %vm1820, %vm1821
        %v1823 = vsel %vm1822, %v1815, %v1819
        %v1824 = vand.u32 2147483647, %v1545
        %vm1825 = vcmp.eq.f32.partialorder %v1824, 8.507059e+37
        %v1826 = vand.u32 %v1545, 2147483648
        %v1827 = vor.u32 1.1754944e-38, %v1826
        %v1828 = vsel %vm1825, %v1827, %v1823
        %v1829 = vrcp.pop %v1548
        %v1830 = vmul.f32 %v1548, %v1829
        %v1831 = vsub.f32 1.0, %v1830
        %v1832 = vmul.f32 %v1829, %v1831
        %v1833 = vadd.f32 %v1829, %v1832
        %vm1834 = vweird.f32 %v1548
        %vm1835 = vweird.f32 %v1829
        %vm1836 = vmor %vm1834, %vm1835
        %v1837 = vsel %vm1836, %v1829, %v1833
        %v1838 = vand.u32 2147483647, %v1548
        %vm1839 = vcmp.eq.f32.partialorder %v1838, 8.507059e+37
        %v1840 = vand.u32 %v1548, 2147483648
        %v1841 = vor.u32 1.1754944e-38, %v1840
        %v1842 = vsel %vm1839, %v1841, %v1837
        %v1843 = vrcp.pop %v1551
        %v1844 = vmul.f32 %v1551, %v1843
        %v1845 = vsub.f32 1.0, %v1844
        %v1846 = vmul.f32 %v1843, %v1845
        %v1847 = vadd.f32 %v1843, %v1846
        %vm1848 = vweird.f32 %v1551
        %vm1849 = vweird.f32 %v1843
        %vm1850 = vmor %vm1848, %vm1849
        %v1851 = vsel %vm1850, %v1843, %v1847
        %v1852 = vand.u32 2147483647, %v1551
        %vm1853 = vcmp.eq.f32.partialorder %v1852, 8.507059e+37
        %v1854 = vand.u32 %v1551, 2147483648
        %v1855 = vor.u32 1.1754944e-38, %v1854
        %v1856 = vsel %vm1853, %v1855, %v1851
        %v1857 = vrcp.pop %v1554
        %v1858 = vmul.f32 %v1554, %v1857
        %v1859 = vsub.f32 1.0, %v1858
        %v1860 = vmul.f32 %v1857, %v1859
        %v1861 = vadd.f32 %v1857, %v1860
        %vm1862 = vweird.f32 %v1554
        %vm1863 = vweird.f32 %v1857
        %vm1864 = vmor %vm1862, %vm1863
        %v1865 = vsel %vm1864, %v1857, %v1861
        %v1866 = vand.u32 2147483647, %v1554
        %vm1867 = vcmp.eq.f32.partialorder %v1866, 8.507059e+37
        %v1868 = vand.u32 %v1554, 2147483648
        %v1869 = vor.u32 1.1754944e-38, %v1868
        %v1870 = vsel %vm1867, %v1869, %v1865
        %v1871 = vrcp.pop %v1557
        %v1872 = vmul.f32 %v1557, %v1871
        %v1873 = vsub.f32 1.0, %v1872
        %v1874 = vmul.f32 %v1871, %v1873
        %v1875 = vadd.f32 %v1871, %v1874
        %vm1876 = vweird.f32 %v1557
        %vm1877 = vweird.f32 %v1871
        %vm1878 = vmor %vm1876, %vm1877
        %v1879 = vsel %vm1878, %v1871, %v1875
        %v1880 = vand.u32 2147483647, %v1557
        %vm1881 = vcmp.eq.f32.partialorder %v1880, 8.507059e+37
        %v1882 = vand.u32 %v1557, 2147483648
        %v1883 = vor.u32 1.1754944e-38, %v1882
        %v1884 = vsel %vm1881, %v1883, %v1879
        %v1885 = vrcp.pop %v1560
        %v1886 = vmul.f32 %v1560, %v1885
        %v1887 = vsub.f32 1.0, %v1886
        %v1888 = vmul.f32 %v1885, %v1887
        %v1889 = vadd.f32 %v1885, %v1888
        %vm1890 = vweird.f32 %v1560
        %vm1891 = vweird.f32 %v1885
        %vm1892 = vmor %vm1890, %vm1891
        %v1893 = vsel %vm1892, %v1885, %v1889
        %v1894 = vand.u32 2147483647, %v1560
        %vm1895 = vcmp.eq.f32.partialorder %v1894, 8.507059e+37
        %v1896 = vand.u32 %v1560, 2147483648
        %v1897 = vor.u32 1.1754944e-38, %v1896
        %v1898 = vsel %vm1895, %v1897, %v1893
        %v1899 = vrcp.pop %v1563
        %v1900 = vmul.f32 %v1563, %v1899
        %v1901 = vsub.f32 1.0, %v1900
        %v1902 = vmul.f32 %v1899, %v1901
        %v1903 = vadd.f32 %v1899, %v1902
        %vm1904 = vweird.f32 %v1563
        %vm1905 = vweird.f32 %v1899
        %vm1906 = vmor %vm1904, %vm1905
        %v1907 = vsel %vm1906, %v1899, %v1903
        %v1908 = vand.u32 2147483647, %v1563
        %vm1909 = vcmp.eq.f32.partialorder %v1908, 8.507059e+37
        %v1910 = vand.u32 %v1563, 2147483648
        %v1911 = vor.u32 1.1754944e-38, %v1910
        %v1912 = vsel %vm1909, %v1911, %v1907
        %v1913 = vrcp.pop %v1566
        %v1914 = vmul.f32 %v1566, %v1913
        %v1915 = vsub.f32 1.0, %v1914
        %v1916 = vmul.f32 %v1913, %v1915
        %v1917 = vadd.f32 %v1913, %v1916
        %vm1918 = vweird.f32 %v1566
        %vm1919 = vweird.f32 %v1913
        %vm1920 = vmor %vm1918, %vm1919
        %v1921 = vsel %vm1920, %v1913, %v1917
        %v1922 = vand.u32 2147483647, %v1566
        %vm1923 = vcmp.eq.f32.partialorder %v1922, 8.507059e+37
        %v1924 = vand.u32 %v1566, 2147483648
        %v1925 = vor.u32 1.1754944e-38, %v1924
        %v1926 = vsel %vm1923, %v1925, %v1921
        %v1927 = vrcp.pop %v1569
        %v1928 = vmul.f32 %v1569, %v1927
        %v1929 = vsub.f32 1.0, %v1928
        %v1930 = vmul.f32 %v1927, %v1929
        %v1931 = vadd.f32 %v1927, %v1930
        %vm1932 = vweird.f32 %v1569
        %vm1933 = vweird.f32 %v1927
        %vm1934 = vmor %vm1932, %vm1933
        %v1935 = vsel %vm1934, %v1927, %v1931
        %v1936 = vand.u32 2147483647, %v1569
        %vm1937 = vcmp.eq.f32.partialorder %v1936, 8.507059e+37
        %v1938 = vand.u32 %v1569, 2147483648
        %v1939 = vor.u32 1.1754944e-38, %v1938
        %v1940 = vsel %vm1937, %v1939, %v1935
        %v1941 = vrcp.pop %v1572
        %v1942 = vmul.f32 %v1572, %v1941
        %v1943 = vsub.f32 1.0, %v1942
        %v1944 = vmul.f32 %v1941, %v1943
        %v1945 = vadd.f32 %v1941, %v1944
        %vm1946 = vweird.f32 %v1572
        %vm1947 = vweird.f32 %v1941
        %vm1948 = vmor %vm1946, %vm1947
        %v1949 = vsel %vm1948, %v1941, %v1945
        %v1950 = vand.u32 2147483647, %v1572
        %vm1951 = vcmp.eq.f32.partialorder %v1950, 8.507059e+37
        %v1952 = vand.u32 %v1572, 2147483648
        %v1953 = vor.u32 1.1754944e-38, %v1952
        %v1954 = vsel %vm1951, %v1953, %v1949
        %v1955 = vrcp.pop %v1575
        %v1956 = vmul.f32 %v1575, %v1955
        %v1957 = vsub.f32 1.0, %v1956
        %v1958 = vmul.f32 %v1955, %v1957
        %v1959 = vadd.f32 %v1955, %v1958
        %vm1960 = vweird.f32 %v1575
        %vm1961 = vweird.f32 %v1955
        %vm1962 = vmor %vm1960, %vm1961
        %v1963 = vsel %vm1962, %v1955, %v1959
        %v1964 = vand.u32 2147483647, %v1575
        %vm1965 = vcmp.eq.f32.partialorder %v1964, 8.507059e+37
        %v1966 = vand.u32 %v1575, 2147483648
        %v1967 = vor.u32 1.1754944e-38, %v1966
        %v1968 = vsel %vm1965, %v1967, %v1963
        %v1969 = vrcp.pop %v1578
        %v1970 = vmul.f32 %v1578, %v1969
        %v1971 = vsub.f32 1.0, %v1970
        %v1972 = vmul.f32 %v1969, %v1971
        %v1973 = vadd.f32 %v1969, %v1972
        %vm1974 = vweird.f32 %v1578
        %vm1975 = vweird.f32 %v1969
        %vm1976 = vmor %vm1974, %vm1975
        %v1977 = vsel %vm1976, %v1969, %v1973
        %v1978 = vand.u32 2147483647, %v1578
        %vm1979 = vcmp.eq.f32.partialorder %v1978, 8.507059e+37
        %v1980 = vand.u32 %v1578, 2147483648
        %v1981 = vor.u32 1.1754944e-38, %v1980
        %v1982 = vsel %vm1979, %v1981, %v1977
        %v1983 = vrcp.pop %v1581
        %v1984 = vmul.f32 %v1581, %v1983
        %v1985 = vsub.f32 1.0, %v1984
        %v1986 = vmul.f32 %v1983, %v1985
        %v1987 = vadd.f32 %v1983, %v1986
        %vm1988 = vweird.f32 %v1581
        %vm1989 = vweird.f32 %v1983
        %vm1990 = vmor %vm1988, %vm1989
        %v1991 = vsel %vm1990, %v1983, %v1987
        %v1992 = vand.u32 2147483647, %v1581
        %vm1993 = vcmp.eq.f32.partialorder %v1992, 8.507059e+37
        %v1994 = vand.u32 %v1581, 2147483648
        %v1995 = vor.u32 1.1754944e-38, %v1994
        %v1996 = vsel %vm1993, %v1995, %v1991
        %v1997 = vrcp.pop %v1584
        %v1998 = vmul.f32 %v1584, %v1997
        %v1999 = vsub.f32 1.0, %v1998
        %v2000 = vmul.f32 %v1997, %v1999
        %v2001 = vadd.f32 %v1997, %v2000
        %vm2002 = vweird.f32 %v1584
        %vm2003 = vweird.f32 %v1997
        %vm2004 = vmor %vm2002, %vm2003
        %v2005 = vsel %vm2004, %v1997, %v2001
        %v2006 = vand.u32 2147483647, %v1584
        %vm2007 = vcmp.eq.f32.partialorder %v2006, 8.507059e+37
        %v2008 = vand.u32 %v1584, 2147483648
        %v2009 = vor.u32 1.1754944e-38, %v2008
        %v2010 = vsel %vm2007, %v2009, %v2005
        %v2011 = vrcp.pop %v1587
        %v2012 = vmul.f32 %v1587, %v2011
        %v2013 = vsub.f32 1.0, %v2012
        %v2014 = vmul.f32 %v2011, %v2013
        %v2015 = vadd.f32 %v2011, %v2014
        %vm2016 = vweird.f32 %v1587
        %vm2017 = vweird.f32 %v2011
        %vm2018 = vmor %vm2016, %vm2017
        %v2019 = vsel %vm2018, %v2011, %v2015
        %v2020 = vand.u32 2147483647, %v1587
        %vm2021 = vcmp.eq.f32.partialorder %v2020, 8.507059e+37
        %v2022 = vand.u32 %v1587, 2147483648
        %v2023 = vor.u32 1.1754944e-38, %v2022
        %v2024 = vsel %vm2021, %v2023, %v2019
        %v2025 = vrcp.pop %v1590
        %v2026 = vmul.f32 %v1590, %v2025
        %v2027 = vsub.f32 1.0, %v2026
        %v2028 = vmul.f32 %v2025, %v2027
        %v2029 = vadd.f32 %v2025, %v2028
        %vm2030 = vweird.f32 %v1590
        %vm2031 = vweird.f32 %v2025
        %vm2032 = vmor %vm2030, %vm2031
        %v2033 = vsel %vm2032, %v2025, %v2029
        %v2034 = vand.u32 2147483647, %v1590
        %vm2035 = vcmp.eq.f32.partialorder %v2034, 8.507059e+37
        %v2036 = vand.u32 %v1590, 2147483648
        %v2037 = vor.u32 1.1754944e-38, %v2036
        %v2038 = vsel %vm2035, %v2037, %v2033
        %v2039 = vmul.f32 %v1368, %v1604
        %v2040 = vmul.f32 %v1370, %v1604
        %v2041 = vmul.f32 %v1372, %v1618
        %v2042 = vmul.f32 %v1374, %v1618
        %v2043 = vmul.f32 %v1376, %v1632
        %v2044 = vmul.f32 %v1378, %v1632
        %v2045 = vmul.f32 %v1380, %v1646
        %v2046 = vmul.f32 %v1382, %v1646
        %v2047 = vmul.f32 %v1384, %v1660
        %v2048 = vmul.f32 %v1386, %v1660
        %v2049 = vmul.f32 %v1388, %v1674
        %v2050 = vmul.f32 %v1390, %v1674
        %v2051 = vmul.f32 %v1392, %v1688
        %v2052 = vmul.f32 %v1394, %v1688
        %v2053 = vmul.f32 %v1396, %v1702
        %v2054 = vmul.f32 %v1398, %v1702
        %v2055 = vmul.f32 %v1400, %v1716
        %v2056 = vmul.f32 %v1402, %v1716
        %v2057 = vmul.f32 %v1404, %v1730
        %v2058 = vmul.f32 %v1406, %v1730
        %v2059 = vmul.f32 %v1408, %v1744
        %v2060 = vmul.f32 %v1410, %v1744
        %v2061 = vmul.f32 %v1412, %v1758
        %v2062 = vmul.f32 %v1414, %v1758
        %v2063 = vmul.f32 %v1416, %v1772
        %v2064 = vmul.f32 %v1418, %v1772
        %v2065 = vmul.f32 %v1420, %v1786
        %v2066 = vmul.f32 %v1422, %v1786
        %v2067 = vmul.f32 %v1424, %v1800
        %v2068 = vmul.f32 %v1426, %v1800
        %v2069 = vmul.f32 %v1428, %v1814
        %v2070 = vmul.f32 %v1430, %v1814
        %v2071 = vmul.f32 %v1432, %v1828
        %v2072 = vmul.f32 %v1434, %v1828
        %v2073 = vmul.f32 %v1436, %v1842
        %v2074 = vmul.f32 %v1438, %v1842
        %v2075 = vmul.f32 %v1440, %v1856
        %v2076 = vmul.f32 %v1442, %v1856
        %v2077 = vmul.f32 %v1444, %v1870
        %v2078 = vmul.f32 %v1446, %v1870
        %v2079 = vmul.f32 %v1448, %v1884
        %v2080 = vmul.f32 %v1450, %v1884
        %v2081 = vmul.f32 %v1452, %v1898
        %v2082 = vmul.f32 %v1454, %v1898
        %v2083 = vmul.f32 %v1456, %v1912
        %v2084 = vmul.f32 %v1458, %v1912
        %v2085 = vmul.f32 %v1460, %v1926
        %v2086 = vmul.f32 %v1462, %v1926
        %v2087 = vmul.f32 %v1464, %v1940
        %v2088 = vmul.f32 %v1466, %v1940
        %v2089 = vmul.f32 %v1468, %v1954
        %v2090 = vmul.f32 %v1470, %v1954
        %v2091 = vmul.f32 %v1472, %v1968
        %v2092 = vmul.f32 %v1474, %v1968
        %v2093 = vmul.f32 %v1476, %v1982
        %v2094 = vmul.f32 %v1478, %v1982
        %v2095 = vmul.f32 %v1480, %v1996
        %v2096 = vmul.f32 %v1482, %v1996
        %v2097 = vmul.f32 %v1484, %v2010
        %v2098 = vmul.f32 %v1486, %v2010
        %v2099 = vmul.f32 %v1488, %v2024
        %v2100 = vmul.f32 %v1490, %v2024
        %v2101 = vmul.f32 %v1492, %v2038
        %v2102 = vmul.f32 %v1494, %v2038
        %v2103 = vpack.c.bf16 %v2040, %v2039
        %v2104 = vpack.c.bf16 %v2042, %v2041
        %v2105 = vpack.c.bf16 %v2044, %v2043
        %v2106 = vpack.c.bf16 %v2046, %v2045
        %v2107 = vpack.c.bf16 %v2048, %v2047
        %v2108 = vpack.c.bf16 %v2050, %v2049
        %v2109 = vpack.c.bf16 %v2052, %v2051
        %v2110 = vpack.c.bf16 %v2054, %v2053
        %v2111 = vpack.c.bf16 %v2056, %v2055
        %v2112 = vpack.c.bf16 %v2058, %v2057
        %v2113 = vpack.c.bf16 %v2060, %v2059
        %v2114 = vpack.c.bf16 %v2062, %v2061
        %v2115 = vpack.c.bf16 %v2064, %v2063
        %v2116 = vpack.c.bf16 %v2066, %v2065
        %v2117 = vpack.c.bf16 %v2068, %v2067
        %v2118 = vpack.c.bf16 %v2070, %v2069
        %v2119 = vpack.c.bf16 %v2072, %v2071
        %v2120 = vpack.c.bf16 %v2074, %v2073
        %v2121 = vpack.c.bf16 %v2076, %v2075
        %v2122 = vpack.c.bf16 %v2078, %v2077
        %v2123 = vpack.c.bf16 %v2080, %v2079
        %v2124 = vpack.c.bf16 %v2082, %v2081
        %v2125 = vpack.c.bf16 %v2084, %v2083
        %v2126 = vpack.c.bf16 %v2086, %v2085
        %v2127 = vpack.c.bf16 %v2088, %v2087
        %v2128 = vpack.c.bf16 %v2090, %v2089
        %v2129 = vpack.c.bf16 %v2092, %v2091
        %v2130 = vpack.c.bf16 %v2094, %v2093
        %v2131 = vpack.c.bf16 %v2096, %v2095
        %v2132 = vpack.c.bf16 %v2098, %v2097
        %v2133 = vpack.c.bf16 %v2100, %v2099
        %v2134 = vpack.c.bf16 %v2102, %v2101
        %v2135 = vld [vmem:[#allocation3] sm:$0xff]
        %v2136 = vld [vmem:[#allocation3 + $0x8] sm:$0xff]
        %v2137 = vld [vmem:[#allocation3 + $0x10] sm:$0xff]
        %v2138 = vld [vmem:[#allocation3 + $0x18] sm:$0xff]
        %v2139 = vld [vmem:[#allocation3 + $0x20] sm:$0xff]
        %v2140 = vld [vmem:[#allocation3 + $0x28] sm:$0xff]
        %v2141 = vld [vmem:[#allocation3 + $0x30] sm:$0xff]
        %v2142 = vld [vmem:[#allocation3 + $0x38] sm:$0xff]
        %v2151 = vunpack.c.l.b16 %v2135
        %v2152 = vunpack.c.h.b16 %v2135
        %v2153 = vunpack.c.l.b16 %v2136
        %v2154 = vunpack.c.h.b16 %v2136
        %v2155 = vunpack.c.l.b16 %v2137
        %v2156 = vunpack.c.h.b16 %v2137
        %v2157 = vunpack.c.l.b16 %v2138
        %v2158 = vunpack.c.h.b16 %v2138
        %v2159 = vunpack.c.l.b16 %v2139
        %v2160 = vunpack.c.h.b16 %v2139
        %v2161 = vunpack.c.l.b16 %v2140
        %v2162 = vunpack.c.h.b16 %v2140
        %v2163 = vunpack.c.l.b16 %v2141
        %v2164 = vunpack.c.h.b16 %v2141
        %v2165 = vunpack.c.l.b16 %v2142
        %v2166 = vunpack.c.h.b16 %v2142
        %v2167 = vpack.c.b16 %v2153, %v2151
        %v2168 = vpack.c.b16 %v2154, %v2152
        %v2169 = vpack.c.b16 %v2157, %v2155
        %v2170 = vpack.c.b16 %v2158, %v2156
        %v2171 = vpack.c.b16 %v2161, %v2159
        %v2172 = vpack.c.b16 %v2162, %v2160
        %v2173 = vpack.c.b16 %v2165, %v2163
        %v2174 = vpack.c.b16 %v2166, %v2164
        %v2215 = vunpack.c.l.b16 %v2103
        %v2216 = vunpack.c.h.b16 %v2103
        %v2217 = vunpack.c.l.b16 %v2104
        %v2218 = vunpack.c.h.b16 %v2104
        %v2219 = vunpack.c.l.b16 %v2105
        %v2220 = vunpack.c.h.b16 %v2105
        %v2221 = vunpack.c.l.b16 %v2106
        %v2222 = vunpack.c.h.b16 %v2106
        %v2223 = vunpack.c.l.b16 %v2107
        %v2224 = vunpack.c.h.b16 %v2107
        %v2225 = vunpack.c.l.b16 %v2108
        %v2226 = vunpack.c.h.b16 %v2108
        %v2227 = vunpack.c.l.b16 %v2109
        %v2228 = vunpack.c.h.b16 %v2109
        %v2229 = vunpack.c.l.b16 %v2110
        %v2230 = vunpack.c.h.b16 %v2110
        %v2231 = vunpack.c.l.b16 %v2111
        %v2232 = vunpack.c.h.b16 %v2111
        %v2233 = vunpack.c.l.b16 %v2112
        %v2234 = vunpack.c.h.b16 %v2112
        %v2235 = vunpack.c.l.b16 %v2113
        %v2236 = vunpack.c.h.b16 %v2113
        %v2237 = vunpack.c.l.b16 %v2114
        %v2238 = vunpack.c.h.b16 %v2114
        %v2239 = vunpack.c.l.b16 %v2115
        %v2240 = vunpack.c.h.b16 %v2115
        %v2241 = vunpack.c.l.b16 %v2116
        %v2242 = vunpack.c.h.b16 %v2116
        %v2243 = vunpack.c.l.b16 %v2117
        %v2244 = vunpack.c.h.b16 %v2117
        %v2245 = vunpack.c.l.b16 %v2118
        %v2246 = vunpack.c.h.b16 %v2118
        %v2247 = vunpack.c.l.b16 %v2119
        %v2248 = vunpack.c.h.b16 %v2119
        %v2249 = vunpack.c.l.b16 %v2120
        %v2250 = vunpack.c.h.b16 %v2120
        %v2251 = vunpack.c.l.b16 %v2121
        %v2252 = vunpack.c.h.b16 %v2121
        %v2253 = vunpack.c.l.b16 %v2122
        %v2254 = vunpack.c.h.b16 %v2122
        %v2255 = vunpack.c.l.b16 %v2123
        %v2256 = vunpack.c.h.b16 %v2123
        %v2257 = vunpack.c.l.b16 %v2124
        %v2258 = vunpack.c.h.b16 %v2124
        %v2259 = vunpack.c.l.b16 %v2125
        %v2260 = vunpack.c.h.b16 %v2125
        %v2261 = vunpack.c.l.b16 %v2126
        %v2262 = vunpack.c.h.b16 %v2126
        %v2263 = vunpack.c.l.b16 %v2127
        %v2264 = vunpack.c.h.b16 %v2127
        %v2265 = vunpack.c.l.b16 %v2128
        %v2266 = vunpack.c.h.b16 %v2128
        %v2267 = vunpack.c.l.b16 %v2129
        %v2268 = vunpack.c.h.b16 %v2129
        %v2269 = vunpack.c.l.b16 %v2130
        %v2270 = vunpack.c.h.b16 %v2130
        %v2271 = vunpack.c.l.b16 %v2131
        %v2272 = vunpack.c.h.b16 %v2131
        %v2273 = vunpack.c.l.b16 %v2132
        %v2274 = vunpack.c.h.b16 %v2132
        %v2275 = vunpack.c.l.b16 %v2133
        %v2276 = vunpack.c.h.b16 %v2133
        %v2277 = vunpack.c.l.b16 %v2134
        %v2278 = vunpack.c.h.b16 %v2134
        %v2279 = vpack.c.b16 %v2217, %v2215
        %v2280 = vpack.c.b16 %v2218, %v2216
        %v2281 = vpack.c.b16 %v2221, %v2219
        %v2282 = vpack.c.b16 %v2222, %v2220
        %v2283 = vpack.c.b16 %v2225, %v2223
        %v2284 = vpack.c.b16 %v2226, %v2224
        %v2285 = vpack.c.b16 %v2229, %v2227
        %v2286 = vpack.c.b16 %v2230, %v2228
        %v2287 = vpack.c.b16 %v2233, %v2231
        %v2288 = vpack.c.b16 %v2234, %v2232
        %v2289 = vpack.c.b16 %v2237, %v2235
        %v2290 = vpack.c.b16 %v2238, %v2236
        %v2291 = vpack.c.b16 %v2241, %v2239
        %v2292 = vpack.c.b16 %v2242, %v2240
        %v2293 = vpack.c.b16 %v2245, %v2243
        %v2294 = vpack.c.b16 %v2246, %v2244
        %v2295 = vpack.c.b16 %v2249, %v2247
        %v2296 = vpack.c.b16 %v2250, %v2248
        %v2297 = vpack.c.b16 %v2253, %v2251
        %v2298 = vpack.c.b16 %v2254, %v2252
        %v2299 = vpack.c.b16 %v2257, %v2255
        %v2300 = vpack.c.b16 %v2258, %v2256
        %v2301 = vpack.c.b16 %v2261, %v2259
        %v2302 = vpack.c.b16 %v2262, %v2260
        %v2303 = vpack.c.b16 %v2265, %v2263
        %v2304 = vpack.c.b16 %v2266, %v2264
        %v2305 = vpack.c.b16 %v2269, %v2267
        %v2306 = vpack.c.b16 %v2270, %v2268
        %v2307 = vpack.c.b16 %v2273, %v2271
        %v2308 = vpack.c.b16 %v2274, %v2272
        %v2309 = vpack.c.b16 %v2277, %v2275
        %v2310 = vpack.c.b16 %v2278, %v2276
        %2343 = vmatpush.bf16.xpose.msra.mxu0 %v2293
        %2344 = vmatpush.bf16.xpose.msra.mxu0 %v2291
        %2345 = vmatpush.bf16.xpose.msra.mxu0 %v2289
        %2346 = vmatpush.bf16.xpose.msra.mxu0 %v2287
        %2347 = vmatpush.bf16.xpose.msra.mxu0 %v2285
        %2348 = vmatpush.bf16.xpose.msra.mxu0 %v2283
        %2349 = vmatpush.bf16.xpose.msra.mxu0 %v2281
        %2350 = vmatpush.bf16.xpose.msra.mxu0 %v2279
        %2351 = vmatmul.bf16.gmra.mxu0 %v2167
        %v2352 = vpop.f32.mrf.mxu0
        %v2353 = vadd.f32 0.0, %v2352
        %v2354 = vpop.f32.mrf.mxu0
        %v2355 = vadd.f32 0.0, %v2354
        %2356 = vmatmul.bf16.gmra.mxu0 %v2169
        %v2357 = vpop.f32.mrf.mxu0
        %v2358 = vadd.f32 0.0, %v2357
        %v2359 = vpop.f32.mrf.mxu0
        %v2360 = vadd.f32 0.0, %v2359
        %2361 = vmatmul.bf16.gmra.mxu0 %v2171
        %v2362 = vpop.f32.mrf.mxu0
        %v2363 = vadd.f32 0.0, %v2362
        %v2364 = vpop.f32.mrf.mxu0
        %v2365 = vadd.f32 0.0, %v2364
        %2366 = vmatmul.bf16.gmra.mxu0 %v2173
        %v2367 = vpop.f32.mrf.mxu0
        %v2368 = vadd.f32 0.0, %v2367
        %v2369 = vpop.f32.mrf.mxu0
        %v2370 = vadd.f32 0.0, %v2369
        %2371 = vdwg.mxu0
        %2372 = vmatpush.bf16.xpose.msra.mxu0 %v2294
        %2373 = vmatpush.bf16.xpose.msra.mxu0 %v2292
        %2374 = vmatpush.bf16.xpose.msra.mxu0 %v2290
        %2375 = vmatpush.bf16.xpose.msra.mxu0 %v2288
        %2376 = vmatpush.bf16.xpose.msra.mxu0 %v2286
        %2377 = vmatpush.bf16.xpose.msra.mxu0 %v2284
        %2378 = vmatpush.bf16.xpose.msra.mxu0 %v2282
        %2379 = vmatpush.bf16.xpose.msra.mxu0 %v2280
        %2380 = vmatmul.bf16.gmra.mxu0 %v2168
        %v2381 = vpop.f32.mrf.mxu0
        %v2382 = vadd.f32 %v2353, %v2381
        %v2383 = vpop.f32.mrf.mxu0
        %v2384 = vadd.f32 %v2355, %v2383
        %2385 = vmatmul.bf16.gmra.mxu0 %v2170
        %v2386 = vpop.f32.mrf.mxu0
        %v2387 = vadd.f32 %v2358, %v2386
        %v2388 = vpop.f32.mrf.mxu0
        %v2389 = vadd.f32 %v2360, %v2388
        %2390 = vmatmul.bf16.gmra.mxu0 %v2172
        %v2391 = vpop.f32.mrf.mxu0
        %v2392 = vadd.f32 %v2363, %v2391
        %v2393 = vpop.f32.mrf.mxu0
        %v2394 = vadd.f32 %v2365, %v2393
        %2395 = vmatmul.bf16.gmra.mxu0 %v2174
        %v2396 = vpop.f32.mrf.mxu0
        %v2397 = vadd.f32 %v2368, %v2396
        %v2398 = vpop.f32.mrf.mxu0
        %v2399 = vadd.f32 %v2370, %v2398
        %2400 = vdwg.mxu0
        %2401 = vmatpush.bf16.xpose.msra.mxu0 %v2309
        %2402 = vmatpush.bf16.xpose.msra.mxu0 %v2307
        %2403 = vmatpush.bf16.xpose.msra.mxu0 %v2305
        %2404 = vmatpush.bf16.xpose.msra.mxu0 %v2303
        %2405 = vmatpush.bf16.xpose.msra.mxu0 %v2301
        %2406 = vmatpush.bf16.xpose.msra.mxu0 %v2299
        %2407 = vmatpush.bf16.xpose.msra.mxu0 %v2297
        %2408 = vmatpush.bf16.xpose.msra.mxu0 %v2295
        %2409 = vmatmul.bf16.gmra.mxu0 %v2167
        %v2410 = vpop.f32.mrf.mxu0
        %v2411 = vadd.f32 0.0, %v2410
        %v2412 = vpop.f32.mrf.mxu0
        %v2413 = vadd.f32 0.0, %v2412
        %2414 = vmatmul.bf16.gmra.mxu0 %v2169
        %v2415 = vpop.f32.mrf.mxu0
        %v2416 = vadd.f32 0.0, %v2415
        %v2417 = vpop.f32.mrf.mxu0
        %v2418 = vadd.f32 0.0, %v2417
        %2419 = vmatmul.bf16.gmra.mxu0 %v2171
        %v2420 = vpop.f32.mrf.mxu0
        %v2421 = vadd.f32 0.0, %v2420
        %v2422 = vpop.f32.mrf.mxu0
        %v2423 = vadd.f32 0.0, %v2422
        %2424 = vmatmul.bf16.gmra.mxu0 %v2173
        %v2425 = vpop.f32.mrf.mxu0
        %v2426 = vadd.f32 0.0, %v2425
        %v2427 = vpop.f32.mrf.mxu0
        %v2428 = vadd.f32 0.0, %v2427
        %2429 = vdwg.mxu0
        %2430 = vmatpush.bf16.xpose.msra.mxu0 %v2310
        %2431 = vmatpush.bf16.xpose.msra.mxu0 %v2308
        %2432 = vmatpush.bf16.xpose.msra.mxu0 %v2306
        %2433 = vmatpush.bf16.xpose.msra.mxu0 %v2304
        %2434 = vmatpush.bf16.xpose.msra.mxu0 %v2302
        %2435 = vmatpush.bf16.xpose.msra.mxu0 %v2300
        %2436 = vmatpush.bf16.xpose.msra.mxu0 %v2298
        %2437 = vmatpush.bf16.xpose.msra.mxu0 %v2296
        %2438 = vmatmul.bf16.gmra.mxu0 %v2168
        %v2439 = vpop.f32.mrf.mxu0
        %v2440 = vadd.f32 %v2411, %v2439
        %v2441 = vpop.f32.mrf.mxu0
        %v2442 = vadd.f32 %v2413, %v2441
        %2443 = vmatmul.bf16.gmra.mxu0 %v2170
        %v2444 = vpop.f32.mrf.mxu0
        %v2445 = vadd.f32 %v2416, %v2444
        %v2446 = vpop.f32.mrf.mxu0
        %v2447 = vadd.f32 %v2418, %v2446
        %2448 = vmatmul.bf16.gmra.mxu0 %v2172
        %v2449 = vpop.f32.mrf.mxu0
        %v2450 = vadd.f32 %v2421, %v2449
        %v2451 = vpop.f32.mrf.mxu0
        %v2452 = vadd.f32 %v2423, %v2451
        %2453 = vmatmul.bf16.gmra.mxu0 %v2174
        %v2454 = vpop.f32.mrf.mxu0
        %v2455 = vadd.f32 %v2426, %v2454
        %v2456 = vpop.f32.mrf.mxu0
        %v2457 = vadd.f32 %v2428, %v2456
        %2458 = vdwg.mxu0
        %s2459 = sld [smem:[#allocation4]]
        %v2460 = vstv %s2459
        %v2461 = vmul.f32 %v2460, %v2382
        %v2462 = vmul.f32 %v2460, %v2440
        %v2463 = vmul.f32 %v2460, %v2384
        %v2464 = vmul.f32 %v2460, %v2442
        %v2465 = vmul.f32 %v2460, %v2387
        %v2466 = vmul.f32 %v2460, %v2445
        %v2467 = vmul.f32 %v2460, %v2389
        %v2468 = vmul.f32 %v2460, %v2447
        %v2469 = vmul.f32 %v2460, %v2392
        %v2470 = vmul.f32 %v2460, %v2450
        %v2471 = vmul.f32 %v2460, %v2394
        %v2472 = vmul.f32 %v2460, %v2452
        %v2473 = vmul.f32 %v2460, %v2397
        %v2474 = vmul.f32 %v2460, %v2455
        %v2475 = vmul.f32 %v2460, %v2399
        %v2476 = vmul.f32 %v2460, %v2457
        %v2477 = vadd.f32 %v2461, %v751
        %v2478 = vadd.f32 %v2462, %v752
        %v2479 = vadd.f32 %v2463, %v753
        %v2480 = vadd.f32 %v2464, %v754
        %v2481 = vadd.f32 %v2465, %v755
        %v2482 = vadd.f32 %v2466, %v756
        %v2483 = vadd.f32 %v2467, %v757
        %v2484 = vadd.f32 %v2468, %v758
        %v2485 = vadd.f32 %v2469, %v759
        %v2486 = vadd.f32 %v2470, %v760
        %v2487 = vadd.f32 %v2471, %v761
        %v2488 = vadd.f32 %v2472, %v762
        %v2489 = vadd.f32 %v2473, %v763
        %v2490 = vadd.f32 %v2474, %v764
        %v2491 = vadd.f32 %v2475, %v765
        %v2492 = vadd.f32 %v2476, %v766
        %2493 = vst [vmem:[%s485] sm:$0xff] %v2477
        %2494 = vst [vmem:[%s485 + $0x8] sm:$0xff] %v2478
        %2495 = vst [vmem:[%s485 + $0x10] sm:$0xff] %v2479
        %2496 = vst [vmem:[%s485 + $0x18] sm:$0xff] %v2480
        %2497 = vst [vmem:[%s485 + $0x20] sm:$0xff] %v2481
        %2498 = vst [vmem:[%s485 + $0x28] sm:$0xff] %v2482
        %2499 = vst [vmem:[%s485 + $0x30] sm:$0xff] %v2483
        %2500 = vst [vmem:[%s485 + $0x38] sm:$0xff] %v2484
        %2501 = vst [vmem:[%s485 + $0x40] sm:$0xff] %v2485
        %2502 = vst [vmem:[%s485 + $0x48] sm:$0xff] %v2486
        %2503 = vst [vmem:[%s485 + $0x50] sm:$0xff] %v2487
        %2504 = vst [vmem:[%s485 + $0x58] sm:$0xff] %v2488
        %2505 = vst [vmem:[%s485 + $0x60] sm:$0xff] %v2489
        %2506 = vst [vmem:[%s485 + $0x68] sm:$0xff] %v2490
        %2507 = vst [vmem:[%s485 + $0x70] sm:$0xff] %v2491
        %2508 = vst [vmem:[%s485 + $0x78] sm:$0xff] %v2492
        %2509 = vst [vmem:[%s492] sm:$0xff] %v2103
        %2510 = vst [vmem:[%s492 + $0x8] sm:$0xff] %v2104
        %2511 = vst [vmem:[%s492 + $0x10] sm:$0xff] %v2105
        %2512 = vst [vmem:[%s492 + $0x18] sm:$0xff] %v2106
        %2513 = vst [vmem:[%s492 + $0x20] sm:$0xff] %v2107
        %2514 = vst [vmem:[%s492 + $0x28] sm:$0xff] %v2108
        %2515 = vst [vmem:[%s492 + $0x30] sm:$0xff] %v2109
        %2516 = vst [vmem:[%s492 + $0x38] sm:$0xff] %v2110
        %2517 = vst [vmem:[%s492 + $0x40] sm:$0xff] %v2111
        %2518 = vst [vmem:[%s492 + $0x48] sm:$0xff] %v2112
        %2519 = vst [vmem:[%s492 + $0x50] sm:$0xff] %v2113
        %2520 = vst [vmem:[%s492 + $0x58] sm:$0xff] %v2114
        %2521 = vst [vmem:[%s492 + $0x60] sm:$0xff] %v2115
        %2522 = vst [vmem:[%s492 + $0x68] sm:$0xff] %v2116
        %2523 = vst [vmem:[%s492 + $0x70] sm:$0xff] %v2117
        %2524 = vst [vmem:[%s492 + $0x78] sm:$0xff] %v2118
        %2525 = vst [vmem:[%s492 + $0x80] sm:$0xff] %v2119
        %2526 = vst [vmem:[%s492 + $0x88] sm:$0xff] %v2120
        %2527 = vst [vmem:[%s492 + $0x90] sm:$0xff] %v2121
        %2528 = vst [vmem:[%s492 + $0x98] sm:$0xff] %v2122
        %2529 = vst [vmem:[%s492 + $0xa0] sm:$0xff] %v2123
        %2530 = vst [vmem:[%s492 + $0xa8] sm:$0xff] %v2124
        %2531 = vst [vmem:[%s492 + $0xb0] sm:$0xff] %v2125
        %2532 = vst [vmem:[%s492 + $0xb8] sm:$0xff] %v2126
        %2533 = vst [vmem:[%s492 + $0xc0] sm:$0xff] %v2127
        %2534 = vst [vmem:[%s492 + $0xc8] sm:$0xff] %v2128
        %2535 = vst [vmem:[%s492 + $0xd0] sm:$0xff] %v2129
        %2536 = vst [vmem:[%s492 + $0xd8] sm:$0xff] %v2130
        %2537 = vst [vmem:[%s492 + $0xe0] sm:$0xff] %v2131
        %2538 = vst [vmem:[%s492 + $0xe8] sm:$0xff] %v2132
        %2539 = vst [vmem:[%s492 + $0xf0] sm:$0xff] %v2133
        %2540 = vst [vmem:[%s492 + $0xf8] sm:$0xff] %v2134
        %s2541 = sand.u32 %s279, 1
        %s2542 = scalar_lea.sflag [#allocation7], %s2541
        %s2543 = sand.u32 %s279, 1
        %s2544 = smul.addr %s2543, 128
        %s2545 = scalar_lea.vmem [#allocation13], %s2544
        %s2546 = sand.u32 %s307, 1
        %s2547 = scalar_lea.sflag [#allocation15], %s2546
        %s2548 = sand.u32 %s307, 1
        %s2549 = smul.addr %s2548, 256
        %s2550 = scalar_lea.vmem [#allocation14], %s2549
        // Predicated region
        $region81: #{tpu_custom_call.1} parent=59 // pred_check
          %p2551 = pneg %p289
        $region82: #{tpu_custom_call.1} parent=59 // pred_check_branch
          %2553 = sbr.rel (%p2551) target = $region84
        $region83: #{tpu_custom_call.1} parent=59 // pred_region
          %s2554 = smul.u32 2, %s40
          %2556 = vsyncadd %s2542, 0
          %s2557 = smul.addr %s39, 16
          %s2558 = sadd.s32 %s2554, %s2557
          %s2559 = smul.addr %s2558, 8
          %s2560 = scalar_lea.hbm %s10, %s2559
          %s2561 = sshll.u32 %s2545, 4
          %s2562 = int_to_ptr.vmem [resolvable:$true] %s2561
          %s2563 = sshll.u32 %s2560, 4
          %s2564 = int_to_ptr.hbm [resolvable:$true] %s2563
          %2569 = dma.vmem_to_hbm [thread:$0]  %s2562, 2048, %s2564, %s2542, 256, 256, 16
        $region84: #{tpu_custom_call.1} parent=59 // pred_fallthru
          _
        // Predicated region
        $region85: #{tpu_custom_call.1} parent=59 // pred_check
          %p2570 = pneg %p317
        $region86: #{tpu_custom_call.1} parent=59 // pred_check_branch
          %2572 = sbr.rel (%p2570) target = $region88
        $region87: #{tpu_custom_call.1} parent=59 // pred_region
          %s2573 = smul.u32 32, %s40
          %2575 = vsyncadd %s2547, 0
          %s2576 = smul.addr %s2573, 2
          %s2577 = smul.addr %s39, 64
          %s2578 = sadd.s32 %s2576, %s2577
          %s2579 = smul.addr %s2578, 4
          %s2580 = scalar_lea.hbm %s11, %s2579
          %s2581 = sshll.u32 %s2550, 4
          %s2582 = int_to_ptr.vmem [resolvable:$true] %s2581
          %s2583 = sshll.u32 %s2580, 4
          %s2584 = int_to_ptr.hbm [resolvable:$true] %s2583
          %2589 = dma.vmem_to_hbm [thread:$0]  %s2582, 4096, %s2584, %s2547, 128, 128, 8
        $region88: #{tpu_custom_call.1} parent=59 // pred_fallthru
          _
      $region60: #{tpu_custom_call.1} parent=5 // pred_fallthru
        _
      %p2590 = scmp.le.s32.totalorder 2, %s30
      // Predicated region
      $region89: #{tpu_custom_call.1} parent=5 // pred_check
        %p2591 = pneg %p2590
      $region90: #{tpu_custom_call.1} parent=5 // pred_check_branch
        %2593 = sbr.rel (%p2591) target = $region92
      $region91: #{tpu_custom_call.1} parent=5 // pred_region
        %s2594 = ssub.s32 %s30, 2
        // Predicated region
        $region93: #{tpu_custom_call.1} parent=91 // pred_check
          %p2595 = pneg %p295
        $region94: #{tpu_custom_call.1} parent=91 // pred_check_branch
          %2597 = sbr.rel (%p2595) target = $region96
        $region95: #{tpu_custom_call.1} parent=91 // pred_region
          %s2598 = sand.u32 %s280, 1
          %s2599 = scalar_lea.sflag [#allocation7], %s2598
          %s2600 = sand.u32 %s280, 1
          %s2601 = smul.addr %s2600, 128
          %s2602 = scalar_lea.vmem [#allocation13], %s2601
          %2604 = dma.done %s2599, 2048
        $region96: #{tpu_custom_call.1} parent=91 // pred_fallthru
          _
        // Predicated region
        $region97: #{tpu_custom_call.1} parent=91 // pred_check
          %p2605 = pneg %p323
        $region98: #{tpu_custom_call.1} parent=91 // pred_check_branch
          %2607 = sbr.rel (%p2605) target = $region100
        $region99: #{tpu_custom_call.1} parent=91 // pred_region
          %s2608 = sand.u32 %s308, 1
          %s2609 = scalar_lea.sflag [#allocation15], %s2608
          %s2610 = sand.u32 %s308, 1
          %s2611 = smul.addr %s2610, 256
          %s2612 = scalar_lea.vmem [#allocation14], %s2611
          %2614 = dma.done %s2609, 4096
        $region100: #{tpu_custom_call.1} parent=91 // pred_fallthru
          _
      $region92: #{tpu_custom_call.1} parent=5 // pred_fallthru
        _
    $region6: #{tpu_custom_call.1} parent=1 // loop_footer
      %s34 = sadd.s32 1, %s30
    $region7: #{tpu_custom_call.1} parent=1 // loop_footer_branch
      %29 = sbr.rel target = $region3
    $region8: #{tpu_custom_call.1} parent=1 // loop_exit
      _
    %2615 = vsyncpa [#allocation6], 1
    %s2616 = scalar_lea.sflag [#allocation6], 1
    %2617 = vsyncpa %s2616, 1
    %2618 = vsyncpa [#allocation9], 1
    %2619 = vsyncpa [#allocation12], 1
    %2620 = vsyncpa [#allocation7], 1
    %s2621 = scalar_lea.sflag [#allocation7], 1
    %2622 = vsyncpa %s2621, 1
    %2623 = vsyncpa [#allocation15], 1
    %s2624 = scalar_lea.sflag [#allocation15], 1
    %2625 = vsyncpa %s2624, 1

// kernel: tpu_custom_call.1
$region0: #{tpu_custom_call.1}
  #allocation0 [shape = 'u32[]', space=smem, size = 0x4, offset = 0x4, fixed_abs, tag = 'smem constant byte address 0x4 - core index']
  #allocation1 [shape = 'u32[72,128]{1,0:T(1,128)}', space=vmem, size = 0x9000, scoped, tag = 'internal scratch']
  #allocation2 [shape = 'f32[8,256]{1,0:T(8,128)}', space=vmem, size = 0x2000, scoped, tag = 'scratch operand']
  #allocation3 [shape = 'bf16[64,256]{1,0:T(8,128)(2,1)}', space=vmem, size = 0x8000, scoped, tag = 'scratch operand']
  #allocation4 [shape = 'f32[1]{0:T(128)S(6)}', space=smem, size = 0x200, scoped, tag = 'scoped memory for tpu_custom_call.1']
  %s0 = inlined_call_operand.hbm [shape: f32[2,64,256], index: 0, kind: input, shape index: {}]
  %s1 = inlined_call_operand.hbm [shape: f32[2,64,256], index: 1, kind: input, shape index: {}]
  %s2 = inlined_call_operand.hbm [shape: f32[8,64], index: 2, kind: input, shape index: {}]
  %s3 = inlined_call_operand.vmem [shape: f32[8,1], index: 3, kind: input, shape index: {}]
  %s4 = inlined_call_operand.hbm [shape: f32[8,64], index: 4, kind: input, shape index: {}]
  %s5 = inlined_call_operand.vmem [shape: f32[8,1], index: 5, kind: input, shape index: {}]
  %s6 = inlined_call_operand.vmem [shape: f32[64,64], index: 6, kind: input, shape index: {}]
  %s7 = inlined_call_operand.vmem [shape: f32[64,1], index: 7, kind: input, shape index: {}]
  %s8 = inlined_call_operand.vmem [shape: f32[8,256], index: 8, kind: input, shape index: {}]
  %s9 = inlined_call_operand.<no memory space> [shape: f32[1], index: 9, kind: input, shape index: {}]
  %s10 = inlined_call_operand.hbm [shape: f32[2,64,256], index: 10, kind: output, shape index: {0}]
  %s11 = inlined_call_operand.hbm [shape: bf16[2,256,256], index: 11, kind: output, shape index: {1}]
  %12 = xla_tuple %s10, %s11
  %s13 = sld [smem:[#allocation0]]
  $region101: #{tpu_custom_call.1} parent=0
    _
  %s15 = ssub.s32 1, %s13
  %s16 = scalar_select 0, %s15, %s13
  %17 = sst [smem:[#allocation4]] %s9
  $region1: #{tpu_custom_call.1} parent=0
    #allocation5 [shape = 'u8[131072]{0}', space=vmem, size = 0x20000, scoped, tag = 'input window, operand 0']
    #allocation6 [shape = 's32[2]{0}', space=sflag, size = 0x8, scoped, tag = 'scoped memory for tpu_custom_call.1']
    #allocation7 [shape = 's32[2]{0}', space=sflag, size = 0x8, scoped, tag = 'scoped memory for tpu_custom_call.1']
    #allocation8 [shape = 'u8[131072]{0}', space=vmem, size = 0x20000, scoped, tag = 'input window, operand 1']
    #allocation9 [shape = 's32[2]{0}', space=sflag, size = 0x8, scoped, tag = 'scoped memory for tpu_custom_call.1']
    #allocation10 [shape = 'u8[4096]{0}', space=vmem, size = 0x1000, scoped, tag = 'input window, operand 2, single buffered']
    #allocation11 [shape = 'u8[4096]{0}', space=vmem, size = 0x1000, scoped, tag = 'input window, operand 4, single buffered']
    #allocation12 [shape = 's32[1]{0}', space=sflag, size = 0x4, scoped, tag = 'scoped memory for tpu_custom_call.1']
    #allocation13 [shape = 'u8[131072]{0}', space=vmem, size = 0x20000, scoped, tag = 'output window, operand 0']
    #allocation14 [shape = 'u8[262144]{0}', space=vmem, size = 0x40000, scoped, tag = 'output window, operand 1']
    #allocation15 [shape = 's32[2]{0}', space=sflag, size = 0x8, scoped, tag = 'scoped memory for tpu_custom_call.1']
    %18 = vsyncpa [#allocation6], 0
    %s19 = scalar_lea.sflag [#allocation6], 1
    %20 = vsyncpa %s19, 0
    %21 = vsyncpa [#allocation9], 0
    %s22 = scalar_lea.sflag [#allocation9], 1
    %23 = vsyncpa %s22, 0
    %24 = vsyncpa [#allocation12], 0
    %25 = vsyncpa [#allocation7], 0
    %s26 = scalar_lea.sflag [#allocation7], 1
    %27 = vsyncpa %s26, 0
    %28 = vsyncpa [#allocation15], 0
    %s29 = scalar_lea.sflag [#allocation15], 1
    %30 = vsyncpa %s29, 0
    loop: start=0, step=1, limit=4
    $region2: #{tpu_custom_call.1} parent=1 // loop_pre_header
      _
    $region3: #{tpu_custom_call.1} parent=1 // loop_header
      %s32 = sphi 0, %s36
      %p33 = scmp.ge.s32.totalorder %s32, 4
      %s39 = sphi 0, %s51
      %s40 = sphi 0, %s47
      %s41 = sphi 0, %s39
      %s42 = sphi 0, %s40
      %s43 = sphi 0, %s41
      %s44 = sphi 0, %s42
      %s56 = sphi 0, %s58
      %s59 = sphi 0, %s56
      %s60 = sphi 0, %s59
      %s76 = sphi 0, %s60
      %s82 = sphi 0, %s84
      %s85 = sphi 0, %s82
      %s86 = sphi 0, %s85
      %s102 = sphi 0, %s86
      %s106 = sphi 0, %s106
      %s108 = sphi 0, %s106
      %s109 = sphi 0, %s108
      %s123 = sphi 0, %s109
      %s127 = sphi 0, %s127
      %s129 = sphi 0, %s127
      %s130 = sphi 0, %s129
      %s144 = sphi 0, %s130
      %s148 = sphi 0, %s148
      %s150 = sphi 0, %s148
      %s151 = sphi 0, %s150
      %s165 = sphi 0, %s151
      %s169 = sphi 0, %s169
      %s171 = sphi 0, %s169
      %s172 = sphi 0, %s171
      %s186 = sphi 0, %s172
      %s190 = sphi 0, %s190
      %s192 = sphi 0, %s190
      %s193 = sphi 0, %s192
      %s207 = sphi 0, %s193
      %s211 = sphi 0, %s211
      %s213 = sphi 0, %s211
      %s214 = sphi 0, %s213
      %s228 = sphi 0, %s214
      %s232 = sphi 0, %s232
      %s234 = sphi 0, %s232
      %s235 = sphi 0, %s234
      %s249 = sphi 0, %s235
      %s253 = sphi 0, %s253
      %s255 = sphi 0, %s253
      %s256 = sphi 0, %s255
      %s270 = sphi 0, %s256
      %s278 = sphi 0, %s280
      %s281 = sphi 0, %s278
      %s282 = sphi 0, %s281
      %s298 = sphi 0, %s282
      %s306 = sphi 0, %s308
      %s309 = sphi 0, %s306
      %s310 = sphi 0, %s309
      %s326 = sphi 0, %s310
    $region4: #{tpu_custom_call.1} parent=1 // loop_header_branch
      %35 = sbr.rel (%p33) target = $region8
    $region5: #{tpu_custom_call.1} parent=1 // loop_body
      %s37 = ssub.s32 %s32, 1
      %s38 = ssub.s32 %s32, 2
      %s45 = sadd.s32 1, %s40
      %p46 = scmp.ge.s32.totalorder %s45, 1
      %s47 = scalar_select %p46, 0, %s45
      %s48 = sadd.s32 1, %s39
      %s49 = scalar_select %p46, %s48, %s39
      %p50 = scmp.ge.s32.totalorder %s49, 2
      %s51 = scalar_select %p50, 0, %s49
      %s52 = ssub.s32 %s39, %s51
      %s53 = ssub.s32 %s40, %s47
      %s54 = sor.u32 %s52, %s53
      %p55 = scmp.eq.s32.totalorder %s54, 0
      %s57 = sadd.s32 %s56, 1
      %s58 = scalar_select %p55, %s56, %s57
      %p61 = pneg %p55
      %p62 = scmp.eq.s32.totalorder %s32, 1
      %p63 = por %p61, %p62
      %p64 = scmp.ne.s32.totalorder %s56, %s59
      %p65 = scmp.eq.s32.totalorder %s32, 0
      %p66 = por %p64, %p65
      %p67 = scmp.ne.s32.totalorder %s56, %s59
      %p68 = scmp.eq.s32.totalorder %s37, 1
      %p69 = por %p67, %p68
      %p70 = scmp.ne.s32.totalorder %s59, %s60
      %p71 = scmp.eq.s32.totalorder %s37, 0
      %p72 = por %p70, %p71
      %p73 = scmp.ne.s32.totalorder %s59, %s60
      %p74 = scmp.eq.s32.totalorder %s38, 1
      %p75 = por %p73, %p74
      %p77 = scmp.ne.s32.totalorder %s60, %s76
      %p78 = scmp.eq.s32.totalorder %s38, 0
      %p79 = por %p77, %p78
      %s80 = ssub.s32 %s39, %s51
      %p81 = scmp.eq.s32.totalorder %s80, 0
      %s83 = sadd.s32 %s82, 1
      %s84 = scalar_select %p81, %s82, %s83
      %p87 = pneg %p81
      %p88 = scmp.eq.s32.totalorder %s32, 1
      %p89 = por %p87, %p88
      %p90 = scmp.ne.s32.totalorder %s82, %s85
      %p91 = scmp.eq.s32.totalorder %s32, 0
      %p92 = por %p90, %p91
      %p93 = scmp.ne.s32.totalorder %s82, %s85
      %p94 = scmp.eq.s32.totalorder %s37, 1
      %p95 = por %p93, %p94
      %p96 = scmp.ne.s32.totalorder %s85, %s86
      %p97 = scmp.eq.s32.totalorder %s37, 0
      %p98 = por %p96, %p97
      %p99 = scmp.ne.s32.totalorder %s85, %s86
      %p100 = scmp.eq.s32.totalorder %s38, 1
      %p101 = por %p99, %p100
      %p103 = scmp.ne.s32.totalorder %s86, %s102
      %p104 = scmp.eq.s32.totalorder %s38, 0
      %p105 = por %p103, %p104
      %s107 = sadd.s32 %s106, 1
      %p110 = scmp.eq.s32.totalorder %s32, 1
      %p111 = scmp.ne.s32.totalorder %s106, %s108
      %p112 = scmp.eq.s32.totalorder %s32, 0
      %p113 = por %p111, %p112
      %p114 = scmp.ne.s32.totalorder %s106, %s108
      %p115 = scmp.eq.s32.totalorder %s37, 1
      %p116 = por %p114, %p115
      %p117 = scmp.ne.s32.totalorder %s108, %s109
      %p118 = scmp.eq.s32.totalorder %s37, 0
      %p119 = por %p117, %p118
      %p120 = scmp.ne.s32.totalorder %s108, %s109
      %p121 = scmp.eq.s32.totalorder %s38, 1
      %p122 = por %p120, %p121
      %p124 = scmp.ne.s32.totalorder %s109, %s123
      %p125 = scmp.eq.s32.totalorder %s38, 0
      %p126 = por %p124, %p125
      %s128 = sadd.s32 %s127, 1
      %p131 = scmp.eq.s32.totalorder %s32, 1
      %p132 = scmp.ne.s32.totalorder %s127, %s129
      %p133 = scmp.eq.s32.totalorder %s32, 0
      %p134 = por %p132, %p133
      %p135 = scmp.ne.s32.totalorder %s127, %s129
      %p136 = scmp.eq.s32.totalorder %s37, 1
      %p137 = por %p135, %p136
      %p138 = scmp.ne.s32.totalorder %s129, %s130
      %p139 = scmp.eq.s32.totalorder %s37, 0
      %p140 = por %p138, %p139
      %p141 = scmp.ne.s32.totalorder %s129, %s130
      %p142 = scmp.eq.s32.totalorder %s38, 1
      %p143 = por %p141, %p142
      %p145 = scmp.ne.s32.totalorder %s130, %s144
      %p146 = scmp.eq.s32.totalorder %s38, 0
      %p147 = por %p145, %p146
      %s149 = sadd.s32 %s148, 1
      %p152 = scmp.eq.s32.totalorder %s32, 1
      %p153 = scmp.ne.s32.totalorder %s148, %s150
      %p154 = scmp.eq.s32.totalorder %s32, 0
      %p155 = por %p153, %p154
      %p156 = scmp.ne.s32.totalorder %s148, %s150
      %p157 = scmp.eq.s32.totalorder %s37, 1
      %p158 = por %p156, %p157
      %p159 = scmp.ne.s32.totalorder %s150, %s151
      %p160 = scmp.eq.s32.totalorder %s37, 0
      %p161 = por %p159, %p160
      %p162 = scmp.ne.s32.totalorder %s150, %s151
      %p163 = scmp.eq.s32.totalorder %s38, 1
      %p164 = por %p162, %p163
      %p166 = scmp.ne.s32.totalorder %s151, %s165
      %p167 = scmp.eq.s32.totalorder %s38, 0
      %p168 = por %p166, %p167
      %s170 = sadd.s32 %s169, 1
      %p173 = scmp.eq.s32.totalorder %s32, 1
      %p174 = scmp.ne.s32.totalorder %s169, %s171
      %p175 = scmp.eq.s32.totalorder %s32, 0
      %p176 = por %p174, %p175
      %p177 = scmp.ne.s32.totalorder %s169, %s171
      %p178 = scmp.eq.s32.totalorder %s37, 1
      %p179 = por %p177, %p178
      %p180 = scmp.ne.s32.totalorder %s171, %s172
      %p181 = scmp.eq.s32.totalorder %s37, 0
      %p182 = por %p180, %p181
      %p183 = scmp.ne.s32.totalorder %s171, %s172
      %p184 = scmp.eq.s32.totalorder %s38, 1
      %p185 = por %p183, %p184
      %p187 = scmp.ne.s32.totalorder %s172, %s186
      %p188 = scmp.eq.s32.totalorder %s38, 0
      %p189 = por %p187, %p188
      %s191 = sadd.s32 %s190, 1
      %p194 = scmp.eq.s32.totalorder %s32, 1
      %p195 = scmp.ne.s32.totalorder %s190, %s192
      %p196 = scmp.eq.s32.totalorder %s32, 0
      %p197 = por %p195, %p196
      %p198 = scmp.ne.s32.totalorder %s190, %s192
      %p199 = scmp.eq.s32.totalorder %s37, 1
      %p200 = por %p198, %p199
      %p201 = scmp.ne.s32.totalorder %s192, %s193
      %p202 = scmp.eq.s32.totalorder %s37, 0
      %p203 = por %p201, %p202
      %p204 = scmp.ne.s32.totalorder %s192, %s193
      %p205 = scmp.eq.s32.totalorder %s38, 1
      %p206 = por %p204, %p205
      %p208 = scmp.ne.s32.totalorder %s193, %s207
      %p209 = scmp.eq.s32.totalorder %s38, 0
      %p210 = por %p208, %p209
      %s212 = sadd.s32 %s211, 1
      %p215 = scmp.eq.s32.totalorder %s32, 1
      %p216 = scmp.ne.s32.totalorder %s211, %s213
      %p217 = scmp.eq.s32.totalorder %s32, 0
      %p218 = por %p216, %p217
      %p219 = scmp.ne.s32.totalorder %s211, %s213
      %p220 = scmp.eq.s32.totalorder %s37, 1
      %p221 = por %p219, %p220
      %p222 = scmp.ne.s32.totalorder %s213, %s214
      %p223 = scmp.eq.s32.totalorder %s37, 0
      %p224 = por %p222, %p223
      %p225 = scmp.ne.s32.totalorder %s213, %s214
      %p226 = scmp.eq.s32.totalorder %s38, 1
      %p227 = por %p225, %p226
      %p229 = scmp.ne.s32.totalorder %s214, %s228
      %p230 = scmp.eq.s32.totalorder %s38, 0
      %p231 = por %p229, %p230
      %s233 = sadd.s32 %s232, 1
      %p236 = scmp.eq.s32.totalorder %s32, 1
      %p237 = scmp.ne.s32.totalorder %s232, %s234
      %p238 = scmp.eq.s32.totalorder %s32, 0
      %p239 = por %p237, %p238
      %p240 = scmp.ne.s32.totalorder %s232, %s234
      %p241 = scmp.eq.s32.totalorder %s37, 1
      %p242 = por %p240, %p241
      %p243 = scmp.ne.s32.totalorder %s234, %s235
      %p244 = scmp.eq.s32.totalorder %s37, 0
      %p245 = por %p243, %p244
      %p246 = scmp.ne.s32.totalorder %s234, %s235
      %p247 = scmp.eq.s32.totalorder %s38, 1
      %p248 = por %p246, %p247
      %p250 = scmp.ne.s32.totalorder %s235, %s249
      %p251 = scmp.eq.s32.totalorder %s38, 0
      %p252 = por %p250, %p251
      %s254 = sadd.s32 %s253, 1
      %p257 = scmp.eq.s32.totalorder %s32, 1
      %p258 = scmp.ne.s32.totalorder %s253, %s255
      %p259 = scmp.eq.s32.totalorder %s32, 0
      %p260 = por %p258, %p259
      %p261 = scmp.ne.s32.totalorder %s253, %s255
      %p262 = scmp.eq.s32.totalorder %s37, 1
      %p263 = por %p261, %p262
      %p264 = scmp.ne.s32.totalorder %s255, %s256
      %p265 = scmp.eq.s32.totalorder %s37, 0
      %p266 = por %p264, %p265
      %p267 = scmp.ne.s32.totalorder %s255, %s256
      %p268 = scmp.eq.s32.totalorder %s38, 1
      %p269 = por %p267, %p268
      %p271 = scmp.ne.s32.totalorder %s256, %s270
      %p272 = scmp.eq.s32.totalorder %s38, 0
      %p273 = por %p271, %p272
      %s274 = ssub.s32 %s39, %s51
      %s275 = ssub.s32 %s40, %s47
      %s276 = sor.u32 %s274, %s275
      %p277 = scmp.eq.s32.totalorder %s276, 0
      %s279 = sadd.s32 %s278, 1
      %s280 = scalar_select %p277, %s278, %s279
      %p283 = pneg %p277
      %p284 = scmp.eq.s32.totalorder %s32, 1
      %p285 = por %p283, %p284
      %p286 = scmp.ne.s32.totalorder %s278, %s281
      %p287 = scmp.eq.s32.totalorder %s32, 0
      %p288 = por %p286, %p287
      %p289 = scmp.ne.s32.totalorder %s278, %s281
      %p290 = scmp.eq.s32.totalorder %s37, 1
      %p291 = por %p289, %p290
      %p292 = scmp.ne.s32.totalorder %s281, %s282
      %p293 = scmp.eq.s32.totalorder %s37, 0
      %p294 = por %p292, %p293
      %p295 = scmp.ne.s32.totalorder %s281, %s282
      %p296 = scmp.eq.s32.totalorder %s38, 1
      %p297 = por %p295, %p296
      %p299 = scmp.ne.s32.totalorder %s282, %s298
      %p300 = scmp.eq.s32.totalorder %s38, 0
      %p301 = por %p299, %p300
      %s302 = ssub.s32 %s39, %s51
      %s303 = ssub.s32 %s40, %s47
      %s304 = sor.u32 %s302, %s303
      %p305 = scmp.eq.s32.totalorder %s304, 0
      %s307 = sadd.s32 %s306, 1
      %s308 = scalar_select %p305, %s306, %s307
      %p311 = pneg %p305
      %p312 = scmp.eq.s32.totalorder %s32, 1
      %p313 = por %p311, %p312
      %p314 = scmp.ne.s32.totalorder %s306, %s309
      %p315 = scmp.eq.s32.totalorder %s32, 0
      %p316 = por %p314, %p315
      %p317 = scmp.ne.s32.totalorder %s306, %s309
      %p318 = scmp.eq.s32.totalorder %s37, 1
      %p319 = por %p317, %p318
      %p320 = scmp.ne.s32.totalorder %s309, %s310
      %p321 = scmp.eq.s32.totalorder %s37, 0
      %p322 = por %p320, %p321
      %p323 = scmp.ne.s32.totalorder %s309, %s310
      %p324 = scmp.eq.s32.totalorder %s38, 1
      %p325 = por %p323, %p324
      %p327 = scmp.ne.s32.totalorder %s310, %s326
      %p328 = scmp.eq.s32.totalorder %s38, 0
      %p329 = por %p327, %p328
      %p330 = scmp.le.s32.totalorder 1, %s32
      %p331 = scmp.lt.s32.totalorder %s32, 3
      %p332 = pnand %p330, %p331
      %p333 = pneg %p332
      // Predicated region
      $region9: #{tpu_custom_call.1} parent=5 // pred_check
        _
      $region10: #{tpu_custom_call.1} parent=5 // pred_check_branch
        %335 = sbr.rel (%p332) target = $region12
      $region11: #{tpu_custom_call.1} parent=5 // pred_region
        %s336 = ssub.s32 %s32, 1
        // Predicated region
        $region13: #{tpu_custom_call.1} parent=11 // pred_check
          %p337 = pneg %p119
        $region14: #{tpu_custom_call.1} parent=11 // pred_check_branch
          %339 = sbr.rel (%p337) target = $region16
        $region15: #{tpu_custom_call.1} parent=11 // pred_region
          %341 = vsyncadd [#allocation9], 0
          %s343 = sshll.u32 %s2, 4
          %s344 = int_to_ptr.hbm [resolvable:$true] %s343
          %s345 = sshll.u32 [#allocation10], 4
          %s346 = int_to_ptr.vmem [resolvable:$true] %s345
          %348 = dma.hbm_to_vmem [thread:$0]  %s344, 128, %s346, [#allocation9]
        $region16: #{tpu_custom_call.1} parent=11 // pred_fallthru
          _
        // Predicated region
        $region17: #{tpu_custom_call.1} parent=11 // pred_check
          %p349 = pneg %p140
        $region18: #{tpu_custom_call.1} parent=11 // pred_check_branch
          %351 = sbr.rel (%p349) target = $region20
        $region19: #{tpu_custom_call.1} parent=11 // pred_region
          _
        $region20: #{tpu_custom_call.1} parent=11 // pred_fallthru
          _
        // Predicated region
        $region21: #{tpu_custom_call.1} parent=11 // pred_check
          %p352 = pneg %p161
        $region22: #{tpu_custom_call.1} parent=11 // pred_check_branch
          %354 = sbr.rel (%p352) target = $region24
        $region23: #{tpu_custom_call.1} parent=11 // pred_region
          %356 = vsyncadd [#allocation12], 0
          %s358 = sshll.u32 %s4, 4
          %s359 = int_to_ptr.hbm [resolvable:$true] %s358
          %s360 = sshll.u32 [#allocation11], 4
          %s361 = int_to_ptr.vmem [resolvable:$true] %s360
          %363 = dma.hbm_to_vmem [thread:$0]  %s359, 128, %s361, [#allocation12]
        $region24: #{tpu_custom_call.1} parent=11 // pred_fallthru
          _
        // Predicated region
        $region25: #{tpu_custom_call.1} parent=11 // pred_check
          %p364 = pneg %p182
        $region26: #{tpu_custom_call.1} parent=11 // pred_check_branch
          %366 = sbr.rel (%p364) target = $region28
        $region27: #{tpu_custom_call.1} parent=11 // pred_region
          _
        $region28: #{tpu_custom_call.1} parent=11 // pred_fallthru
          _
        // Predicated region
        $region29: #{tpu_custom_call.1} parent=11 // pred_check
          %p367 = pneg %p203
        $region30: #{tpu_custom_call.1} parent=11 // pred_check_branch
          %369 = sbr.rel (%p367) target = $region32
        $region31: #{tpu_custom_call.1} parent=11 // pred_region
          _
        $region32: #{tpu_custom_call.1} parent=11 // pred_fallthru
          _
        // Predicated region
        $region33: #{tpu_custom_call.1} parent=11 // pred_check
          %p370 = pneg %p224
        $region34: #{tpu_custom_call.1} parent=11 // pred_check_branch
          %372 = sbr.rel (%p370) target = $region36
        $region35: #{tpu_custom_call.1} parent=11 // pred_region
          _
        $region36: #{tpu_custom_call.1} parent=11 // pred_fallthru
          _
        // Predicated region
        $region37: #{tpu_custom_call.1} parent=11 // pred_check
          %p373 = pneg %p245
        $region38: #{tpu_custom_call.1} parent=11 // pred_check_branch
          %375 = sbr.rel (%p373) target = $region40
        $region39: #{tpu_custom_call.1} parent=11 // pred_region
          _
        $region40: #{tpu_custom_call.1} parent=11 // pred_fallthru
          _
        // Predicated region
        $region41: #{tpu_custom_call.1} parent=11 // pred_check
          %p376 = pneg %p266
        $region42: #{tpu_custom_call.1} parent=11 // pred_check_branch
          %378 = sbr.rel (%p376) target = $region44
        $region43: #{tpu_custom_call.1} parent=11 // pred_region
          _
        $region44: #{tpu_custom_call.1} parent=11 // pred_fallthru
          _
      $region12: #{tpu_custom_call.1} parent=5 // pred_fallthru
        _
      %p379 = scmp.lt.s32.totalorder %s32, 2
      // Predicated region
      $region45: #{tpu_custom_call.1} parent=5 // pred_check
        %p380 = pneg %p379
      $region46: #{tpu_custom_call.1} parent=5 // pred_check_branch
        %382 = sbr.rel (%p380) target = $region48
      $region47: #{tpu_custom_call.1} parent=5 // pred_region
        // Predicated region
        $region49: #{tpu_custom_call.1} parent=47 // pred_check
          %p383 = pneg %p66
        $region50: #{tpu_custom_call.1} parent=47 // pred_check_branch
          %385 = sbr.rel (%p383) target = $region52
        $region51: #{tpu_custom_call.1} parent=47 // pred_region
          %s386 = sand.u32 %s56, 1
          %s387 = scalar_lea.sflag [#allocation6], %s386
          %s388 = sand.u32 %s56, 1
          %s389 = smul.addr %s388, 128
          %s390 = scalar_lea.vmem [#allocation5], %s389
          %s391 = smul.u32 2, %s40
          %393 = vsyncadd %s387, 0
          %s394 = smul.addr %s39, 16
          %s395 = sadd.s32 %s391, %s394
          %s396 = smul.addr %s395, 8
          %s397 = scalar_lea.hbm %s0, %s396
          %s398 = sshll.u32 %s397, 4
          %s399 = int_to_ptr.hbm [resolvable:$true] %s398
          %s400 = sshll.u32 %s390, 4
          %s401 = int_to_ptr.vmem [resolvable:$true] %s400
          %406 = dma.hbm_to_vmem [thread:$0]  %s399, 2048, %s401, %s387, 256, 256, 16
        $region52: #{tpu_custom_call.1} parent=47 // pred_fallthru
          _
        // Predicated region
        $region53: #{tpu_custom_call.1} parent=47 // pred_check
          %p407 = pneg %p92
        $region54: #{tpu_custom_call.1} parent=47 // pred_check_branch
          %409 = sbr.rel (%p407) target = $region56
        $region55: #{tpu_custom_call.1} parent=47 // pred_region
          %s410 = sand.u32 %s32, 1
          %s411 = scalar_lea.sflag [#allocation9], %s410
          %s412 = sand.u32 %s82, 1
          %s413 = smul.addr %s412, 128
          %s414 = scalar_lea.vmem [#allocation8], %s413
          %416 = vsyncadd %s411, 0
          %s417 = smul.addr %s39, 16
          %s418 = smul.addr %s417, 8
          %s419 = scalar_lea.hbm %s1, %s418
          %s420 = sshll.u32 %s419, 4
          %s421 = int_to_ptr.hbm [resolvable:$true] %s420
          %s422 = sshll.u32 %s414, 4
          %s423 = int_to_ptr.vmem [resolvable:$true] %s422
          %428 = dma.hbm_to_vmem [thread:$0]  %s421, 2048, %s423, %s411, 256, 256, 16
        $region56: #{tpu_custom_call.1} parent=47 // pred_fallthru
          _
      $region48: #{tpu_custom_call.1} parent=5 // pred_fallthru
        _
      %p429 = scmp.le.s32.totalorder 1, %s32
      %p430 = scmp.lt.s32.totalorder %s32, 3
      %p431 = pnand %p429, %p430
      %p432 = pneg %p431
      // Predicated region
      $region57: #{tpu_custom_call.1} parent=5 // pred_check
        _
      $region58: #{tpu_custom_call.1} parent=5 // pred_check_branch
        %434 = sbr.rel (%p431) target = $region60
      $region59: #{tpu_custom_call.1} parent=5 // pred_region
        %s435 = ssub.s32 %s32, 1
        %s436 = sand.u32 %s59, 1
        %s437 = scalar_lea.sflag [#allocation6], %s436
        %s438 = sand.u32 %s59, 1
        %s439 = smul.addr %s438, 128
        %s440 = scalar_lea.vmem [#allocation5], %s439
        // Predicated region
        $region61: #{tpu_custom_call.1} parent=59 // pred_check
          %p441 = pneg %p72
        $region62: #{tpu_custom_call.1} parent=59 // pred_check_branch
          %443 = sbr.rel (%p441) target = $region64
        $region63: #{tpu_custom_call.1} parent=59 // pred_region
          %445 = dma.done %s437, 2048
        $region64: #{tpu_custom_call.1} parent=59 // pred_fallthru
          _
        %s446 = sand.u32 %s37, 1
        %s447 = scalar_lea.sflag [#allocation9], %s446
        %s448 = sand.u32 %s85, 1
        %s449 = smul.addr %s448, 128
        %s450 = scalar_lea.vmem [#allocation8], %s449
        // Predicated region
        $region65: #{tpu_custom_call.1} parent=59 // pred_check
          %p451 = pneg %p98
        $region66: #{tpu_custom_call.1} parent=59 // pred_check_branch
          %453 = sbr.rel (%p451) target = $region68
        $region67: #{tpu_custom_call.1} parent=59 // pred_region
          %455 = dma.done %s447, 2048
        $region68: #{tpu_custom_call.1} parent=59 // pred_fallthru
          _
        // Predicated region
        $region69: #{tpu_custom_call.1} parent=59 // pred_check
          %p456 = pneg %p119
        $region70: #{tpu_custom_call.1} parent=59 // pred_check_branch
          %458 = sbr.rel (%p456) target = $region72
        $region71: #{tpu_custom_call.1} parent=59 // pred_region
          %460 = dma.done [#allocation9], 128
        $region72: #{tpu_custom_call.1} parent=59 // pred_fallthru
          _
        // Predicated region
        $region73: #{tpu_custom_call.1} parent=59 // pred_check
          %p461 = pneg %p161
        $region74: #{tpu_custom_call.1} parent=59 // pred_check_branch
          %463 = sbr.rel (%p461) target = $region76
        $region75: #{tpu_custom_call.1} parent=59 // pred_region
          %465 = dma.done [#allocation12], 128
        $region76: #{tpu_custom_call.1} parent=59 // pred_fallthru
          _
        %s466 = sand.u32 %s59, 1
        %s467 = scalar_lea.sflag [#allocation6], %s466
        %s468 = sand.u32 %s59, 1
        %s469 = smul.addr %s468, 128
        %s470 = scalar_lea.vmem [#allocation5], %s469
        %p471 = pneg %p72
        %p472 = pneg %p69
        %s473 = sand.u32 %s37, 1
        %s474 = scalar_lea.sflag [#allocation9], %s473
        %s475 = sand.u32 %s85, 1
        %s476 = smul.addr %s475, 128
        %s477 = scalar_lea.vmem [#allocation8], %s476
        %p478 = pneg %p98
        %p479 = pneg %p95
        %p480 = pneg %p119
        %p481 = pneg %p116
        %p482 = pneg %p140
        %p483 = pneg %p137
        %p484 = pneg %p161
        %p485 = pneg %p158
        %p486 = pneg %p182
        %p487 = pneg %p179
        %p488 = pneg %p203
        %p489 = pneg %p200
        %p490 = pneg %p224
        %p491 = pneg %p221
        %p492 = pneg %p245
        %p493 = pneg %p242
        %p494 = pneg %p266
        %p495 = pneg %p263
        %p496 = pneg %p294
        %p497 = pneg %p291
        %s498 = sand.u32 %s281, 1
        %s499 = scalar_lea.sflag [#allocation7], %s498
        %s500 = sand.u32 %s281, 1
        %s501 = smul.addr %s500, 128
        %s502 = scalar_lea.vmem [#allocation13], %s501
        %p503 = pneg %p322
        %p504 = pneg %p319
        %s505 = sand.u32 %s309, 1
        %s506 = scalar_lea.sflag [#allocation15], %s505
        %s507 = sand.u32 %s309, 1
        %s508 = smul.addr %s507, 256
        %s509 = scalar_lea.vmem [#allocation14], %s508
        %s510 = smul.u32 2, %s42
        %s511 = smul.u32 2, %s42
        %s512 = smul.u32 32, %s42
        %p513 = scmp.eq.s32.totalorder %s42, 0
        // Predicated region
        $region77: #{tpu_custom_call.1} parent=59 // pred_check
          %p514 = pneg %p513
        $region78: #{tpu_custom_call.1} parent=59 // pred_check_branch
          %516 = sbr.rel (%p514) target = $region80
        $region79: #{tpu_custom_call.1} parent=59 // pred_region
          %v517 = vld [vmem:[%s450] sm:$0xff]
          %v518 = vld [vmem:[%s450 + $0x8] sm:$0xff]
          %v519 = vld [vmem:[%s450 + $0x10] sm:$0xff]
          %v520 = vld [vmem:[%s450 + $0x18] sm:$0xff]
          %v521 = vld [vmem:[%s450 + $0x20] sm:$0xff]
          %v522 = vld [vmem:[%s450 + $0x28] sm:$0xff]
          %v523 = vld [vmem:[%s450 + $0x30] sm:$0xff]
          %v524 = vld [vmem:[%s450 + $0x38] sm:$0xff]
          %v525 = vld [vmem:[%s450 + $0x40] sm:$0xff]
          %v526 = vld [vmem:[%s450 + $0x48] sm:$0xff]
          %v527 = vld [vmem:[%s450 + $0x50] sm:$0xff]
          %v528 = vld [vmem:[%s450 + $0x58] sm:$0xff]
          %v529 = vld [vmem:[%s450 + $0x60] sm:$0xff]
          %v530 = vld [vmem:[%s450 + $0x68] sm:$0xff]
          %v531 = vld [vmem:[%s450 + $0x70] sm:$0xff]
          %v532 = vld [vmem:[%s450 + $0x78] sm:$0xff]
          %v533 = vld [vmem:[#allocation11] sm:$0xff]
          %v534 = vld [vmem:[%s5] sm:$0xff]
          %536 = vset.pattern.permute.xlu0 0
          %537 = vperm.xlu0 %536, %v534
          %v538 = vpop.permute.xlu0 %537
          %vm540 = vcmask 523264
          %v542 = vsel %vm540, %v533, 0
          %544 = vmatpush.msra.mxu0 0.0
          %545 = vmatpush.msra.mxu0 0.0
          %546 = vmatpush.msra.mxu0 0.0
          %547 = vmatpush.msra.mxu0 0.0
          %548 = vmatpush.msra.mxu0 0.0
          %549 = vmatpush.msra.mxu0 0.0
          %550 = vmatpush.msra.mxu0 0.0
          %551 = vmatpush.msra.mxu0 0.0
          %552 = vmatpush.msra.mxu0 %v531
          %553 = vmatpush.msra.mxu0 %v529
          %554 = vmatpush.msra.mxu0 %v527
          %555 = vmatpush.msra.mxu0 %v525
          %556 = vmatpush.msra.mxu0 %v523
          %557 = vmatpush.msra.mxu0 %v521
          %558 = vmatpush.msra.mxu0 %v519
          %559 = vmatpush.msra.mxu0 %v517
          %560 = vmatmul.f32.gmra.mxu0 %v542
          %v561 = vpop.f32.mrf.mxu0
          %v562 = vadd.f32 %v538, %v561
          %563 = vdwg.mxu0
          %564 = vmatpush.msra.mxu0 0.0
          %565 = vmatpush.msra.mxu0 0.0
          %566 = vmatpush.msra.mxu0 0.0
          %567 = vmatpush.msra.mxu0 0.0
          %568 = vmatpush.msra.mxu0 0.0
          %569 = vmatpush.msra.mxu0 0.0
          %570 = vmatpush.msra.mxu0 0.0
          %571 = vmatpush.msra.mxu0 0.0
          %572 = vmatpush.msra.mxu0 %v532
          %573 = vmatpush.msra.mxu0 %v530
          %574 = vmatpush.msra.mxu0 %v528
          %575 = vmatpush.msra.mxu0 %v526
          %576 = vmatpush.msra.mxu0 %v524
          %577 = vmatpush.msra.mxu0 %v522
          %578 = vmatpush.msra.mxu0 %v520
          %579 = vmatpush.msra.mxu0 %v518
          %580 = vmatmul.f32.gmra.mxu0 %v542
          %v581 = vpop.f32.mrf.mxu0
          %v582 = vadd.f32 %v538, %v581
          %583 = vdwg.mxu0
          %v584 = vld [vmem:[%s8] sm:$0xff]
          %v585 = vld [vmem:[%s8 + $0x8] sm:$0xff]
          %v586 = vadd.f32 %v562, %v584
          %v587 = vadd.f32 %v582, %v585
          %588 = vst [vmem:[#allocation2] sm:$0xff] %v586
          %589 = vst [vmem:[#allocation2 + $0x8] sm:$0xff] %v587
          %v590 = vld [vmem:[%s6] sm:$0xff]
          %v591 = vld [vmem:[%s6 + $0x8] sm:$0xff]
          %v592 = vld [vmem:[%s6 + $0x10] sm:$0xff]
          %v593 = vld [vmem:[%s6 + $0x18] sm:$0xff]
          %v594 = vld [vmem:[%s6 + $0x20] sm:$0xff]
          %v595 = vld [vmem:[%s6 + $0x28] sm:$0xff]
          %v596 = vld [vmem:[%s6 + $0x30] sm:$0xff]
          %v597 = vld [vmem:[%s6 + $0x38] sm:$0xff]
          %v598 = vld [vmem:[%s7] sm:$0xff]
          %v599 = vld [vmem:[%s7 + $0x8] sm:$0xff]
          %v600 = vld [vmem:[%s7 + $0x10] sm:$0xff]
          %v601 = vld [vmem:[%s7 + $0x18] sm:$0xff]
          %v602 = vld [vmem:[%s7 + $0x20] sm:$0xff]
          %v603 = vld [vmem:[%s7 + $0x28] sm:$0xff]
          %v604 = vld [vmem:[%s7 + $0x30] sm:$0xff]
          %v605 = vld [vmem:[%s7 + $0x38] sm:$0xff]
          %607 = vset.pattern.permute.xlu0 0
          %608 = vperm.xlu0 %607, %v598
          %v609 = vpop.permute.xlu0 %608
          %612 = vset.pattern.permute.xlu0 0
          %613 = vperm.xlu0 %612, %v599
          %v614 = vpop.permute.xlu0 %613
          %617 = vset.pattern.permute.xlu0 0
          %618 = vperm.xlu0 %617, %v600
          %v619 = vpop.permute.xlu0 %618
          %622 = vset.pattern.permute.xlu0 0
          %623 = vperm.xlu0 %622, %v601
          %v624 = vpop.permute.xlu0 %623
          %627 = vset.pattern.permute.xlu0 0
          %628 = vperm.xlu0 %627, %v602
          %v629 = vpop.permute.xlu0 %628
          %632 = vset.pattern.permute.xlu0 0
          %633 = vperm.xlu0 %632, %v603
          %v634 = vpop.permute.xlu0 %633
          %637 = vset.pattern.permute.xlu0 0
          %638 = vperm.xlu0 %637, %v604
          %v639 = vpop.permute.xlu0 %638
          %642 = vset.pattern.permute.xlu0 0
          %643 = vperm.xlu0 %642, %v605
          %v644 = vpop.permute.xlu0 %643
          %v647 = vsel %vm540, %v590, 0
          %v650 = vsel %vm540, %v591, 0
          %v653 = vsel %vm540, %v592, 0
          %v656 = vsel %vm540, %v593, 0
          %v659 = vsel %vm540, %v594, 0
          %v662 = vsel %vm540, %v595, 0
          %v665 = vsel %vm540, %v596, 0
          %v668 = vsel %vm540, %v597, 0
          %670 = vmatpush.msra.mxu0 0.0
          %671 = vmatpush.msra.mxu0 0.0
          %672 = vmatpush.msra.mxu0 0.0
          %673 = vmatpush.msra.mxu0 0.0
          %674 = vmatpush.msra.mxu0 0.0
          %675 = vmatpush.msra.mxu0 0.0
          %676 = vmatpush.msra.mxu0 0.0
          %677 = vmatpush.msra.mxu0 0.0
          %678 = vmatpush.msra.mxu0 %v531
          %679 = vmatpush.msra.mxu0 %v529
          %680 = vmatpush.msra.mxu0 %v527
          %681 = vmatpush.msra.mxu0 %v525
          %682 = vmatpush.msra.mxu0 %v523
          %683 = vmatpush.msra.mxu0 %v521
          %684 = vmatpush.msra.mxu0 %v519
          %685 = vmatpush.msra.mxu0 %v517
          %686 = vmatmul.f32.gmra.mxu0 %v647
          %v687 = vpop.f32.mrf.mxu0
          %v688 = vadd.f32 %v609, %v687
          %689 = vmatmul.f32.gmra.mxu0 %v650
          %v690 = vpop.f32.mrf.mxu0
          %v691 = vadd.f32 %v614, %v690
          %692 = vmatmul.f32.gmra.mxu0 %v653
          %v693 = vpop.f32.mrf.mxu0
          %v694 = vadd.f32 %v619, %v693
          %695 = vmatmul.f32.gmra.mxu0 %v656
          %v696 = vpop.f32.mrf.mxu0
          %v697 = vadd.f32 %v624, %v696
          %698 = vmatmul.f32.gmra.mxu0 %v659
          %v699 = vpop.f32.mrf.mxu0
          %v700 = vadd.f32 %v629, %v699
          %701 = vmatmul.f32.gmra.mxu0 %v662
          %v702 = vpop.f32.mrf.mxu0
          %v703 = vadd.f32 %v634, %v702
          %704 = vmatmul.f32.gmra.mxu0 %v665
          %v705 = vpop.f32.mrf.mxu0
          %v706 = vadd.f32 %v639, %v705
          %707 = vmatmul.f32.gmra.mxu0 %v668
          %v708 = vpop.f32.mrf.mxu0
          %v709 = vadd.f32 %v644, %v708
          %710 = vdwg.mxu0
          %711 = vmatpush.msra.mxu0 0.0
          %712 = vmatpush.msra.mxu0 0.0
          %713 = vmatpush.msra.mxu0 0.0
          %714 = vmatpush.msra.mxu0 0.0
          %715 = vmatpush.msra.mxu0 0.0
          %716 = vmatpush.msra.mxu0 0.0
          %717 = vmatpush.msra.mxu0 0.0
          %718 = vmatpush.msra.mxu0 0.0
          %719 = vmatpush.msra.mxu0 %v532
          %720 = vmatpush.msra.mxu0 %v530
          %721 = vmatpush.msra.mxu0 %v528
          %722 = vmatpush.msra.mxu0 %v526
          %723 = vmatpush.msra.mxu0 %v524
          %724 = vmatpush.msra.mxu0 %v522
          %725 = vmatpush.msra.mxu0 %v520
          %726 = vmatpush.msra.mxu0 %v518
          %727 = vmatmul.f32.gmra.mxu0 %v647
          %v728 = vpop.f32.mrf.mxu0
          %v729 = vadd.f32 %v609, %v728
          %730 = vmatmul.f32.gmra.mxu0 %v650
          %v731 = vpop.f32.mrf.mxu0
          %v732 = vadd.f32 %v614, %v731
          %733 = vmatmul.f32.gmra.mxu0 %v653
          %v734 = vpop.f32.mrf.mxu0
          %v735 = vadd.f32 %v619, %v734
          %736 = vmatmul.f32.gmra.mxu0 %v656
          %v737 = vpop.f32.mrf.mxu0
          %v738 = vadd.f32 %v624, %v737
          %739 = vmatmul.f32.gmra.mxu0 %v659
          %v740 = vpop.f32.mrf.mxu0
          %v741 = vadd.f32 %v629, %v740
          %742 = vmatmul.f32.gmra.mxu0 %v662
          %v743 = vpop.f32.mrf.mxu0
          %v744 = vadd.f32 %v634, %v743
          %745 = vmatmul.f32.gmra.mxu0 %v665
          %v746 = vpop.f32.mrf.mxu0
          %v747 = vadd.f32 %v639, %v746
          %748 = vmatmul.f32.gmra.mxu0 %v668
          %v749 = vpop.f32.mrf.mxu0
          %v750 = vadd.f32 %v644, %v749
          %751 = vdwg.mxu0
          %v752 = vpack.c.bf16 %v729, %v688
          %v753 = vpack.c.bf16 %v732, %v691
          %v754 = vpack.c.bf16 %v735, %v694
          %v755 = vpack.c.bf16 %v738, %v697
          %v756 = vpack.c.bf16 %v741, %v700
          %v757 = vpack.c.bf16 %v744, %v703
          %v758 = vpack.c.bf16 %v747, %v706
          %v759 = vpack.c.bf16 %v750, %v709
          %760 = vst [vmem:[#allocation3] sm:$0xff] %v752
          %761 = vst [vmem:[#allocation3 + $0x8] sm:$0xff] %v753
          %762 = vst [vmem:[#allocation3 + $0x10] sm:$0xff] %v754
          %763 = vst [vmem:[#allocation3 + $0x18] sm:$0xff] %v755
          %764 = vst [vmem:[#allocation3 + $0x20] sm:$0xff] %v756
          %765 = vst [vmem:[#allocation3 + $0x28] sm:$0xff] %v757
          %766 = vst [vmem:[#allocation3 + $0x30] sm:$0xff] %v758
          %767 = vst [vmem:[#allocation3 + $0x38] sm:$0xff] %v759
        $region80: #{tpu_custom_call.1} parent=59 // pred_fallthru
          _
        %v768 = vld [vmem:[%s440] sm:$0xff]
        %v769 = vld [vmem:[%s440 + $0x8] sm:$0xff]
        %v770 = vld [vmem:[%s440 + $0x10] sm:$0xff]
        %v771 = vld [vmem:[%s440 + $0x18] sm:$0xff]
        %v772 = vld [vmem:[%s440 + $0x20] sm:$0xff]
        %v773 = vld [vmem:[%s440 + $0x28] sm:$0xff]
        %v774 = vld [vmem:[%s440 + $0x30] sm:$0xff]
        %v775 = vld [vmem:[%s440 + $0x38] sm:$0xff]
        %v776 = vld [vmem:[%s440 + $0x40] sm:$0xff]
        %v777 = vld [vmem:[%s440 + $0x48] sm:$0xff]
        %v778 = vld [vmem:[%s440 + $0x50] sm:$0xff]
        %v779 = vld [vmem:[%s440 + $0x58] sm:$0xff]
        %v780 = vld [vmem:[%s440 + $0x60] sm:$0xff]
        %v781 = vld [vmem:[%s440 + $0x68] sm:$0xff]
        %v782 = vld [vmem:[%s440 + $0x70] sm:$0xff]
        %v783 = vld [vmem:[%s440 + $0x78] sm:$0xff]
        %v784 = vld [vmem:[#allocation10] sm:$0xff]
        %v785 = vld [vmem:[%s3] sm:$0xff]
        %787 = vset.pattern.permute.xlu0 0
        %788 = vperm.xlu0 %787, %v785
        %v789 = vpop.permute.xlu0 %788
        %vm791 = vcmask 523264
        %v793 = vsel %vm791, %v784, 0
        %795 = vmatpush.msra.mxu0 0.0
        %796 = vmatpush.msra.mxu0 0.0
        %797 = vmatpush.msra.mxu0 0.0
        %798 = vmatpush.msra.mxu0 0.0
        %799 = vmatpush.msra.mxu0 0.0
        %800 = vmatpush.msra.mxu0 0.0
        %801 = vmatpush.msra.mxu0 0.0
        %802 = vmatpush.msra.mxu0 0.0
        %803 = vmatpush.msra.mxu0 %v782
        %804 = vmatpush.msra.mxu0 %v780
        %805 = vmatpush.msra.mxu0 %v778
        %806 = vmatpush.msra.mxu0 %v776
        %807 = vmatpush.msra.mxu0 %v774
        %808 = vmatpush.msra.mxu0 %v772
        %809 = vmatpush.msra.mxu0 %v770
        %810 = vmatpush.msra.mxu0 %v768
        %811 = vmatmul.f32.gmra.mxu0 %v793
        %v812 = vpop.f32.mrf.mxu0
        %v813 = vadd.f32 %v789, %v812
        %814 = vdwg.mxu0
        %815 = vmatpush.msra.mxu0 0.0
        %816 = vmatpush.msra.mxu0 0.0
        %817 = vmatpush.msra.mxu0 0.0
        %818 = vmatpush.msra.mxu0 0.0
        %819 = vmatpush.msra.mxu0 0.0
        %820 = vmatpush.msra.mxu0 0.0
        %821 = vmatpush.msra.mxu0 0.0
        %822 = vmatpush.msra.mxu0 0.0
        %823 = vmatpush.msra.mxu0 %v783
        %824 = vmatpush.msra.mxu0 %v781
        %825 = vmatpush.msra.mxu0 %v779
        %826 = vmatpush.msra.mxu0 %v777
        %827 = vmatpush.msra.mxu0 %v775
        %828 = vmatpush.msra.mxu0 %v773
        %829 = vmatpush.msra.mxu0 %v771
        %830 = vmatpush.msra.mxu0 %v769
        %831 = vmatmul.f32.gmra.mxu0 %v793
        %v832 = vpop.f32.mrf.mxu0
        %v833 = vadd.f32 %v789, %v832
        %834 = vdwg.mxu0
        %v835 = vld [vmem:[#allocation2] sm:$0xff]
        %v836 = vld [vmem:[#allocation2 + $0x8] sm:$0xff]
        %837 = vxpose.xlu0.b32.start [1/16] %v813, 128
        %838 = vxpose.xlu0.b32.cont [2/16] 0.0, 128
        %839 = vxpose.xlu0.b32.cont [3/16] 0.0, 128
        %840 = vxpose.xlu0.b32.cont [4/16] 0.0, 128
        %841 = vxpose.xlu0.b32.cont [5/16] 0.0, 128
        %842 = vxpose.xlu0.b32.cont [6/16] 0.0, 128
        %843 = vxpose.xlu0.b32.cont [7/16] 0.0, 128
        %844 = vxpose.xlu0.b32.cont [8/16] 0.0, 128
        %845 = vxpose.xlu0.b32.cont [9/16] 0.0, 128
        %846 = vxpose.xlu0.b32.cont [10/16] 0.0, 128
        %847 = vxpose.xlu0.b32.cont [11/16] 0.0, 128
        %848 = vxpose.xlu0.b32.cont [12/16] 0.0, 128
        %849 = vxpose.xlu0.b32.cont [13/16] 0.0, 128
        %850 = vxpose.xlu0.b32.cont [14/16] 0.0, 128
        %851 = vxpose.xlu0.b32.cont [15/16] 0.0, 128
        %852 = vxpose.xlu0.b32.end [16/16] 0.0, 128
        %v853 = vpop.trf.xlu0
        %v854 = vpop.trf.xlu0
        %v855 = vpop.trf.xlu0
        %v856 = vpop.trf.xlu0
        %v857 = vpop.trf.xlu0
        %v858 = vpop.trf.xlu0
        %v859 = vpop.trf.xlu0
        %v860 = vpop.trf.xlu0
        %v861 = vpop.trf.xlu0
        %v862 = vpop.trf.xlu0
        %v863 = vpop.trf.xlu0
        %v864 = vpop.trf.xlu0
        %v865 = vpop.trf.xlu0
        %v866 = vpop.trf.xlu0
        %v867 = vpop.trf.xlu0
        %v868 = vpop.trf.xlu0
        %869 = vxpose.xlu0.b32.start [1/16] %v833, 128
        %870 = vxpose.xlu0.b32.cont [2/16] 0.0, 128
        %871 = vxpose.xlu0.b32.cont [3/16] 0.0, 128
        %872 = vxpose.xlu0.b32.cont [4/16] 0.0, 128
        %873 = vxpose.xlu0.b32.cont [5/16] 0.0, 128
        %874 = vxpose.xlu0.b32.cont [6/16] 0.0, 128
        %875 = vxpose.xlu0.b32.cont [7/16] 0.0, 128
        %876 = vxpose.xlu0.b32.cont [8/16] 0.0, 128
        %877 = vxpose.xlu0.b32.cont [9/16] 0.0, 128
        %878 = vxpose.xlu0.b32.cont [10/16] 0.0, 128
        %879 = vxpose.xlu0.b32.cont [11/16] 0.0, 128
        %880 = vxpose.xlu0.b32.cont [12/16] 0.0, 128
        %881 = vxpose.xlu0.b32.cont [13/16] 0.0, 128
        %882 = vxpose.xlu0.b32.cont [14/16] 0.0, 128
        %883 = vxpose.xlu0.b32.cont [15/16] 0.0, 128
        %884 = vxpose.xlu0.b32.end [16/16] 0.0, 128
        %v885 = vpop.trf.xlu0
        %v886 = vpop.trf.xlu0
        %v887 = vpop.trf.xlu0
        %v888 = vpop.trf.xlu0
        %v889 = vpop.trf.xlu0
        %v890 = vpop.trf.xlu0
        %v891 = vpop.trf.xlu0
        %v892 = vpop.trf.xlu0
        %v893 = vpop.trf.xlu0
        %v894 = vpop.trf.xlu0
        %v895 = vpop.trf.xlu0
        %v896 = vpop.trf.xlu0
        %v897 = vpop.trf.xlu0
        %v898 = vpop.trf.xlu0
        %v899 = vpop.trf.xlu0
        %v900 = vpop.trf.xlu0
        %vm901 = vcmask 64512
        %v903 = vsel %vm901, %v853, 0
        %v906 = vsel %vm901, %v854, 0
        %v909 = vsel %vm901, %v855, 0
        %v912 = vsel %vm901, %v856, 0
        %v915 = vsel %vm901, %v857, 0
        %v918 = vsel %vm901, %v858, 0
        %v921 = vsel %vm901, %v859, 0
        %v924 = vsel %vm901, %v860, 0
        %v927 = vsel %vm901, %v861, 0
        %v930 = vsel %vm901, %v862, 0
        %v933 = vsel %vm901, %v863, 0
        %v936 = vsel %vm901, %v864, 0
        %v939 = vsel %vm901, %v865, 0
        %v942 = vsel %vm901, %v866, 0
        %v945 = vsel %vm901, %v867, 0
        %v948 = vsel %vm901, %v868, 0
        %v951 = vsel %vm901, %v885, 0
        %v954 = vsel %vm901, %v886, 0
        %v957 = vsel %vm901, %v887, 0
        %v960 = vsel %vm901, %v888, 0
        %v963 = vsel %vm901, %v889, 0
        %v966 = vsel %vm901, %v890, 0
        %v969 = vsel %vm901, %v891, 0
        %v972 = vsel %vm901, %v892, 0
        %v975 = vsel %vm901, %v893, 0
        %v978 = vsel %vm901, %v894, 0
        %v981 = vsel %vm901, %v895, 0
        %v984 = vsel %vm901, %v896, 0
        %v987 = vsel %vm901, %v897, 0
        %v990 = vsel %vm901, %v898, 0
        %v993 = vsel %vm901, %v899, 0
        %v996 = vsel %vm901, %v900, 0
        %998 = vmatpush.msra.mxu0 0.0
        %999 = vmatpush.msra.mxu0 0.0
        %1000 = vmatpush.msra.mxu0 0.0
        %1001 = vmatpush.msra.mxu0 0.0
        %1002 = vmatpush.msra.mxu0 0.0
        %1003 = vmatpush.msra.mxu0 0.0
        %1004 = vmatpush.msra.mxu0 0.0
        %1005 = vmatpush.msra.mxu0 0.0
        %1006 = vmatpush.msra.mxu0 0.0
        %1007 = vmatpush.msra.mxu0 0.0
        %1008 = vmatpush.msra.mxu0 0.0
        %1009 = vmatpush.msra.mxu0 0.0
        %1010 = vmatpush.msra.mxu0 0.0
        %1011 = vmatpush.msra.mxu0 0.0
        %1012 = vmatpush.msra.mxu0 0.0
        %1013 = vmatpush.msra.mxu0 %v835
        %1014 = vmatmul.f32.gmra.mxu0 %v903
        %v1015 = vpop.f32.mrf.mxu0
        %v1016 = vadd.f32 0.0, %v1015
        %1017 = vmatmul.f32.gmra.mxu0 %v906
        %v1018 = vpop.f32.mrf.mxu0
        %v1019 = vadd.f32 0.0, %v1018
        %1020 = vmatmul.f32.gmra.mxu0 %v909
        %v1021 = vpop.f32.mrf.mxu0
        %v1022 = vadd.f32 0.0, %v1021
        %1023 = vmatmul.f32.gmra.mxu0 %v912
        %v1024 = vpop.f32.mrf.mxu0
        %v1025 = vadd.f32 0.0, %v1024
        %1026 = vmatmul.f32.gmra.mxu0 %v915
        %v1027 = vpop.f32.mrf.mxu0
        %v1028 = vadd.f32 0.0, %v1027
        %1029 = vmatmul.f32.gmra.mxu0 %v918
        %v1030 = vpop.f32.mrf.mxu0
        %v1031 = vadd.f32 0.0, %v1030
        %1032 = vmatmul.f32.gmra.mxu0 %v921
        %v1033 = vpop.f32.mrf.mxu0
        %v1034 = vadd.f32 0.0, %v1033
        %1035 = vmatmul.f32.gmra.mxu0 %v924
        %v1036 = vpop.f32.mrf.mxu0
        %v1037 = vadd.f32 0.0, %v1036
        %1038 = vmatmul.f32.gmra.mxu0 %v927
        %v1039 = vpop.f32.mrf.mxu0
        %v1040 = vadd.f32 0.0, %v1039
        %1041 = vmatmul.f32.gmra.mxu0 %v930
        %v1042 = vpop.f32.mrf.mxu0
        %v1043 = vadd.f32 0.0, %v1042
        %1044 = vmatmul.f32.gmra.mxu0 %v933
        %v1045 = vpop.f32.mrf.mxu0
        %v1046 = vadd.f32 0.0, %v1045
        %1047 = vmatmul.f32.gmra.mxu0 %v936
        %v1048 = vpop.f32.mrf.mxu0
        %v1049 = vadd.f32 0.0, %v1048
        %1050 = vmatmul.f32.gmra.mxu0 %v939
        %v1051 = vpop.f32.mrf.mxu0
        %v1052 = vadd.f32 0.0, %v1051
        %1053 = vmatmul.f32.gmra.mxu0 %v942
        %v1054 = vpop.f32.mrf.mxu0
        %v1055 = vadd.f32 0.0, %v1054
        %1056 = vmatmul.f32.gmra.mxu0 %v945
        %v1057 = vpop.f32.mrf.mxu0
        %v1058 = vadd.f32 0.0, %v1057
        %1059 = vmatmul.f32.gmra.mxu0 %v948
        %v1060 = vpop.f32.mrf.mxu0
        %v1061 = vadd.f32 0.0, %v1060
        %1062 = vmatmul.f32.gmra.mxu0 %v951
        %v1063 = vpop.f32.mrf.mxu0
        %v1064 = vadd.f32 0.0, %v1063
        %1065 = vmatmul.f32.gmra.mxu0 %v954
        %v1066 = vpop.f32.mrf.mxu0
        %v1067 = vadd.f32 0.0, %v1066
        %1068 = vmatmul.f32.gmra.mxu0 %v957
        %v1069 = vpop.f32.mrf.mxu0
        %v1070 = vadd.f32 0.0, %v1069
        %1071 = vmatmul.f32.gmra.mxu0 %v960
        %v1072 = vpop.f32.mrf.mxu0
        %v1073 = vadd.f32 0.0, %v1072
        %1074 = vmatmul.f32.gmra.mxu0 %v963
        %v1075 = vpop.f32.mrf.mxu0
        %v1076 = vadd.f32 0.0, %v1075
        %1077 = vmatmul.f32.gmra.mxu0 %v966
        %v1078 = vpop.f32.mrf.mxu0
        %v1079 = vadd.f32 0.0, %v1078
        %1080 = vmatmul.f32.gmra.mxu0 %v969
        %v1081 = vpop.f32.mrf.mxu0
        %v1082 = vadd.f32 0.0, %v1081
        %1083 = vmatmul.f32.gmra.mxu0 %v972
        %v1084 = vpop.f32.mrf.mxu0
        %v1085 = vadd.f32 0.0, %v1084
        %1086 = vmatmul.f32.gmra.mxu0 %v975
        %v1087 = vpop.f32.mrf.mxu0
        %v1088 = vadd.f32 0.0, %v1087
        %1089 = vmatmul.f32.gmra.mxu0 %v978
        %v1090 = vpop.f32.mrf.mxu0
        %v1091 = vadd.f32 0.0, %v1090
        %1092 = vmatmul.f32.gmra.mxu0 %v981
        %v1093 = vpop.f32.mrf.mxu0
        %v1094 = vadd.f32 0.0, %v1093
        %1095 = vmatmul.f32.gmra.mxu0 %v984
        %v1096 = vpop.f32.mrf.mxu0
        %v1097 = vadd.f32 0.0, %v1096
        %1098 = vmatmul.f32.gmra.mxu0 %v987
        %v1099 = vpop.f32.mrf.mxu0
        %v1100 = vadd.f32 0.0, %v1099
        %1101 = vmatmul.f32.gmra.mxu0 %v990
        %v1102 = vpop.f32.mrf.mxu0
        %v1103 = vadd.f32 0.0, %v1102
        %1104 = vmatmul.f32.gmra.mxu0 %v993
        %v1105 = vpop.f32.mrf.mxu0
        %v1106 = vadd.f32 0.0, %v1105
        %1107 = vmatmul.f32.gmra.mxu0 %v996
        %v1108 = vpop.f32.mrf.mxu0
        %v1109 = vadd.f32 0.0, %v1108
        %1110 = vdwg.mxu0
        %1111 = vmatpush.msra.mxu0 0.0
        %1112 = vmatpush.msra.mxu0 0.0
        %1113 = vmatpush.msra.mxu0 0.0
        %1114 = vmatpush.msra.mxu0 0.0
        %1115 = vmatpush.msra.mxu0 0.0
        %1116 = vmatpush.msra.mxu0 0.0
        %1117 = vmatpush.msra.mxu0 0.0
        %1118 = vmatpush.msra.mxu0 0.0
        %1119 = vmatpush.msra.mxu0 0.0
        %1120 = vmatpush.msra.mxu0 0.0
        %1121 = vmatpush.msra.mxu0 0.0
        %1122 = vmatpush.msra.mxu0 0.0
        %1123 = vmatpush.msra.mxu0 0.0
        %1124 = vmatpush.msra.mxu0 0.0
        %1125 = vmatpush.msra.mxu0 0.0
        %1126 = vmatpush.msra.mxu0 %v836
        %1127 = vmatmul.f32.gmra.mxu0 %v903
        %v1128 = vpop.f32.mrf.mxu0
        %v1129 = vadd.f32 0.0, %v1128
        %1130 = vmatmul.f32.gmra.mxu0 %v906
        %v1131 = vpop.f32.mrf.mxu0
        %v1132 = vadd.f32 0.0, %v1131
        %1133 = vmatmul.f32.gmra.mxu0 %v909
        %v1134 = vpop.f32.mrf.mxu0
        %v1135 = vadd.f32 0.0, %v1134
        %1136 = vmatmul.f32.gmra.mxu0 %v912
        %v1137 = vpop.f32.mrf.mxu0
        %v1138 = vadd.f32 0.0, %v1137
        %1139 = vmatmul.f32.gmra.mxu0 %v915
        %v1140 = vpop.f32.mrf.mxu0
        %v1141 = vadd.f32 0.0, %v1140
        %1142 = vmatmul.f32.gmra.mxu0 %v918
        %v1143 = vpop.f32.mrf.mxu0
        %v1144 = vadd.f32 0.0, %v1143
        %1145 = vmatmul.f32.gmra.mxu0 %v921
        %v1146 = vpop.f32.mrf.mxu0
        %v1147 = vadd.f32 0.0, %v1146
        %1148 = vmatmul.f32.gmra.mxu0 %v924
        %v1149 = vpop.f32.mrf.mxu0
        %v1150 = vadd.f32 0.0, %v1149
        %1151 = vmatmul.f32.gmra.mxu0 %v927
        %v1152 = vpop.f32.mrf.mxu0
        %v1153 = vadd.f32 0.0, %v1152
        %1154 = vmatmul.f32.gmra.mxu0 %v930
        %v1155 = vpop.f32.mrf.mxu0
        %v1156 = vadd.f32 0.0, %v1155
        %1157 = vmatmul.f32.gmra.mxu0 %v933
        %v1158 = vpop.f32.mrf.mxu0
        %v1159 = vadd.f32 0.0, %v1158
        %1160 = vmatmul.f32.gmra.mxu0 %v936
        %v1161 = vpop.f32.mrf.mxu0
        %v1162 = vadd.f32 0.0, %v1161
        %1163 = vmatmul.f32.gmra.mxu0 %v939
        %v1164 = vpop.f32.mrf.mxu0
        %v1165 = vadd.f32 0.0, %v1164
        %1166 = vmatmul.f32.gmra.mxu0 %v942
        %v1167 = vpop.f32.mrf.mxu0
        %v1168 = vadd.f32 0.0, %v1167
        %1169 = vmatmul.f32.gmra.mxu0 %v945
        %v1170 = vpop.f32.mrf.mxu0
        %v1171 = vadd.f32 0.0, %v1170
        %1172 = vmatmul.f32.gmra.mxu0 %v948
        %v1173 = vpop.f32.mrf.mxu0
        %v1174 = vadd.f32 0.0, %v1173
        %1175 = vmatmul.f32.gmra.mxu0 %v951
        %v1176 = vpop.f32.mrf.mxu0
        %v1177 = vadd.f32 0.0, %v1176
        %1178 = vmatmul.f32.gmra.mxu0 %v954
        %v1179 = vpop.f32.mrf.mxu0
        %v1180 = vadd.f32 0.0, %v1179
        %1181 = vmatmul.f32.gmra.mxu0 %v957
        %v1182 = vpop.f32.mrf.mxu0
        %v1183 = vadd.f32 0.0, %v1182
        %1184 = vmatmul.f32.gmra.mxu0 %v960
        %v1185 = vpop.f32.mrf.mxu0
        %v1186 = vadd.f32 0.0, %v1185
        %1187 = vmatmul.f32.gmra.mxu0 %v963
        %v1188 = vpop.f32.mrf.mxu0
        %v1189 = vadd.f32 0.0, %v1188
        %1190 = vmatmul.f32.gmra.mxu0 %v966
        %v1191 = vpop.f32.mrf.mxu0
        %v1192 = vadd.f32 0.0, %v1191
        %1193 = vmatmul.f32.gmra.mxu0 %v969
        %v1194 = vpop.f32.mrf.mxu0
        %v1195 = vadd.f32 0.0, %v1194
        %1196 = vmatmul.f32.gmra.mxu0 %v972
        %v1197 = vpop.f32.mrf.mxu0
        %v1198 = vadd.f32 0.0, %v1197
        %1199 = vmatmul.f32.gmra.mxu0 %v975
        %v1200 = vpop.f32.mrf.mxu0
        %v1201 = vadd.f32 0.0, %v1200
        %1202 = vmatmul.f32.gmra.mxu0 %v978
        %v1203 = vpop.f32.mrf.mxu0
        %v1204 = vadd.f32 0.0, %v1203
        %1205 = vmatmul.f32.gmra.mxu0 %v981
        %v1206 = vpop.f32.mrf.mxu0
        %v1207 = vadd.f32 0.0, %v1206
        %1208 = vmatmul.f32.gmra.mxu0 %v984
        %v1209 = vpop.f32.mrf.mxu0
        %v1210 = vadd.f32 0.0, %v1209
        %1211 = vmatmul.f32.gmra.mxu0 %v987
        %v1212 = vpop.f32.mrf.mxu0
        %v1213 = vadd.f32 0.0, %v1212
        %1214 = vmatmul.f32.gmra.mxu0 %v990
        %v1215 = vpop.f32.mrf.mxu0
        %v1216 = vadd.f32 0.0, %v1215
        %1217 = vmatmul.f32.gmra.mxu0 %v993
        %v1218 = vpop.f32.mrf.mxu0
        %v1219 = vadd.f32 0.0, %v1218
        %1220 = vmatmul.f32.gmra.mxu0 %v996
        %v1221 = vpop.f32.mrf.mxu0
        %v1222 = vadd.f32 0.0, %v1221
        %1223 = vdwg.mxu0
        %v1224 = vmax.f32 %v1016, %v1129
        %1225 = vmax.xlane.f32.xlu0 %v1224
        %v1226 = vpop.xlane.xlu0 %1225
        %v1227 = vmax.f32 %v1019, %v1132
        %1228 = vmax.xlane.f32.xlu0 %v1227
        %v1229 = vpop.xlane.xlu0 %1228
        %v1230 = vmax.f32 %v1022, %v1135
        %1231 = vmax.xlane.f32.xlu0 %v1230
        %v1232 = vpop.xlane.xlu0 %1231
        %v1233 = vmax.f32 %v1025, %v1138
        %1234 = vmax.xlane.f32.xlu0 %v1233
        %v1235 = vpop.xlane.xlu0 %1234
        %v1236 = vmax.f32 %v1028, %v1141
        %1237 = vmax.xlane.f32.xlu0 %v1236
        %v1238 = vpop.xlane.xlu0 %1237
        %v1239 = vmax.f32 %v1031, %v1144
        %1240 = vmax.xlane.f32.xlu0 %v1239
        %v1241 = vpop.xlane.xlu0 %1240
        %v1242 = vmax.f32 %v1034, %v1147
        %1243 = vmax.xlane.f32.xlu0 %v1242
        %v1244 = vpop.xlane.xlu0 %1243
        %v1245 = vmax.f32 %v1037, %v1150
        %1246 = vmax.xlane.f32.xlu0 %v1245
        %v1247 = vpop.xlane.xlu0 %1246
        %v1248 = vmax.f32 %v1040, %v1153
        %1249 = vmax.xlane.f32.xlu0 %v1248
        %v1250 = vpop.xlane.xlu0 %1249
        %v1251 = vmax.f32 %v1043, %v1156
        %1252 = vmax.xlane.f32.xlu0 %v1251
        %v1253 = vpop.xlane.xlu0 %1252
        %v1254 = vmax.f32 %v1046, %v1159
        %1255 = vmax.xlane.f32.xlu0 %v1254
        %v1256 = vpop.xlane.xlu0 %1255
        %v1257 = vmax.f32 %v1049, %v1162
        %1258 = vmax.xlane.f32.xlu0 %v1257
        %v1259 = vpop.xlane.xlu0 %1258
        %v1260 = vmax.f32 %v1052, %v1165
        %1261 = vmax.xlane.f32.xlu0 %v1260
        %v1262 = vpop.xlane.xlu0 %1261
        %v1263 = vmax.f32 %v1055, %v1168
        %1264 = vmax.xlane.f32.xlu0 %v1263
        %v1265 = vpop.xlane.xlu0 %1264
        %v1266 = vmax.f32 %v1058, %v1171
        %1267 = vmax.xlane.f32.xlu0 %v1266
        %v1268 = vpop.xlane.xlu0 %1267
        %v1269 = vmax.f32 %v1061, %v1174
        %1270 = vmax.xlane.f32.xlu0 %v1269
        %v1271 = vpop.xlane.xlu0 %1270
        %v1272 = vmax.f32 %v1064, %v1177
        %1273 = vmax.xlane.f32.xlu0 %v1272
        %v1274 = vpop.xlane.xlu0 %1273
        %v1275 = vmax.f32 %v1067, %v1180
        %1276 = vmax.xlane.f32.xlu0 %v1275
        %v1277 = vpop.xlane.xlu0 %1276
        %v1278 = vmax.f32 %v1070, %v1183
        %1279 = vmax.xlane.f32.xlu0 %v1278
        %v1280 = vpop.xlane.xlu0 %1279
        %v1281 = vmax.f32 %v1073, %v1186
        %1282 = vmax.xlane.f32.xlu0 %v1281
        %v1283 = vpop.xlane.xlu0 %1282
        %v1284 = vmax.f32 %v1076, %v1189
        %1285 = vmax.xlane.f32.xlu0 %v1284
        %v1286 = vpop.xlane.xlu0 %1285
        %v1287 = vmax.f32 %v1079, %v1192
        %1288 = vmax.xlane.f32.xlu0 %v1287
        %v1289 = vpop.xlane.xlu0 %1288
        %v1290 = vmax.f32 %v1082, %v1195
        %1291 = vmax.xlane.f32.xlu0 %v1290
        %v1292 = vpop.xlane.xlu0 %1291
        %v1293 = vmax.f32 %v1085, %v1198
        %1294 = vmax.xlane.f32.xlu0 %v1293
        %v1295 = vpop.xlane.xlu0 %1294
        %v1296 = vmax.f32 %v1088, %v1201
        %1297 = vmax.xlane.f32.xlu0 %v1296
        %v1298 = vpop.xlane.xlu0 %1297
        %v1299 = vmax.f32 %v1091, %v1204
        %1300 = vmax.xlane.f32.xlu0 %v1299
        %v1301 = vpop.xlane.xlu0 %1300
        %v1302 = vmax.f32 %v1094, %v1207
        %1303 = vmax.xlane.f32.xlu0 %v1302
        %v1304 = vpop.xlane.xlu0 %1303
        %v1305 = vmax.f32 %v1097, %v1210
        %1306 = vmax.xlane.f32.xlu0 %v1305
        %v1307 = vpop.xlane.xlu0 %1306
        %v1308 = vmax.f32 %v1100, %v1213
        %1309 = vmax.xlane.f32.xlu0 %v1308
        %v1310 = vpop.xlane.xlu0 %1309
        %v1311 = vmax.f32 %v1103, %v1216
        %1312 = vmax.xlane.f32.xlu0 %v1311
        %v1313 = vpop.xlane.xlu0 %1312
        %v1314 = vmax.f32 %v1106, %v1219
        %1315 = vmax.xlane.f32.xlu0 %v1314
        %v1316 = vpop.xlane.xlu0 %1315
        %v1317 = vmax.f32 %v1109, %v1222
        %1318 = vmax.xlane.f32.xlu0 %v1317
        %v1319 = vpop.xlane.xlu0 %1318
        %v1320 = vsub.f32 %v1016, %v1226
        %v1321 = vsub.f32 %v1129, %v1226
        %v1322 = vsub.f32 %v1019, %v1229
        %v1323 = vsub.f32 %v1132, %v1229
        %v1324 = vsub.f32 %v1022, %v1232
        %v1325 = vsub.f32 %v1135, %v1232
        %v1326 = vsub.f32 %v1025, %v1235
        %v1327 = vsub.f32 %v1138, %v1235
        %v1328 = vsub.f32 %v1028, %v1238
        %v1329 = vsub.f32 %v1141, %v1238
        %v1330 = vsub.f32 %v1031, %v1241
        %v1331 = vsub.f32 %v1144, %v1241
        %v1332 = vsub.f32 %v1034, %v1244
        %v1333 = vsub.f32 %v1147, %v1244
        %v1334 = vsub.f32 %v1037, %v1247
        %v1335 = vsub.f32 %v1150, %v1247
        %v1336 = vsub.f32 %v1040, %v1250
        %v1337 = vsub.f32 %v1153, %v1250
        %v1338 = vsub.f32 %v1043, %v1253
        %v1339 = vsub.f32 %v1156, %v1253
        %v1340 = vsub.f32 %v1046, %v1256
        %v1341 = vsub.f32 %v1159, %v1256
        %v1342 = vsub.f32 %v1049, %v1259
        %v1343 = vsub.f32 %v1162, %v1259
        %v1344 = vsub.f32 %v1052, %v1262
        %v1345 = vsub.f32 %v1165, %v1262
        %v1346 = vsub.f32 %v1055, %v1265
        %v1347 = vsub.f32 %v1168, %v1265
        %v1348 = vsub.f32 %v1058, %v1268
        %v1349 = vsub.f32 %v1171, %v1268
        %v1350 = vsub.f32 %v1061, %v1271
        %v1351 = vsub.f32 %v1174, %v1271
        %v1352 = vsub.f32 %v1064, %v1274
        %v1353 = vsub.f32 %v1177, %v1274
        %v1354 = vsub.f32 %v1067, %v1277
        %v1355 = vsub.f32 %v1180, %v1277
        %v1356 = vsub.f32 %v1070, %v1280
        %v1357 = vsub.f32 %v1183, %v1280
        %v1358 = vsub.f32 %v1073, %v1283
        %v1359 = vsub.f32 %v1186, %v1283
        %v1360 = vsub.f32 %v1076, %v1286
        %v1361 = vsub.f32 %v1189, %v1286
        %v1362 = vsub.f32 %v1079, %v1289
        %v1363 = vsub.f32 %v1192, %v1289
        %v1364 = vsub.f32 %v1082, %v1292
        %v1365 = vsub.f32 %v1195, %v1292
        %v1366 = vsub.f32 %v1085, %v1295
        %v1367 = vsub.f32 %v1198, %v1295
        %v1368 = vsub.f32 %v1088, %v1298
        %v1369 = vsub.f32 %v1201, %v1298
        %v1370 = vsub.f32 %v1091, %v1301
        %v1371 = vsub.f32 %v1204, %v1301
        %v1372 = vsub.f32 %v1094, %v1304
        %v1373 = vsub.f32 %v1207, %v1304
        %v1374 = vsub.f32 %v1097, %v1307
        %v1375 = vsub.f32 %v1210, %v1307
        %v1376 = vsub.f32 %v1100, %v1310
        %v1377 = vsub.f32 %v1213, %v1310
        %v1378 = vsub.f32 %v1103, %v1313
        %v1379 = vsub.f32 %v1216, %v1313
        %v1380 = vsub.f32 %v1106, %v1316
        %v1381 = vsub.f32 %v1219, %v1316
        %v1382 = vsub.f32 %v1109, %v1319
        %v1383 = vsub.f32 %v1222, %v1319
        %v1384 = vmul.f32 %v1320, 1.442695
        %v1385 = vpow.pop %v1384
        %v1386 = vmul.f32 %v1321, 1.442695
        %v1387 = vpow.pop %v1386
        %v1388 = vmul.f32 %v1322, 1.442695
        %v1389 = vpow.pop %v1388
        %v1390 = vmul.f32 %v1323, 1.442695
        %v1391 = vpow.pop %v1390
        %v1392 = vmul.f32 %v1324, 1.442695
        %v1393 = vpow.pop %v1392
        %v1394 = vmul.f32 %v1325, 1.442695
        %v1395 = vpow.pop %v1394
        %v1396 = vmul.f32 %v1326, 1.442695
        %v1397 = vpow.pop %v1396
        %v1398 = vmul.f32 %v1327, 1.442695
        %v1399 = vpow.pop %v1398
        %v1400 = vmul.f32 %v1328, 1.442695
        %v1401 = vpow.pop %v1400
        %v1402 = vmul.f32 %v1329, 1.442695
        %v1403 = vpow.pop %v1402
        %v1404 = vmul.f32 %v1330, 1.442695
        %v1405 = vpow.pop %v1404
        %v1406 = vmul.f32 %v1331, 1.442695
        %v1407 = vpow.pop %v1406
        %v1408 = vmul.f32 %v1332, 1.442695
        %v1409 = vpow.pop %v1408
        %v1410 = vmul.f32 %v1333, 1.442695
        %v1411 = vpow.pop %v1410
        %v1412 = vmul.f32 %v1334, 1.442695
        %v1413 = vpow.pop %v1412
        %v1414 = vmul.f32 %v1335, 1.442695
        %v1415 = vpow.pop %v1414
        %v1416 = vmul.f32 %v1336, 1.442695
        %v1417 = vpow.pop %v1416
        %v1418 = vmul.f32 %v1337, 1.442695
        %v1419 = vpow.pop %v1418
        %v1420 = vmul.f32 %v1338, 1.442695
        %v1421 = vpow.pop %v1420
        %v1422 = vmul.f32 %v1339, 1.442695
        %v1423 = vpow.pop %v1422
        %v1424 = vmul.f32 %v1340, 1.442695
        %v1425 = vpow.pop %v1424
        %v1426 = vmul.f32 %v1341, 1.442695
        %v1427 = vpow.pop %v1426
        %v1428 = vmul.f32 %v1342, 1.442695
        %v1429 = vpow.pop %v1428
        %v1430 = vmul.f32 %v1343, 1.442695
        %v1431 = vpow.pop %v1430
        %v1432 = vmul.f32 %v1344, 1.442695
        %v1433 = vpow.pop %v1432
        %v1434 = vmul.f32 %v1345, 1.442695
        %v1435 = vpow.pop %v1434
        %v1436 = vmul.f32 %v1346, 1.442695
        %v1437 = vpow.pop %v1436
        %v1438 = vmul.f32 %v1347, 1.442695
        %v1439 = vpow.pop %v1438
        %v1440 = vmul.f32 %v1348, 1.442695
        %v1441 = vpow.pop %v1440
        %v1442 = vmul.f32 %v1349, 1.442695
        %v1443 = vpow.pop %v1442
        %v1444 = vmul.f32 %v1350, 1.442695
        %v1445 = vpow.pop %v1444
        %v1446 = vmul.f32 %v1351, 1.442695
        %v1447 = vpow.pop %v1446
        %v1448 = vmul.f32 %v1352, 1.442695
        %v1449 = vpow.pop %v1448
        %v1450 = vmul.f32 %v1353, 1.442695
        %v1451 = vpow.pop %v1450
        %v1452 = vmul.f32 %v1354, 1.442695
        %v1453 = vpow.pop %v1452
        %v1454 = vmul.f32 %v1355, 1.442695
        %v1455 = vpow.pop %v1454
        %v1456 = vmul.f32 %v1356, 1.442695
        %v1457 = vpow.pop %v1456
        %v1458 = vmul.f32 %v1357, 1.442695
        %v1459 = vpow.pop %v1458
        %v1460 = vmul.f32 %v1358, 1.442695
        %v1461 = vpow.pop %v1460
        %v1462 = vmul.f32 %v1359, 1.442695
        %v1463 = vpow.pop %v1462
        %v1464 = vmul.f32 %v1360, 1.442695
        %v1465 = vpow.pop %v1464
        %v1466 = vmul.f32 %v1361, 1.442695
        %v1467 = vpow.pop %v1466
        %v1468 = vmul.f32 %v1362, 1.442695
        %v1469 = vpow.pop %v1468
        %v1470 = vmul.f32 %v1363, 1.442695
        %v1471 = vpow.pop %v1470
        %v1472 = vmul.f32 %v1364, 1.442695
        %v1473 = vpow.pop %v1472
        %v1474 = vmul.f32 %v1365, 1.442695
        %v1475 = vpow.pop %v1474
        %v1476 = vmul.f32 %v1366, 1.442695
        %v1477 = vpow.pop %v1476
        %v1478 = vmul.f32 %v1367, 1.442695
        %v1479 = vpow.pop %v1478
        %v1480 = vmul.f32 %v1368, 1.442695
        %v1481 = vpow.pop %v1480
        %v1482 = vmul.f32 %v1369, 1.442695
        %v1483 = vpow.pop %v1482
        %v1484 = vmul.f32 %v1370, 1.442695
        %v1485 = vpow.pop %v1484
        %v1486 = vmul.f32 %v1371, 1.442695
        %v1487 = vpow.pop %v1486
        %v1488 = vmul.f32 %v1372, 1.442695
        %v1489 = vpow.pop %v1488
        %v1490 = vmul.f32 %v1373, 1.442695
        %v1491 = vpow.pop %v1490
        %v1492 = vmul.f32 %v1374, 1.442695
        %v1493 = vpow.pop %v1492
        %v1494 = vmul.f32 %v1375, 1.442695
        %v1495 = vpow.pop %v1494
        %v1496 = vmul.f32 %v1376, 1.442695
        %v1497 = vpow.pop %v1496
        %v1498 = vmul.f32 %v1377, 1.442695
        %v1499 = vpow.pop %v1498
        %v1500 = vmul.f32 %v1378, 1.442695
        %v1501 = vpow.pop %v1500
        %v1502 = vmul.f32 %v1379, 1.442695
        %v1503 = vpow.pop %v1502
        %v1504 = vmul.f32 %v1380, 1.442695
        %v1505 = vpow.pop %v1504
        %v1506 = vmul.f32 %v1381, 1.442695
        %v1507 = vpow.pop %v1506
        %v1508 = vmul.f32 %v1382, 1.442695
        %v1509 = vpow.pop %v1508
        %v1510 = vmul.f32 %v1383, 1.442695
        %v1511 = vpow.pop %v1510
        %v1512 = vadd.f32 %v1385, %v1387
        %1513 = vadd.xlane.f32.xlu0 %v1512
        %v1514 = vpop.xlane.xlu0 %1513
        %v1515 = vadd.f32 %v1389, %v1391
        %1516 = vadd.xlane.f32.xlu0 %v1515
        %v1517 = vpop.xlane.xlu0 %1516
        %v1518 = vadd.f32 %v1393, %v1395
        %1519 = vadd.xlane.f32.xlu0 %v1518
        %v1520 = vpop.xlane.xlu0 %1519
        %v1521 = vadd.f32 %v1397, %v1399
        %1522 = vadd.xlane.f32.xlu0 %v1521
        %v1523 = vpop.xlane.xlu0 %1522
        %v1524 = vadd.f32 %v1401, %v1403
        %1525 = vadd.xlane.f32.xlu0 %v1524
        %v1526 = vpop.xlane.xlu0 %1525
        %v1527 = vadd.f32 %v1405, %v1407
        %1528 = vadd.xlane.f32.xlu0 %v1527
        %v1529 = vpop.xlane.xlu0 %1528
        %v1530 = vadd.f32 %v1409, %v1411
        %1531 = vadd.xlane.f32.xlu0 %v1530
        %v1532 = vpop.xlane.xlu0 %1531
        %v1533 = vadd.f32 %v1413, %v1415
        %1534 = vadd.xlane.f32.xlu0 %v1533
        %v1535 = vpop.xlane.xlu0 %1534
        %v1536 = vadd.f32 %v1417, %v1419
        %1537 = vadd.xlane.f32.xlu0 %v1536
        %v1538 = vpop.xlane.xlu0 %1537
        %v1539 = vadd.f32 %v1421, %v1423
        %1540 = vadd.xlane.f32.xlu0 %v1539
        %v1541 = vpop.xlane.xlu0 %1540
        %v1542 = vadd.f32 %v1425, %v1427
        %1543 = vadd.xlane.f32.xlu0 %v1542
        %v1544 = vpop.xlane.xlu0 %1543
        %v1545 = vadd.f32 %v1429, %v1431
        %1546 = vadd.xlane.f32.xlu0 %v1545
        %v1547 = vpop.xlane.xlu0 %1546
        %v1548 = vadd.f32 %v1433, %v1435
        %1549 = vadd.xlane.f32.xlu0 %v1548
        %v1550 = vpop.xlane.xlu0 %1549
        %v1551 = vadd.f32 %v1437, %v1439
        %1552 = vadd.xlane.f32.xlu0 %v1551
        %v1553 = vpop.xlane.xlu0 %1552
        %v1554 = vadd.f32 %v1441, %v1443
        %1555 = vadd.xlane.f32.xlu0 %v1554
        %v1556 = vpop.xlane.xlu0 %1555
        %v1557 = vadd.f32 %v1445, %v1447
        %1558 = vadd.xlane.f32.xlu0 %v1557
        %v1559 = vpop.xlane.xlu0 %1558
        %v1560 = vadd.f32 %v1449, %v1451
        %1561 = vadd.xlane.f32.xlu0 %v1560
        %v1562 = vpop.xlane.xlu0 %1561
        %v1563 = vadd.f32 %v1453, %v1455
        %1564 = vadd.xlane.f32.xlu0 %v1563
        %v1565 = vpop.xlane.xlu0 %1564
        %v1566 = vadd.f32 %v1457, %v1459
        %1567 = vadd.xlane.f32.xlu0 %v1566
        %v1568 = vpop.xlane.xlu0 %1567
        %v1569 = vadd.f32 %v1461, %v1463
        %1570 = vadd.xlane.f32.xlu0 %v1569
        %v1571 = vpop.xlane.xlu0 %1570
        %v1572 = vadd.f32 %v1465, %v1467
        %1573 = vadd.xlane.f32.xlu0 %v1572
        %v1574 = vpop.xlane.xlu0 %1573
        %v1575 = vadd.f32 %v1469, %v1471
        %1576 = vadd.xlane.f32.xlu0 %v1575
        %v1577 = vpop.xlane.xlu0 %1576
        %v1578 = vadd.f32 %v1473, %v1475
        %1579 = vadd.xlane.f32.xlu0 %v1578
        %v1580 = vpop.xlane.xlu0 %1579
        %v1581 = vadd.f32 %v1477, %v1479
        %1582 = vadd.xlane.f32.xlu0 %v1581
        %v1583 = vpop.xlane.xlu0 %1582
        %v1584 = vadd.f32 %v1481, %v1483
        %1585 = vadd.xlane.f32.xlu0 %v1584
        %v1586 = vpop.xlane.xlu0 %1585
        %v1587 = vadd.f32 %v1485, %v1487
        %1588 = vadd.xlane.f32.xlu0 %v1587
        %v1589 = vpop.xlane.xlu0 %1588
        %v1590 = vadd.f32 %v1489, %v1491
        %1591 = vadd.xlane.f32.xlu0 %v1590
        %v1592 = vpop.xlane.xlu0 %1591
        %v1593 = vadd.f32 %v1493, %v1495
        %1594 = vadd.xlane.f32.xlu0 %v1593
        %v1595 = vpop.xlane.xlu0 %1594
        %v1596 = vadd.f32 %v1497, %v1499
        %1597 = vadd.xlane.f32.xlu0 %v1596
        %v1598 = vpop.xlane.xlu0 %1597
        %v1599 = vadd.f32 %v1501, %v1503
        %1600 = vadd.xlane.f32.xlu0 %v1599
        %v1601 = vpop.xlane.xlu0 %1600
        %v1602 = vadd.f32 %v1505, %v1507
        %1603 = vadd.xlane.f32.xlu0 %v1602
        %v1604 = vpop.xlane.xlu0 %1603
        %v1605 = vadd.f32 %v1509, %v1511
        %1606 = vadd.xlane.f32.xlu0 %v1605
        %v1607 = vpop.xlane.xlu0 %1606
        %v1608 = vrcp.pop %v1514
        %v1609 = vmul.f32 %v1514, %v1608
        %v1610 = vsub.f32 1.0, %v1609
        %v1611 = vmul.f32 %v1608, %v1610
        %v1612 = vadd.f32 %v1608, %v1611
        %vm1613 = vweird.f32 %v1514
        %vm1614 = vweird.f32 %v1608
        %vm1615 = vmor %vm1613, %vm1614
        %v1616 = vsel %vm1615, %v1608, %v1612
        %v1617 = vand.u32 2147483647, %v1514
        %vm1618 = vcmp.eq.f32.partialorder %v1617, 8.507059e+37
        %v1619 = vand.u32 %v1514, 2147483648
        %v1620 = vor.u32 1.1754944e-38, %v1619
        %v1621 = vsel %vm1618, %v1620, %v1616
        %v1622 = vrcp.pop %v1517
        %v1623 = vmul.f32 %v1517, %v1622
        %v1624 = vsub.f32 1.0, %v1623
        %v1625 = vmul.f32 %v1622, %v1624
        %v1626 = vadd.f32 %v1622, %v1625
        %vm1627 = vweird.f32 %v1517
        %vm1628 = vweird.f32 %v1622
        %vm1629 = vmor %vm1627, %vm1628
        %v1630 = vsel %vm1629, %v1622, %v1626
        %v1631 = vand.u32 2147483647, %v1517
        %vm1632 = vcmp.eq.f32.partialorder %v1631, 8.507059e+37
        %v1633 = vand.u32 %v1517, 2147483648
        %v1634 = vor.u32 1.1754944e-38, %v1633
        %v1635 = vsel %vm1632, %v1634, %v1630
        %v1636 = vrcp.pop %v1520
        %v1637 = vmul.f32 %v1520, %v1636
        %v1638 = vsub.f32 1.0, %v1637
        %v1639 = vmul.f32 %v1636, %v1638
        %v1640 = vadd.f32 %v1636, %v1639
        %vm1641 = vweird.f32 %v1520
        %vm1642 = vweird.f32 %v1636
        %vm1643 = vmor %vm1641, %vm1642
        %v1644 = vsel %vm1643, %v1636, %v1640
        %v1645 = vand.u32 2147483647, %v1520
        %vm1646 = vcmp.eq.f32.partialorder %v1645, 8.507059e+37
        %v1647 = vand.u32 %v1520, 2147483648
        %v1648 = vor.u32 1.1754944e-38, %v1647
        %v1649 = vsel %vm1646, %v1648, %v1644
        %v1650 = vrcp.pop %v1523
        %v1651 = vmul.f32 %v1523, %v1650
        %v1652 = vsub.f32 1.0, %v1651
        %v1653 = vmul.f32 %v1650, %v1652
        %v1654 = vadd.f32 %v1650, %v1653
        %vm1655 = vweird.f32 %v1523
        %vm1656 = vweird.f32 %v1650
        %vm1657 = vmor %vm1655, %vm1656
        %v1658 = vsel %vm1657, %v1650, %v1654
        %v1659 = vand.u32 2147483647, %v1523
        %vm1660 = vcmp.eq.f32.partialorder %v1659, 8.507059e+37
        %v1661 = vand.u32 %v1523, 2147483648
        %v1662 = vor.u32 1.1754944e-38, %v1661
        %v1663 = vsel %vm1660, %v1662, %v1658
        %v1664 = vrcp.pop %v1526
        %v1665 = vmul.f32 %v1526, %v1664
        %v1666 = vsub.f32 1.0, %v1665
        %v1667 = vmul.f32 %v1664, %v1666
        %v1668 = vadd.f32 %v1664, %v1667
        %vm1669 = vweird.f32 %v1526
        %vm1670 = vweird.f32 %v1664
        %vm1671 = vmor %vm1669, %vm1670
        %v1672 = vsel %vm1671, %v1664, %v1668
        %v1673 = vand.u32 2147483647, %v1526
        %vm1674 = vcmp.eq.f32.partialorder %v1673, 8.507059e+37
        %v1675 = vand.u32 %v1526, 2147483648
        %v1676 = vor.u32 1.1754944e-38, %v1675
        %v1677 = vsel %vm1674, %v1676, %v1672
        %v1678 = vrcp.pop %v1529
        %v1679 = vmul.f32 %v1529, %v1678
        %v1680 = vsub.f32 1.0, %v1679
        %v1681 = vmul.f32 %v1678, %v1680
        %v1682 = vadd.f32 %v1678, %v1681
        %vm1683 = vweird.f32 %v1529
        %vm1684 = vweird.f32 %v1678
        %vm1685 = vmor %vm1683, %vm1684
        %v1686 = vsel %vm1685, %v1678, %v1682
        %v1687 = vand.u32 2147483647, %v1529
        %vm1688 = vcmp.eq.f32.partialorder %v1687, 8.507059e+37
        %v1689 = vand.u32 %v1529, 2147483648
        %v1690 = vor.u32 1.1754944e-38, %v1689
        %v1691 = vsel %vm1688, %v1690, %v1686
        %v1692 = vrcp.pop %v1532
        %v1693 = vmul.f32 %v1532, %v1692
        %v1694 = vsub.f32 1.0, %v1693
        %v1695 = vmul.f32 %v1692, %v1694
        %v1696 = vadd.f32 %v1692, %v1695
        %vm1697 = vweird.f32 %v1532
        %vm1698 = vweird.f32 %v1692
        %vm1699 = vmor %vm1697, %vm1698
        %v1700 = vsel %vm1699, %v1692, %v1696
        %v1701 = vand.u32 2147483647, %v1532
        %vm1702 = vcmp.eq.f32.partialorder %v1701, 8.507059e+37
        %v1703 = vand.u32 %v1532, 2147483648
        %v1704 = vor.u32 1.1754944e-38, %v1703
        %v1705 = vsel %vm1702, %v1704, %v1700
        %v1706 = vrcp.pop %v1535
        %v1707 = vmul.f32 %v1535, %v1706
        %v1708 = vsub.f32 1.0, %v1707
        %v1709 = vmul.f32 %v1706, %v1708
        %v1710 = vadd.f32 %v1706, %v1709
        %vm1711 = vweird.f32 %v1535
        %vm1712 = vweird.f32 %v1706
        %vm1713 = vmor %vm1711, %vm1712
        %v1714 = vsel %vm1713, %v1706, %v1710
        %v1715 = vand.u32 2147483647, %v1535
        %vm1716 = vcmp.eq.f32.partialorder %v1715, 8.507059e+37
        %v1717 = vand.u32 %v1535, 2147483648
        %v1718 = vor.u32 1.1754944e-38, %v1717
        %v1719 = vsel %vm1716, %v1718, %v1714
        %v1720 = vrcp.pop %v1538
        %v1721 = vmul.f32 %v1538, %v1720
        %v1722 = vsub.f32 1.0, %v1721
        %v1723 = vmul.f32 %v1720, %v1722
        %v1724 = vadd.f32 %v1720, %v1723
        %vm1725 = vweird.f32 %v1538
        %vm1726 = vweird.f32 %v1720
        %vm1727 = vmor %vm1725, %vm1726
        %v1728 = vsel %vm1727, %v1720, %v1724
        %v1729 = vand.u32 2147483647, %v1538
        %vm1730 = vcmp.eq.f32.partialorder %v1729, 8.507059e+37
        %v1731 = vand.u32 %v1538, 2147483648
        %v1732 = vor.u32 1.1754944e-38, %v1731
        %v1733 = vsel %vm1730, %v1732, %v1728
        %v1734 = vrcp.pop %v1541
        %v1735 = vmul.f32 %v1541, %v1734
        %v1736 = vsub.f32 1.0, %v1735
        %v1737 = vmul.f32 %v1734, %v1736
        %v1738 = vadd.f32 %v1734, %v1737
        %vm1739 = vweird.f32 %v1541
        %vm1740 = vweird.f32 %v1734
        %vm1741 = vmor %vm1739, %vm1740
        %v1742 = vsel %vm1741, %v1734, %v1738
        %v1743 = vand.u32 2147483647, %v1541
        %vm1744 = vcmp.eq.f32.partialorder %v1743, 8.507059e+37
        %v1745 = vand.u32 %v1541, 2147483648
        %v1746 = vor.u32 1.1754944e-38, %v1745
        %v1747 = vsel %vm1744, %v1746, %v1742
        %v1748 = vrcp.pop %v1544
        %v1749 = vmul.f32 %v1544, %v1748
        %v1750 = vsub.f32 1.0, %v1749
        %v1751 = vmul.f32 %v1748, %v1750
        %v1752 = vadd.f32 %v1748, %v1751
        %vm1753 = vweird.f32 %v1544
        %vm1754 = vweird.f32 %v1748
        %vm1755 = vmor %vm1753, %vm1754
        %v1756 = vsel %vm1755, %v1748, %v1752
        %v1757 = vand.u32 2147483647, %v1544
        %vm1758 = vcmp.eq.f32.partialorder %v1757, 8.507059e+37
        %v1759 = vand.u32 %v1544, 2147483648
        %v1760 = vor.u32 1.1754944e-38, %v1759
        %v1761 = vsel %vm1758, %v1760, %v1756
        %v1762 = vrcp.pop %v1547
        %v1763 = vmul.f32 %v1547, %v1762
        %v1764 = vsub.f32 1.0, %v1763
        %v1765 = vmul.f32 %v1762, %v1764
        %v1766 = vadd.f32 %v1762, %v1765
        %vm1767 = vweird.f32 %v1547
        %vm1768 = vweird.f32 %v1762
        %vm1769 = vmor %vm1767, %vm1768
        %v1770 = vsel %vm1769, %v1762, %v1766
        %v1771 = vand.u32 2147483647, %v1547
        %vm1772 = vcmp.eq.f32.partialorder %v1771, 8.507059e+37
        %v1773 = vand.u32 %v1547, 2147483648
        %v1774 = vor.u32 1.1754944e-38, %v1773
        %v1775 = vsel %vm1772, %v1774, %v1770
        %v1776 = vrcp.pop %v1550
        %v1777 = vmul.f32 %v1550, %v1776
        %v1778 = vsub.f32 1.0, %v1777
        %v1779 = vmul.f32 %v1776, %v1778
        %v1780 = vadd.f32 %v1776, %v1779
        %vm1781 = vweird.f32 %v1550
        %vm1782 = vweird.f32 %v1776
        %vm1783 = vmor %vm1781, %vm1782
        %v1784 = vsel %vm1783, %v1776, %v1780
        %v1785 = vand.u32 2147483647, %v1550
        %vm1786 = vcmp.eq.f32.partialorder %v1785, 8.507059e+37
        %v1787 = vand.u32 %v1550, 2147483648
        %v1788 = vor.u32 1.1754944e-38, %v1787
        %v1789 = vsel %vm1786, %v1788, %v1784
        %v1790 = vrcp.pop %v1553
        %v1791 = vmul.f32 %v1553, %v1790
        %v1792 = vsub.f32 1.0, %v1791
        %v1793 = vmul.f32 %v1790, %v1792
        %v1794 = vadd.f32 %v1790, %v1793
        %vm1795 = vweird.f32 %v1553
        %vm1796 = vweird.f32 %v1790
        %vm1797 = vmor %vm1795, %vm1796
        %v1798 = vsel %vm1797, %v1790, %v1794
        %v1799 = vand.u32 2147483647, %v1553
        %vm1800 = vcmp.eq.f32.partialorder %v1799, 8.507059e+37
        %v1801 = vand.u32 %v1553, 2147483648
        %v1802 = vor.u32 1.1754944e-38, %v1801
        %v1803 = vsel %vm1800, %v1802, %v1798
        %v1804 = vrcp.pop %v1556
        %v1805 = vmul.f32 %v1556, %v1804
        %v1806 = vsub.f32 1.0, %v1805
        %v1807 = vmul.f32 %v1804, %v1806
        %v1808 = vadd.f32 %v1804, %v1807
        %vm1809 = vweird.f32 %v1556
        %vm1810 = vweird.f32 %v1804
        %vm1811 = vmor %vm1809, %vm1810
        %v1812 = vsel %vm1811, %v1804, %v1808
        %v1813 = vand.u32 2147483647, %v1556
        %vm1814 = vcmp.eq.f32.partialorder %v1813, 8.507059e+37
        %v1815 = vand.u32 %v1556, 2147483648
        %v1816 = vor.u32 1.1754944e-38, %v1815
        %v1817 = vsel %vm1814, %v1816, %v1812
        %v1818 = vrcp.pop %v1559
        %v1819 = vmul.f32 %v1559, %v1818
        %v1820 = vsub.f32 1.0, %v1819
        %v1821 = vmul.f32 %v1818, %v1820
        %v1822 = vadd.f32 %v1818, %v1821
        %vm1823 = vweird.f32 %v1559
        %vm1824 = vweird.f32 %v1818
        %vm1825 = vmor %vm1823, %vm1824
        %v1826 = vsel %vm1825, %v1818, %v1822
        %v1827 = vand.u32 2147483647, %v1559
        %vm1828 = vcmp.eq.f32.partialorder %v1827, 8.507059e+37
        %v1829 = vand.u32 %v1559, 2147483648
        %v1830 = vor.u32 1.1754944e-38, %v1829
        %v1831 = vsel %vm1828, %v1830, %v1826
        %v1832 = vrcp.pop %v1562
        %v1833 = vmul.f32 %v1562, %v1832
        %v1834 = vsub.f32 1.0, %v1833
        %v1835 = vmul.f32 %v1832, %v1834
        %v1836 = vadd.f32 %v1832, %v1835
        %vm1837 = vweird.f32 %v1562
        %vm1838 = vweird.f32 %v1832
        %vm1839 = vmor %vm1837, %vm1838
        %v1840 = vsel %vm1839, %v1832, %v1836
        %v1841 = vand.u32 2147483647, %v1562
        %vm1842 = vcmp.eq.f32.partialorder %v1841, 8.507059e+37
        %v1843 = vand.u32 %v1562, 2147483648
        %v1844 = vor.u32 1.1754944e-38, %v1843
        %v1845 = vsel %vm1842, %v1844, %v1840
        %v1846 = vrcp.pop %v1565
        %v1847 = vmul.f32 %v1565, %v1846
        %v1848 = vsub.f32 1.0, %v1847
        %v1849 = vmul.f32 %v1846, %v1848
        %v1850 = vadd.f32 %v1846, %v1849
        %vm1851 = vweird.f32 %v1565
        %vm1852 = vweird.f32 %v1846
        %vm1853 = vmor %vm1851, %vm1852
        %v1854 = vsel %vm1853, %v1846, %v1850
        %v1855 = vand.u32 2147483647, %v1565
        %vm1856 = vcmp.eq.f32.partialorder %v1855, 8.507059e+37
        %v1857 = vand.u32 %v1565, 2147483648
        %v1858 = vor.u32 1.1754944e-38, %v1857
        %v1859 = vsel %vm1856, %v1858, %v1854
        %v1860 = vrcp.pop %v1568
        %v1861 = vmul.f32 %v1568, %v1860
        %v1862 = vsub.f32 1.0, %v1861
        %v1863 = vmul.f32 %v1860, %v1862
        %v1864 = vadd.f32 %v1860, %v1863
        %vm1865 = vweird.f32 %v1568
        %vm1866 = vweird.f32 %v1860
        %vm1867 = vmor %vm1865, %vm1866
        %v1868 = vsel %vm1867, %v1860, %v1864
        %v1869 = vand.u32 2147483647, %v1568
        %vm1870 = vcmp.eq.f32.partialorder %v1869, 8.507059e+37
        %v1871 = vand.u32 %v1568, 2147483648
        %v1872 = vor.u32 1.1754944e-38, %v1871
        %v1873 = vsel %vm1870, %v1872, %v1868
        %v1874 = vrcp.pop %v1571
        %v1875 = vmul.f32 %v1571, %v1874
        %v1876 = vsub.f32 1.0, %v1875
        %v1877 = vmul.f32 %v1874, %v1876
        %v1878 = vadd.f32 %v1874, %v1877
        %vm1879 = vweird.f32 %v1571
        %vm1880 = vweird.f32 %v1874
        %vm1881 = vmor %vm1879, %vm1880
        %v1882 = vsel %vm1881, %v1874, %v1878
        %v1883 = vand.u32 2147483647, %v1571
        %vm1884 = vcmp.eq.f32.partialorder %v1883, 8.507059e+37
        %v1885 = vand.u32 %v1571, 2147483648
        %v1886 = vor.u32 1.1754944e-38, %v1885
        %v1887 = vsel %vm1884, %v1886, %v1882
        %v1888 = vrcp.pop %v1574
        %v1889 = vmul.f32 %v1574, %v1888
        %v1890 = vsub.f32 1.0, %v1889
        %v1891 = vmul.f32 %v1888, %v1890
        %v1892 = vadd.f32 %v1888, %v1891
        %vm1893 = vweird.f32 %v1574
        %vm1894 = vweird.f32 %v1888
        %vm1895 = vmor %vm1893, %vm1894
        %v1896 = vsel %vm1895, %v1888, %v1892
        %v1897 = vand.u32 2147483647, %v1574
        %vm1898 = vcmp.eq.f32.partialorder %v1897, 8.507059e+37
        %v1899 = vand.u32 %v1574, 2147483648
        %v1900 = vor.u32 1.1754944e-38, %v1899
        %v1901 = vsel %vm1898, %v1900, %v1896
        %v1902 = vrcp.pop %v1577
        %v1903 = vmul.f32 %v1577, %v1902
        %v1904 = vsub.f32 1.0, %v1903
        %v1905 = vmul.f32 %v1902, %v1904
        %v1906 = vadd.f32 %v1902, %v1905
        %vm1907 = vweird.f32 %v1577
        %vm1908 = vweird.f32 %v1902
        %vm1909 = vmor %vm1907, %vm1908
        %v1910 = vsel %vm1909, %v1902, %v1906
        %v1911 = vand.u32 2147483647, %v1577
        %vm1912 = vcmp.eq.f32.partialorder %v1911, 8.507059e+37
        %v1913 = vand.u32 %v1577, 2147483648
        %v1914 = vor.u32 1.1754944e-38, %v1913
        %v1915 = vsel %vm1912, %v1914, %v1910
        %v1916 = vrcp.pop %v1580
        %v1917 = vmul.f32 %v1580, %v1916
        %v1918 = vsub.f32 1.0, %v1917
        %v1919 = vmul.f32 %v1916, %v1918
        %v1920 = vadd.f32 %v1916, %v1919
        %vm1921 = vweird.f32 %v1580
        %vm1922 = vweird.f32 %v1916
        %vm1923 = vmor %vm1921, %vm1922
        %v1924 = vsel %vm1923, %v1916, %v1920
        %v1925 = vand.u32 2147483647, %v1580
        %vm1926 = vcmp.eq.f32.partialorder %v1925, 8.507059e+37
        %v1927 = vand.u32 %v1580, 2147483648
        %v1928 = vor.u32 1.1754944e-38, %v1927
        %v1929 = vsel %vm1926, %v1928, %v1924
        %v1930 = vrcp.pop %v1583
        %v1931 = vmul.f32 %v1583, %v1930
        %v1932 = vsub.f32 1.0, %v1931
        %v1933 = vmul.f32 %v1930, %v1932
        %v1934 = vadd.f32 %v1930, %v1933
        %vm1935 = vweird.f32 %v1583
        %vm1936 = vweird.f32 %v1930
        %vm1937 = vmor %vm1935, %vm1936
        %v1938 = vsel %vm1937, %v1930, %v1934
        %v1939 = vand.u32 2147483647, %v1583
        %vm1940 = vcmp.eq.f32.partialorder %v1939, 8.507059e+37
        %v1941 = vand.u32 %v1583, 2147483648
        %v1942 = vor.u32 1.1754944e-38, %v1941
        %v1943 = vsel %vm1940, %v1942, %v1938
        %v1944 = vrcp.pop %v1586
        %v1945 = vmul.f32 %v1586, %v1944
        %v1946 = vsub.f32 1.0, %v1945
        %v1947 = vmul.f32 %v1944, %v1946
        %v1948 = vadd.f32 %v1944, %v1947
        %vm1949 = vweird.f32 %v1586
        %vm1950 = vweird.f32 %v1944
        %vm1951 = vmor %vm1949, %vm1950
        %v1952 = vsel %vm1951, %v1944, %v1948
        %v1953 = vand.u32 2147483647, %v1586
        %vm1954 = vcmp.eq.f32.partialorder %v1953, 8.507059e+37
        %v1955 = vand.u32 %v1586, 2147483648
        %v1956 = vor.u32 1.1754944e-38, %v1955
        %v1957 = vsel %vm1954, %v1956, %v1952
        %v1958 = vrcp.pop %v1589
        %v1959 = vmul.f32 %v1589, %v1958
        %v1960 = vsub.f32 1.0, %v1959
        %v1961 = vmul.f32 %v1958, %v1960
        %v1962 = vadd.f32 %v1958, %v1961
        %vm1963 = vweird.f32 %v1589
        %vm1964 = vweird.f32 %v1958
        %vm1965 = vmor %vm1963, %vm1964
        %v1966 = vsel %vm1965, %v1958, %v1962
        %v1967 = vand.u32 2147483647, %v1589
        %vm1968 = vcmp.eq.f32.partialorder %v1967, 8.507059e+37
        %v1969 = vand.u32 %v1589, 2147483648
        %v1970 = vor.u32 1.1754944e-38, %v1969
        %v1971 = vsel %vm1968, %v1970, %v1966
        %v1972 = vrcp.pop %v1592
        %v1973 = vmul.f32 %v1592, %v1972
        %v1974 = vsub.f32 1.0, %v1973
        %v1975 = vmul.f32 %v1972, %v1974
        %v1976 = vadd.f32 %v1972, %v1975
        %vm1977 = vweird.f32 %v1592
        %vm1978 = vweird.f32 %v1972
        %vm1979 = vmor %vm1977, %vm1978
        %v1980 = vsel %vm1979, %v1972, %v1976
        %v1981 = vand.u32 2147483647, %v1592
        %vm1982 = vcmp.eq.f32.partialorder %v1981, 8.507059e+37
        %v1983 = vand.u32 %v1592, 2147483648
        %v1984 = vor.u32 1.1754944e-38, %v1983
        %v1985 = vsel %vm1982, %v1984, %v1980
        %v1986 = vrcp.pop %v1595
        %v1987 = vmul.f32 %v1595, %v1986
        %v1988 = vsub.f32 1.0, %v1987
        %v1989 = vmul.f32 %v1986, %v1988
        %v1990 = vadd.f32 %v1986, %v1989
        %vm1991 = vweird.f32 %v1595
        %vm1992 = vweird.f32 %v1986
        %vm1993 = vmor %vm1991, %vm1992
        %v1994 = vsel %vm1993, %v1986, %v1990
        %v1995 = vand.u32 2147483647, %v1595
        %vm1996 = vcmp.eq.f32.partialorder %v1995, 8.507059e+37
        %v1997 = vand.u32 %v1595, 2147483648
        %v1998 = vor.u32 1.1754944e-38, %v1997
        %v1999 = vsel %vm1996, %v1998, %v1994
        %v2000 = vrcp.pop %v1598
        %v2001 = vmul.f32 %v1598, %v2000
        %v2002 = vsub.f32 1.0, %v2001
        %v2003 = vmul.f32 %v2000, %v2002
        %v2004 = vadd.f32 %v2000, %v2003
        %vm2005 = vweird.f32 %v1598
        %vm2006 = vweird.f32 %v2000
        %vm2007 = vmor %vm2005, %vm2006
        %v2008 = vsel %vm2007, %v2000, %v2004
        %v2009 = vand.u32 2147483647, %v1598
        %vm2010 = vcmp.eq.f32.partialorder %v2009, 8.507059e+37
        %v2011 = vand.u32 %v1598, 2147483648
        %v2012 = vor.u32 1.1754944e-38, %v2011
        %v2013 = vsel %vm2010, %v2012, %v2008
        %v2014 = vrcp.pop %v1601
        %v2015 = vmul.f32 %v1601, %v2014
        %v2016 = vsub.f32 1.0, %v2015
        %v2017 = vmul.f32 %v2014, %v2016
        %v2018 = vadd.f32 %v2014, %v2017
        %vm2019 = vweird.f32 %v1601
        %vm2020 = vweird.f32 %v2014
        %vm2021 = vmor %vm2019, %vm2020
        %v2022 = vsel %vm2021, %v2014, %v2018
        %v2023 = vand.u32 2147483647, %v1601
        %vm2024 = vcmp.eq.f32.partialorder %v2023, 8.507059e+37
        %v2025 = vand.u32 %v1601, 2147483648
        %v2026 = vor.u32 1.1754944e-38, %v2025
        %v2027 = vsel %vm2024, %v2026, %v2022
        %v2028 = vrcp.pop %v1604
        %v2029 = vmul.f32 %v1604, %v2028
        %v2030 = vsub.f32 1.0, %v2029
        %v2031 = vmul.f32 %v2028, %v2030
        %v2032 = vadd.f32 %v2028, %v2031
        %vm2033 = vweird.f32 %v1604
        %vm2034 = vweird.f32 %v2028
        %vm2035 = vmor %vm2033, %vm2034
        %v2036 = vsel %vm2035, %v2028, %v2032
        %v2037 = vand.u32 2147483647, %v1604
        %vm2038 = vcmp.eq.f32.partialorder %v2037, 8.507059e+37
        %v2039 = vand.u32 %v1604, 2147483648
        %v2040 = vor.u32 1.1754944e-38, %v2039
        %v2041 = vsel %vm2038, %v2040, %v2036
        %v2042 = vrcp.pop %v1607
        %v2043 = vmul.f32 %v1607, %v2042
        %v2044 = vsub.f32 1.0, %v2043
        %v2045 = vmul.f32 %v2042, %v2044
        %v2046 = vadd.f32 %v2042, %v2045
        %vm2047 = vweird.f32 %v1607
        %vm2048 = vweird.f32 %v2042
        %vm2049 = vmor %vm2047, %vm2048
        %v2050 = vsel %vm2049, %v2042, %v2046
        %v2051 = vand.u32 2147483647, %v1607
        %vm2052 = vcmp.eq.f32.partialorder %v2051, 8.507059e+37
        %v2053 = vand.u32 %v1607, 2147483648
        %v2054 = vor.u32 1.1754944e-38, %v2053
        %v2055 = vsel %vm2052, %v2054, %v2050
        %v2056 = vmul.f32 %v1385, %v1621
        %v2057 = vmul.f32 %v1387, %v1621
        %v2058 = vmul.f32 %v1389, %v1635
        %v2059 = vmul.f32 %v1391, %v1635
        %v2060 = vmul.f32 %v1393, %v1649
        %v2061 = vmul.f32 %v1395, %v1649
        %v2062 = vmul.f32 %v1397, %v1663
        %v2063 = vmul.f32 %v1399, %v1663
        %v2064 = vmul.f32 %v1401, %v1677
        %v2065 = vmul.f32 %v1403, %v1677
        %v2066 = vmul.f32 %v1405, %v1691
        %v2067 = vmul.f32 %v1407, %v1691
        %v2068 = vmul.f32 %v1409, %v1705
        %v2069 = vmul.f32 %v1411, %v1705
        %v2070 = vmul.f32 %v1413, %v1719
        %v2071 = vmul.f32 %v1415, %v1719
        %v2072 = vmul.f32 %v1417, %v1733
        %v2073 = vmul.f32 %v1419, %v1733
        %v2074 = vmul.f32 %v1421, %v1747
        %v2075 = vmul.f32 %v1423, %v1747
        %v2076 = vmul.f32 %v1425, %v1761
        %v2077 = vmul.f32 %v1427, %v1761
        %v2078 = vmul.f32 %v1429, %v1775
        %v2079 = vmul.f32 %v1431, %v1775
        %v2080 = vmul.f32 %v1433, %v1789
        %v2081 = vmul.f32 %v1435, %v1789
        %v2082 = vmul.f32 %v1437, %v1803
        %v2083 = vmul.f32 %v1439, %v1803
        %v2084 = vmul.f32 %v1441, %v1817
        %v2085 = vmul.f32 %v1443, %v1817
        %v2086 = vmul.f32 %v1445, %v1831
        %v2087 = vmul.f32 %v1447, %v1831
        %v2088 = vmul.f32 %v1449, %v1845
        %v2089 = vmul.f32 %v1451, %v1845
        %v2090 = vmul.f32 %v1453, %v1859
        %v2091 = vmul.f32 %v1455, %v1859
        %v2092 = vmul.f32 %v1457, %v1873
        %v2093 = vmul.f32 %v1459, %v1873
        %v2094 = vmul.f32 %v1461, %v1887
        %v2095 = vmul.f32 %v1463, %v1887
        %v2096 = vmul.f32 %v1465, %v1901
        %v2097 = vmul.f32 %v1467, %v1901
        %v2098 = vmul.f32 %v1469, %v1915
        %v2099 = vmul.f32 %v1471, %v1915
        %v2100 = vmul.f32 %v1473, %v1929
        %v2101 = vmul.f32 %v1475, %v1929
        %v2102 = vmul.f32 %v1477, %v1943
        %v2103 = vmul.f32 %v1479, %v1943
        %v2104 = vmul.f32 %v1481, %v1957
        %v2105 = vmul.f32 %v1483, %v1957
        %v2106 = vmul.f32 %v1485, %v1971
        %v2107 = vmul.f32 %v1487, %v1971
        %v2108 = vmul.f32 %v1489, %v1985
        %v2109 = vmul.f32 %v1491, %v1985
        %v2110 = vmul.f32 %v1493, %v1999
        %v2111 = vmul.f32 %v1495, %v1999
        %v2112 = vmul.f32 %v1497, %v2013
        %v2113 = vmul.f32 %v1499, %v2013
        %v2114 = vmul.f32 %v1501, %v2027
        %v2115 = vmul.f32 %v1503, %v2027
        %v2116 = vmul.f32 %v1505, %v2041
        %v2117 = vmul.f32 %v1507, %v2041
        %v2118 = vmul.f32 %v1509, %v2055
        %v2119 = vmul.f32 %v1511, %v2055
        %v2120 = vpack.c.bf16 %v2057, %v2056
        %v2121 = vpack.c.bf16 %v2059, %v2058
        %v2122 = vpack.c.bf16 %v2061, %v2060
        %v2123 = vpack.c.bf16 %v2063, %v2062
        %v2124 = vpack.c.bf16 %v2065, %v2064
        %v2125 = vpack.c.bf16 %v2067, %v2066
        %v2126 = vpack.c.bf16 %v2069, %v2068
        %v2127 = vpack.c.bf16 %v2071, %v2070
        %v2128 = vpack.c.bf16 %v2073, %v2072
        %v2129 = vpack.c.bf16 %v2075, %v2074
        %v2130 = vpack.c.bf16 %v2077, %v2076
        %v2131 = vpack.c.bf16 %v2079, %v2078
        %v2132 = vpack.c.bf16 %v2081, %v2080
        %v2133 = vpack.c.bf16 %v2083, %v2082
        %v2134 = vpack.c.bf16 %v2085, %v2084
        %v2135 = vpack.c.bf16 %v2087, %v2086
        %v2136 = vpack.c.bf16 %v2089, %v2088
        %v2137 = vpack.c.bf16 %v2091, %v2090
        %v2138 = vpack.c.bf16 %v2093, %v2092
        %v2139 = vpack.c.bf16 %v2095, %v2094
        %v2140 = vpack.c.bf16 %v2097, %v2096
        %v2141 = vpack.c.bf16 %v2099, %v2098
        %v2142 = vpack.c.bf16 %v2101, %v2100
        %v2143 = vpack.c.bf16 %v2103, %v2102
        %v2144 = vpack.c.bf16 %v2105, %v2104
        %v2145 = vpack.c.bf16 %v2107, %v2106
        %v2146 = vpack.c.bf16 %v2109, %v2108
        %v2147 = vpack.c.bf16 %v2111, %v2110
        %v2148 = vpack.c.bf16 %v2113, %v2112
        %v2149 = vpack.c.bf16 %v2115, %v2114
        %v2150 = vpack.c.bf16 %v2117, %v2116
        %v2151 = vpack.c.bf16 %v2119, %v2118
        %v2152 = vld [vmem:[#allocation3] sm:$0xff]
        %v2153 = vld [vmem:[#allocation3 + $0x8] sm:$0xff]
        %v2154 = vld [vmem:[#allocation3 + $0x10] sm:$0xff]
        %v2155 = vld [vmem:[#allocation3 + $0x18] sm:$0xff]
        %v2156 = vld [vmem:[#allocation3 + $0x20] sm:$0xff]
        %v2157 = vld [vmem:[#allocation3 + $0x28] sm:$0xff]
        %v2158 = vld [vmem:[#allocation3 + $0x30] sm:$0xff]
        %v2159 = vld [vmem:[#allocation3 + $0x38] sm:$0xff]
        %v2168 = vunpack.c.l.b16 %v2152
        %v2169 = vunpack.c.h.b16 %v2152
        %v2170 = vunpack.c.l.b16 %v2153
        %v2171 = vunpack.c.h.b16 %v2153
        %v2172 = vunpack.c.l.b16 %v2154
        %v2173 = vunpack.c.h.b16 %v2154
        %v2174 = vunpack.c.l.b16 %v2155
        %v2175 = vunpack.c.h.b16 %v2155
        %v2176 = vunpack.c.l.b16 %v2156
        %v2177 = vunpack.c.h.b16 %v2156
        %v2178 = vunpack.c.l.b16 %v2157
        %v2179 = vunpack.c.h.b16 %v2157
        %v2180 = vunpack.c.l.b16 %v2158
        %v2181 = vunpack.c.h.b16 %v2158
        %v2182 = vunpack.c.l.b16 %v2159
        %v2183 = vunpack.c.h.b16 %v2159
        %v2184 = vpack.c.b16 %v2170, %v2168
        %v2185 = vpack.c.b16 %v2171, %v2169
        %v2186 = vpack.c.b16 %v2174, %v2172
        %v2187 = vpack.c.b16 %v2175, %v2173
        %v2188 = vpack.c.b16 %v2178, %v2176
        %v2189 = vpack.c.b16 %v2179, %v2177
        %v2190 = vpack.c.b16 %v2182, %v2180
        %v2191 = vpack.c.b16 %v2183, %v2181
        %v2232 = vunpack.c.l.b16 %v2120
        %v2233 = vunpack.c.h.b16 %v2120
        %v2234 = vunpack.c.l.b16 %v2121
        %v2235 = vunpack.c.h.b16 %v2121
        %v2236 = vunpack.c.l.b16 %v2122
        %v2237 = vunpack.c.h.b16 %v2122
        %v2238 = vunpack.c.l.b16 %v2123
        %v2239 = vunpack.c.h.b16 %v2123
        %v2240 = vunpack.c.l.b16 %v2124
        %v2241 = vunpack.c.h.b16 %v2124
        %v2242 = vunpack.c.l.b16 %v2125
        %v2243 = vunpack.c.h.b16 %v2125
        %v2244 = vunpack.c.l.b16 %v2126
        %v2245 = vunpack.c.h.b16 %v2126
        %v2246 = vunpack.c.l.b16 %v2127
        %v2247 = vunpack.c.h.b16 %v2127
        %v2248 = vunpack.c.l.b16 %v2128
        %v2249 = vunpack.c.h.b16 %v2128
        %v2250 = vunpack.c.l.b16 %v2129
        %v2251 = vunpack.c.h.b16 %v2129
        %v2252 = vunpack.c.l.b16 %v2130
        %v2253 = vunpack.c.h.b16 %v2130
        %v2254 = vunpack.c.l.b16 %v2131
        %v2255 = vunpack.c.h.b16 %v2131
        %v2256 = vunpack.c.l.b16 %v2132
        %v2257 = vunpack.c.h.b16 %v2132
        %v2258 = vunpack.c.l.b16 %v2133
        %v2259 = vunpack.c.h.b16 %v2133
        %v2260 = vunpack.c.l.b16 %v2134
        %v2261 = vunpack.c.h.b16 %v2134
        %v2262 = vunpack.c.l.b16 %v2135
        %v2263 = vunpack.c.h.b16 %v2135
        %v2264 = vunpack.c.l.b16 %v2136
        %v2265 = vunpack.c.h.b16 %v2136
        %v2266 = vunpack.c.l.b16 %v2137
        %v2267 = vunpack.c.h.b16 %v2137
        %v2268 = vunpack.c.l.b16 %v2138
        %v2269 = vunpack.c.h.b16 %v2138
        %v2270 = vunpack.c.l.b16 %v2139
        %v2271 = vunpack.c.h.b16 %v2139
        %v2272 = vunpack.c.l.b16 %v2140
        %v2273 = vunpack.c.h.b16 %v2140
        %v2274 = vunpack.c.l.b16 %v2141
        %v2275 = vunpack.c.h.b16 %v2141
        %v2276 = vunpack.c.l.b16 %v2142
        %v2277 = vunpack.c.h.b16 %v2142
        %v2278 = vunpack.c.l.b16 %v2143
        %v2279 = vunpack.c.h.b16 %v2143
        %v2280 = vunpack.c.l.b16 %v2144
        %v2281 = vunpack.c.h.b16 %v2144
        %v2282 = vunpack.c.l.b16 %v2145
        %v2283 = vunpack.c.h.b16 %v2145
        %v2284 = vunpack.c.l.b16 %v2146
        %v2285 = vunpack.c.h.b16 %v2146
        %v2286 = vunpack.c.l.b16 %v2147
        %v2287 = vunpack.c.h.b16 %v2147
        %v2288 = vunpack.c.l.b16 %v2148
        %v2289 = vunpack.c.h.b16 %v2148
        %v2290 = vunpack.c.l.b16 %v2149
        %v2291 = vunpack.c.h.b16 %v2149
        %v2292 = vunpack.c.l.b16 %v2150
        %v2293 = vunpack.c.h.b16 %v2150
        %v2294 = vunpack.c.l.b16 %v2151
        %v2295 = vunpack.c.h.b16 %v2151
        %v2296 = vpack.c.b16 %v2234, %v2232
        %v2297 = vpack.c.b16 %v2235, %v2233
        %v2298 = vpack.c.b16 %v2238, %v2236
        %v2299 = vpack.c.b16 %v2239, %v2237
        %v2300 = vpack.c.b16 %v2242, %v2240
        %v2301 = vpack.c.b16 %v2243, %v2241
        %v2302 = vpack.c.b16 %v2246, %v2244
        %v2303 = vpack.c.b16 %v2247, %v2245
        %v2304 = vpack.c.b16 %v2250, %v2248
        %v2305 = vpack.c.b16 %v2251, %v2249
        %v2306 = vpack.c.b16 %v2254, %v2252
        %v2307 = vpack.c.b16 %v2255, %v2253
        %v2308 = vpack.c.b16 %v2258, %v2256
        %v2309 = vpack.c.b16 %v2259, %v2257
        %v2310 = vpack.c.b16 %v2262, %v2260
        %v2311 = vpack.c.b16 %v2263, %v2261
        %v2312 = vpack.c.b16 %v2266, %v2264
        %v2313 = vpack.c.b16 %v2267, %v2265
        %v2314 = vpack.c.b16 %v2270, %v2268
        %v2315 = vpack.c.b16 %v2271, %v2269
        %v2316 = vpack.c.b16 %v2274, %v2272
        %v2317 = vpack.c.b16 %v2275, %v2273
        %v2318 = vpack.c.b16 %v2278, %v2276
        %v2319 = vpack.c.b16 %v2279, %v2277
        %v2320 = vpack.c.b16 %v2282, %v2280
        %v2321 = vpack.c.b16 %v2283, %v2281
        %v2322 = vpack.c.b16 %v2286, %v2284
        %v2323 = vpack.c.b16 %v2287, %v2285
        %v2324 = vpack.c.b16 %v2290, %v2288
        %v2325 = vpack.c.b16 %v2291, %v2289
        %v2326 = vpack.c.b16 %v2294, %v2292
        %v2327 = vpack.c.b16 %v2295, %v2293
        %2360 = vmatpush.bf16.xpose.msra.mxu0 %v2310
        %2361 = vmatpush.bf16.xpose.msra.mxu0 %v2308
        %2362 = vmatpush.bf16.xpose.msra.mxu0 %v2306
        %2363 = vmatpush.bf16.xpose.msra.mxu0 %v2304
        %2364 = vmatpush.bf16.xpose.msra.mxu0 %v2302
        %2365 = vmatpush.bf16.xpose.msra.mxu0 %v2300
        %2366 = vmatpush.bf16.xpose.msra.mxu0 %v2298
        %2367 = vmatpush.bf16.xpose.msra.mxu0 %v2296
        %2368 = vmatmul.bf16.gmra.mxu0 %v2184
        %v2369 = vpop.f32.mrf.mxu0
        %v2370 = vadd.f32 0.0, %v2369
        %v2371 = vpop.f32.mrf.mxu0
        %v2372 = vadd.f32 0.0, %v2371
        %2373 = vmatmul.bf16.gmra.mxu0 %v2186
        %v2374 = vpop.f32.mrf.mxu0
        %v2375 = vadd.f32 0.0, %v2374
        %v2376 = vpop.f32.mrf.mxu0
        %v2377 = vadd.f32 0.0, %v2376
        %2378 = vmatmul.bf16.gmra.mxu0 %v2188
        %v2379 = vpop.f32.mrf.mxu0
        %v2380 = vadd.f32 0.0, %v2379
        %v2381 = vpop.f32.mrf.mxu0
        %v2382 = vadd.f32 0.0, %v2381
        %2383 = vmatmul.bf16.gmra.mxu0 %v2190
        %v2384 = vpop.f32.mrf.mxu0
        %v2385 = vadd.f32 0.0, %v2384
        %v2386 = vpop.f32.mrf.mxu0
        %v2387 = vadd.f32 0.0, %v2386
        %2388 = vdwg.mxu0
        %2389 = vmatpush.bf16.xpose.msra.mxu0 %v2311
        %2390 = vmatpush.bf16.xpose.msra.mxu0 %v2309
        %2391 = vmatpush.bf16.xpose.msra.mxu0 %v2307
        %2392 = vmatpush.bf16.xpose.msra.mxu0 %v2305
        %2393 = vmatpush.bf16.xpose.msra.mxu0 %v2303
        %2394 = vmatpush.bf16.xpose.msra.mxu0 %v2301
        %2395 = vmatpush.bf16.xpose.msra.mxu0 %v2299
        %2396 = vmatpush.bf16.xpose.msra.mxu0 %v2297
        %2397 = vmatmul.bf16.gmra.mxu0 %v2185
        %v2398 = vpop.f32.mrf.mxu0
        %v2399 = vadd.f32 %v2370, %v2398
        %v2400 = vpop.f32.mrf.mxu0
        %v2401 = vadd.f32 %v2372, %v2400
        %2402 = vmatmul.bf16.gmra.mxu0 %v2187
        %v2403 = vpop.f32.mrf.mxu0
        %v2404 = vadd.f32 %v2375, %v2403
        %v2405 = vpop.f32.mrf.mxu0
        %v2406 = vadd.f32 %v2377, %v2405
        %2407 = vmatmul.bf16.gmra.mxu0 %v2189
        %v2408 = vpop.f32.mrf.mxu0
        %v2409 = vadd.f32 %v2380, %v2408
        %v2410 = vpop.f32.mrf.mxu0
        %v2411 = vadd.f32 %v2382, %v2410
        %2412 = vmatmul.bf16.gmra.mxu0 %v2191
        %v2413 = vpop.f32.mrf.mxu0
        %v2414 = vadd.f32 %v2385, %v2413
        %v2415 = vpop.f32.mrf.mxu0
        %v2416 = vadd.f32 %v2387, %v2415
        %2417 = vdwg.mxu0
        %2418 = vmatpush.bf16.xpose.msra.mxu0 %v2326
        %2419 = vmatpush.bf16.xpose.msra.mxu0 %v2324
        %2420 = vmatpush.bf16.xpose.msra.mxu0 %v2322
        %2421 = vmatpush.bf16.xpose.msra.mxu0 %v2320
        %2422 = vmatpush.bf16.xpose.msra.mxu0 %v2318
        %2423 = vmatpush.bf16.xpose.msra.mxu0 %v2316
        %2424 = vmatpush.bf16.xpose.msra.mxu0 %v2314
        %2425 = vmatpush.bf16.xpose.msra.mxu0 %v2312
        %2426 = vmatmul.bf16.gmra.mxu0 %v2184
        %v2427 = vpop.f32.mrf.mxu0
        %v2428 = vadd.f32 0.0, %v2427
        %v2429 = vpop.f32.mrf.mxu0
        %v2430 = vadd.f32 0.0, %v2429
        %2431 = vmatmul.bf16.gmra.mxu0 %v2186
        %v2432 = vpop.f32.mrf.mxu0
        %v2433 = vadd.f32 0.0, %v2432
        %v2434 = vpop.f32.mrf.mxu0
        %v2435 = vadd.f32 0.0, %v2434
        %2436 = vmatmul.bf16.gmra.mxu0 %v2188
        %v2437 = vpop.f32.mrf.mxu0
        %v2438 = vadd.f32 0.0, %v2437
        %v2439 = vpop.f32.mrf.mxu0
        %v2440 = vadd.f32 0.0, %v2439
        %2441 = vmatmul.bf16.gmra.mxu0 %v2190
        %v2442 = vpop.f32.mrf.mxu0
        %v2443 = vadd.f32 0.0, %v2442
        %v2444 = vpop.f32.mrf.mxu0
        %v2445 = vadd.f32 0.0, %v2444
        %2446 = vdwg.mxu0
        %2447 = vmatpush.bf16.xpose.msra.mxu0 %v2327
        %2448 = vmatpush.bf16.xpose.msra.mxu0 %v2325
        %2449 = vmatpush.bf16.xpose.msra.mxu0 %v2323
        %2450 = vmatpush.bf16.xpose.msra.mxu0 %v2321
        %2451 = vmatpush.bf16.xpose.msra.mxu0 %v2319
        %2452 = vmatpush.bf16.xpose.msra.mxu0 %v2317
        %2453 = vmatpush.bf16.xpose.msra.mxu0 %v2315
        %2454 = vmatpush.bf16.xpose.msra.mxu0 %v2313
        %2455 = vmatmul.bf16.gmra.mxu0 %v2185
        %v2456 = vpop.f32.mrf.mxu0
        %v2457 = vadd.f32 %v2428, %v2456
        %v2458 = vpop.f32.mrf.mxu0
        %v2459 = vadd.f32 %v2430, %v2458
        %2460 = vmatmul.bf16.gmra.mxu0 %v2187
        %v2461 = vpop.f32.mrf.mxu0
        %v2462 = vadd.f32 %v2433, %v2461
        %v2463 = vpop.f32.mrf.mxu0
        %v2464 = vadd.f32 %v2435, %v2463
        %2465 = vmatmul.bf16.gmra.mxu0 %v2189
        %v2466 = vpop.f32.mrf.mxu0
        %v2467 = vadd.f32 %v2438, %v2466
        %v2468 = vpop.f32.mrf.mxu0
        %v2469 = vadd.f32 %v2440, %v2468
        %2470 = vmatmul.bf16.gmra.mxu0 %v2191
        %v2471 = vpop.f32.mrf.mxu0
        %v2472 = vadd.f32 %v2443, %v2471
        %v2473 = vpop.f32.mrf.mxu0
        %v2474 = vadd.f32 %v2445, %v2473
        %2475 = vdwg.mxu0
        %s2476 = sld [smem:[#allocation4]]
        %v2477 = vstv %s2476
        %v2478 = vmul.f32 %v2477, %v2399
        %v2479 = vmul.f32 %v2477, %v2457
        %v2480 = vmul.f32 %v2477, %v2401
        %v2481 = vmul.f32 %v2477, %v2459
        %v2482 = vmul.f32 %v2477, %v2404
        %v2483 = vmul.f32 %v2477, %v2462
        %v2484 = vmul.f32 %v2477, %v2406
        %v2485 = vmul.f32 %v2477, %v2464
        %v2486 = vmul.f32 %v2477, %v2409
        %v2487 = vmul.f32 %v2477, %v2467
        %v2488 = vmul.f32 %v2477, %v2411
        %v2489 = vmul.f32 %v2477, %v2469
        %v2490 = vmul.f32 %v2477, %v2414
        %v2491 = vmul.f32 %v2477, %v2472
        %v2492 = vmul.f32 %v2477, %v2416
        %v2493 = vmul.f32 %v2477, %v2474
        %v2494 = vadd.f32 %v2478, %v768
        %v2495 = vadd.f32 %v2479, %v769
        %v2496 = vadd.f32 %v2480, %v770
        %v2497 = vadd.f32 %v2481, %v771
        %v2498 = vadd.f32 %v2482, %v772
        %v2499 = vadd.f32 %v2483, %v773
        %v2500 = vadd.f32 %v2484, %v774
        %v2501 = vadd.f32 %v2485, %v775
        %v2502 = vadd.f32 %v2486, %v776
        %v2503 = vadd.f32 %v2487, %v777
        %v2504 = vadd.f32 %v2488, %v778
        %v2505 = vadd.f32 %v2489, %v779
        %v2506 = vadd.f32 %v2490, %v780
        %v2507 = vadd.f32 %v2491, %v781
        %v2508 = vadd.f32 %v2492, %v782
        %v2509 = vadd.f32 %v2493, %v783
        %2510 = vst [vmem:[%s502] sm:$0xff] %v2494
        %2511 = vst [vmem:[%s502 + $0x8] sm:$0xff] %v2495
        %2512 = vst [vmem:[%s502 + $0x10] sm:$0xff] %v2496
        %2513 = vst [vmem:[%s502 + $0x18] sm:$0xff] %v2497
        %2514 = vst [vmem:[%s502 + $0x20] sm:$0xff] %v2498
        %2515 = vst [vmem:[%s502 + $0x28] sm:$0xff] %v2499
        %2516 = vst [vmem:[%s502 + $0x30] sm:$0xff] %v2500
        %2517 = vst [vmem:[%s502 + $0x38] sm:$0xff] %v2501
        %2518 = vst [vmem:[%s502 + $0x40] sm:$0xff] %v2502
        %2519 = vst [vmem:[%s502 + $0x48] sm:$0xff] %v2503
        %2520 = vst [vmem:[%s502 + $0x50] sm:$0xff] %v2504
        %2521 = vst [vmem:[%s502 + $0x58] sm:$0xff] %v2505
        %2522 = vst [vmem:[%s502 + $0x60] sm:$0xff] %v2506
        %2523 = vst [vmem:[%s502 + $0x68] sm:$0xff] %v2507
        %2524 = vst [vmem:[%s502 + $0x70] sm:$0xff] %v2508
        %2525 = vst [vmem:[%s502 + $0x78] sm:$0xff] %v2509
        %2526 = vst [vmem:[%s509] sm:$0xff] %v2120
        %2527 = vst [vmem:[%s509 + $0x8] sm:$0xff] %v2121
        %2528 = vst [vmem:[%s509 + $0x10] sm:$0xff] %v2122
        %2529 = vst [vmem:[%s509 + $0x18] sm:$0xff] %v2123
        %2530 = vst [vmem:[%s509 + $0x20] sm:$0xff] %v2124
        %2531 = vst [vmem:[%s509 + $0x28] sm:$0xff] %v2125
        %2532 = vst [vmem:[%s509 + $0x30] sm:$0xff] %v2126
        %2533 = vst [vmem:[%s509 + $0x38] sm:$0xff] %v2127
        %2534 = vst [vmem:[%s509 + $0x40] sm:$0xff] %v2128
        %2535 = vst [vmem:[%s509 + $0x48] sm:$0xff] %v2129
        %2536 = vst [vmem:[%s509 + $0x50] sm:$0xff] %v2130
        %2537 = vst [vmem:[%s509 + $0x58] sm:$0xff] %v2131
        %2538 = vst [vmem:[%s509 + $0x60] sm:$0xff] %v2132
        %2539 = vst [vmem:[%s509 + $0x68] sm:$0xff] %v2133
        %2540 = vst [vmem:[%s509 + $0x70] sm:$0xff] %v2134
        %2541 = vst [vmem:[%s509 + $0x78] sm:$0xff] %v2135
        %2542 = vst [vmem:[%s509 + $0x80] sm:$0xff] %v2136
        %2543 = vst [vmem:[%s509 + $0x88] sm:$0xff] %v2137
        %2544 = vst [vmem:[%s509 + $0x90] sm:$0xff] %v2138
        %2545 = vst [vmem:[%s509 + $0x98] sm:$0xff] %v2139
        %2546 = vst [vmem:[%s509 + $0xa0] sm:$0xff] %v2140
        %2547 = vst [vmem:[%s509 + $0xa8] sm:$0xff] %v2141
        %2548 = vst [vmem:[%s509 + $0xb0] sm:$0xff] %v2142
        %2549 = vst [vmem:[%s509 + $0xb8] sm:$0xff] %v2143
        %2550 = vst [vmem:[%s509 + $0xc0] sm:$0xff] %v2144
        %2551 = vst [vmem:[%s509 + $0xc8] sm:$0xff] %v2145
        %2552 = vst [vmem:[%s509 + $0xd0] sm:$0xff] %v2146
        %2553 = vst [vmem:[%s509 + $0xd8] sm:$0xff] %v2147
        %2554 = vst [vmem:[%s509 + $0xe0] sm:$0xff] %v2148
        %2555 = vst [vmem:[%s509 + $0xe8] sm:$0xff] %v2149
        %2556 = vst [vmem:[%s509 + $0xf0] sm:$0xff] %v2150
        %2557 = vst [vmem:[%s509 + $0xf8] sm:$0xff] %v2151
        %s2558 = sand.u32 %s281, 1
        %s2559 = scalar_lea.sflag [#allocation7], %s2558
        %s2560 = sand.u32 %s281, 1
        %s2561 = smul.addr %s2560, 128
        %s2562 = scalar_lea.vmem [#allocation13], %s2561
        %s2563 = sand.u32 %s309, 1
        %s2564 = scalar_lea.sflag [#allocation15], %s2563
        %s2565 = sand.u32 %s309, 1
        %s2566 = smul.addr %s2565, 256
        %s2567 = scalar_lea.vmem [#allocation14], %s2566
        // Predicated region
        $region81: #{tpu_custom_call.1} parent=59 // pred_check
          %p2568 = pneg %p291
        $region82: #{tpu_custom_call.1} parent=59 // pred_check_branch
          %2570 = sbr.rel (%p2568) target = $region84
        $region83: #{tpu_custom_call.1} parent=59 // pred_region
          %s2571 = smul.u32 2, %s42
          %2573 = vsyncadd %s2559, 0
          %s2574 = smul.addr %s41, 16
          %s2575 = sadd.s32 %s2571, %s2574
          %s2576 = smul.addr %s2575, 8
          %s2577 = scalar_lea.hbm %s10, %s2576
          %s2578 = sshll.u32 %s2562, 4
          %s2579 = int_to_ptr.vmem [resolvable:$true] %s2578
          %s2580 = sshll.u32 %s2577, 4
          %s2581 = int_to_ptr.hbm [resolvable:$true] %s2580
          %2586 = dma.vmem_to_hbm [thread:$0]  %s2579, 2048, %s2581, %s2559, 256, 256, 16
        $region84: #{tpu_custom_call.1} parent=59 // pred_fallthru
          _
        // Predicated region
        $region85: #{tpu_custom_call.1} parent=59 // pred_check
          %p2587 = pneg %p319
        $region86: #{tpu_custom_call.1} parent=59 // pred_check_branch
          %2589 = sbr.rel (%p2587) target = $region88
        $region87: #{tpu_custom_call.1} parent=59 // pred_region
          %s2590 = smul.u32 32, %s42
          %2592 = vsyncadd %s2564, 0
          %s2593 = smul.addr %s2590, 2
          %s2594 = smul.addr %s41, 64
          %s2595 = sadd.s32 %s2593, %s2594
          %s2596 = smul.addr %s2595, 4
          %s2597 = scalar_lea.hbm %s11, %s2596
          %s2598 = sshll.u32 %s2567, 4
          %s2599 = int_to_ptr.vmem [resolvable:$true] %s2598
          %s2600 = sshll.u32 %s2597, 4
          %s2601 = int_to_ptr.hbm [resolvable:$true] %s2600
          %2606 = dma.vmem_to_hbm [thread:$0]  %s2599, 4096, %s2601, %s2564, 128, 128, 8
        $region88: #{tpu_custom_call.1} parent=59 // pred_fallthru
          _
      $region60: #{tpu_custom_call.1} parent=5 // pred_fallthru
        _
      %p2607 = scmp.le.s32.totalorder 2, %s32
      // Predicated region
      $region89: #{tpu_custom_call.1} parent=5 // pred_check
        %p2608 = pneg %p2607
      $region90: #{tpu_custom_call.1} parent=5 // pred_check_branch
        %2610 = sbr.rel (%p2608) target = $region92
      $region91: #{tpu_custom_call.1} parent=5 // pred_region
        %s2611 = ssub.s32 %s32, 2
        // Predicated region
        $region93: #{tpu_custom_call.1} parent=91 // pred_check
          %p2612 = pneg %p297
        $region94: #{tpu_custom_call.1} parent=91 // pred_check_branch
          %2614 = sbr.rel (%p2612) target = $region96
        $region95: #{tpu_custom_call.1} parent=91 // pred_region
          %s2615 = sand.u32 %s282, 1
          %s2616 = scalar_lea.sflag [#allocation7], %s2615
          %s2617 = sand.u32 %s282, 1
          %s2618 = smul.addr %s2617, 128
          %s2619 = scalar_lea.vmem [#allocation13], %s2618
          %2621 = dma.done %s2616, 2048
        $region96: #{tpu_custom_call.1} parent=91 // pred_fallthru
          _
        // Predicated region
        $region97: #{tpu_custom_call.1} parent=91 // pred_check
          %p2622 = pneg %p325
        $region98: #{tpu_custom_call.1} parent=91 // pred_check_branch
          %2624 = sbr.rel (%p2622) target = $region100
        $region99: #{tpu_custom_call.1} parent=91 // pred_region
          %s2625 = sand.u32 %s310, 1
          %s2626 = scalar_lea.sflag [#allocation15], %s2625
          %s2627 = sand.u32 %s310, 1
          %s2628 = smul.addr %s2627, 256
          %s2629 = scalar_lea.vmem [#allocation14], %s2628
          %2631 = dma.done %s2626, 4096
        $region100: #{tpu_custom_call.1} parent=91 // pred_fallthru
          _
      $region92: #{tpu_custom_call.1} parent=5 // pred_fallthru
        _
    $region6: #{tpu_custom_call.1} parent=1 // loop_footer
      %s36 = sadd.s32 1, %s32
    $region7: #{tpu_custom_call.1} parent=1 // loop_footer_branch
      %31 = sbr.rel target = $region3
    $region8: #{tpu_custom_call.1} parent=1 // loop_exit
      _
    %2632 = vsyncpa [#allocation6], 1
    %s2633 = scalar_lea.sflag [#allocation6], 1
    %2634 = vsyncpa %s2633, 1
    %2635 = vsyncpa [#allocation9], 1
    %s2636 = scalar_lea.sflag [#allocation9], 1
    %2637 = vsyncpa %s2636, 1
    %2638 = vsyncpa [#allocation12], 1
    %2639 = vsyncpa [#allocation7], 1
    %s2640 = scalar_lea.sflag [#allocation7], 1
    %2641 = vsyncpa %s2640, 1
    %2642 = vsyncpa [#allocation15], 1
    %s2643 = scalar_lea.sflag [#allocation15], 1
    %2644 = vsyncpa %s2643, 1

</llo_original>
